<compile_context>
chip_gen: v7x
topology: tpu7x:2x2x1
jax: 0.10.0
libtpu: 0.0.40
codegen_flags: <defaults>
</compile_context>

<pallas_src>
import functools

import jax
import jax.numpy as jnp
from jax import lax
from jax.experimental import pallas as pl
from jax.experimental.pallas import tpu as pltpu

CHANNEL = 32


# ----------------------------------------------------------------------------
# Fused whole-network kernel (one grid step == one image)
# ----------------------------------------------------------------------------
def _fusionnet_kernel(x_ref, masks_ref, w1_ref, b1_ref, wres_ref, bres_ref,
                      w3_ref, b3_ref, o_ref, patch, act_bf, res_f32,
                      *, H, W, ch, cout):
    HW = H * W

    def build_patch(a):
        """Write the transposed im2col patch (9*ch, HW) for activation `a`.

        `a` is a (ch, HW) bf16 value (flattened NHWC image, channels on
        sublanes, H*W dense on lanes).  Tap k=(dy*3+dx) needs
        a[:, p + (dy-1)*W + (dx-1)] with zero padding at image borders:
        a static lane roll + multiply by a precomputed validity mask.
        Every store is 32-sublane aligned and 256-lane dense (unmasked vst).
        """
        for k in range(9):
            dy, dx = divmod(k, 3)
            s = (dy - 1) * W + (dx - 1)          # flat-index offset of this tap
            if s == 0:
                patch[k * ch:(k + 1) * ch, :] = a
            else:
                shifted = jnp.roll(a, -s, axis=1)           # out[:,p] = a[:,p+s]
                patch[k * ch:(k + 1) * ch, :] = shifted * masks_ref[k:k + 1, :]

    def conv(w, b):
        # (Cout, 9*ch) bf16 x (9*ch, HW) bf16 -> (Cout, HW) f32 (+ f32 bias).
        return jnp.dot(w, patch[...], preferred_element_type=jnp.float32) + b

    # conv1 + ReLU (input already channel-padded to ch and flattened; w1 has
    # matching zero columns, so conv1 reuses the exact resblock conv shape).
    build_patch(x_ref[0])
    h = jnp.maximum(conv(w1_ref[...], b1_ref[...]), 0.0)
    res_f32[...] = h                       # f32 residual carry
    act_bf[...] = h.astype(jnp.bfloat16)   # bf16 MXU operand

    # 4 Resblocks: h = h + conv21(relu(conv20(h)))
    def resblock(r, carry):
        build_patch(act_bf[...])
        t = jnp.maximum(conv(wres_ref[2 * r], bres_ref[2 * r]), 0.0)
        build_patch(t.astype(jnp.bfloat16))
        u = conv(wres_ref[2 * r + 1], bres_ref[2 * r + 1])
        hr = res_f32[...] + u              # aligned full-block f32 add
        res_f32[...] = hr
        act_bf[...] = hr.astype(jnp.bfloat16)
        return carry

    lax.fori_loop(0, 4, resblock, 0)

    # conv3 (no activation).  w3/b3 are zero-padded to ch output rows in the
    # wrapper; only the first `cout` rows are real.  Lane-dense (256) store.
    build_patch(act_bf[...])
    out3 = conv(w3_ref[...], b3_ref[...])                  # (ch, HW) f32
    o_ref[...] = out3[:cout, :].reshape(1, cout, HW)


# ----------------------------------------------------------------------------
# Wrapper: layout glue + single pallas_call
# ----------------------------------------------------------------------------
def _build_masks(H, W):
    """(9, H*W) bf16 validity masks: mask_k[p]=1 iff tap k of pixel p is in-bounds."""
    yy = jnp.arange(H).reshape(H, 1)
    xx = jnp.arange(W).reshape(1, W)
    rows = []
    for k in range(9):
        dy, dx = divmod(k, 3)
        valid = ((yy + dy - 1 >= 0) & (yy + dy - 1 < H) &
                 (xx + dx - 1 >= 0) & (xx + dx - 1 < W))
        rows.append(valid.reshape(H * W))
    return jnp.stack(rows).astype(jnp.bfloat16)


def _wt(w_hwio, cin_pad):
    """HWIO (3,3,Cin,Cout) -> transposed flat weight (Cout, 9*cin_pad)."""
    kh, kw, ci, co = w_hwio.shape
    wp = jnp.zeros((kh, kw, cin_pad, co), w_hwio.dtype).at[:, :, :ci, :].set(w_hwio)
    return wp.reshape(kh * kw * cin_pad, co).T


@jax.jit
def fusionnet_forward(params, x_nchw, y_nchw):
    N, S, H, W = x_nchw.shape
    ch = params["conv1_w"].shape[-1]
    HW = H * W
    K = 9 * ch

    # pan_concat = y.repeat(1, S, 1, 1); input = pan_concat - x
    inp = jnp.broadcast_to(y_nchw, x_nchw.shape) - x_nchw            # (N,S,H,W)
    # Zero-pad channels S -> ch and flatten spatial: (N, ch, HW) bf16.
    inp_p = jnp.zeros((N, ch, H, W), jnp.float32).at[:, :S].set(inp)
    inp_t = inp_p.reshape(N, ch, HW).astype(jnp.bfloat16)

    masks = _build_masks(H, W)                                       # (9, HW)

    # Weights: transposed flat (Cout, 9*ch); conv1 has zero columns for the
    # padded input channels, conv3 has zero rows for the padded output chans.
    w1 = _wt(params["conv1_w"], ch).astype(jnp.bfloat16)             # (ch, K)
    b1 = params["conv1_b"].reshape(ch, 1)
    wres = jnp.stack([_wt(params[f"res{r}_w{i}"], ch)
                      for r in range(4) for i in range(2)]).astype(jnp.bfloat16)  # (8, ch, K)
    bres = jnp.stack([params[f"res{r}_b{i}"].reshape(ch, 1)
                      for r in range(4) for i in range(2)])          # (8, ch, 1)
    w3s = _wt(params["conv3_w"], ch).astype(jnp.bfloat16)            # (S, K)
    w3 = jnp.zeros((ch, K), jnp.bfloat16).at[:S].set(w3s)            # (ch, K)
    b3 = jnp.zeros((ch, 1), jnp.float32).at[:S].set(params["conv3_b"].reshape(S, 1))

    kernel = functools.partial(_fusionnet_kernel, H=H, W=W, ch=ch, cout=S)

    out = pl.pallas_call(
        kernel,
        out_shape=jax.ShapeDtypeStruct((N, S, HW), jnp.float32),
        grid=(N,),
        in_specs=[
            pl.BlockSpec((1, ch, HW), lambda n: (n, 0, 0)),   # input image (bf16)
            pl.BlockSpec((9, HW), lambda n: (0, 0)),          # boundary masks
            pl.BlockSpec((ch, K), lambda n: (0, 0)),          # w1 (resident)
            pl.BlockSpec((ch, 1), lambda n: (0, 0)),          # b1
            pl.BlockSpec((8, ch, K), lambda n: (0, 0, 0)),    # resblock weights
            pl.BlockSpec((8, ch, 1), lambda n: (0, 0, 0)),    # resblock biases
            pl.BlockSpec((ch, K), lambda n: (0, 0)),          # w3 (padded rows)
            pl.BlockSpec((ch, 1), lambda n: (0, 0)),          # b3 (padded rows)
        ],
        out_specs=pl.BlockSpec((1, S, HW), lambda n: (n, 0, 0)),
        scratch_shapes=[
            pltpu.VMEM((K, HW), jnp.bfloat16),   # transposed im2col patch
            pltpu.VMEM((ch, HW), jnp.bfloat16),  # bf16 activation (MXU operand)
            pltpu.VMEM((ch, HW), jnp.float32),   # f32 residual carry
        ],
        compiler_params=pltpu.CompilerParams(
            dimension_semantics=("parallel",)),
    )(inp_t, masks, w1, b1, wres, bres, w3, b3)

    return out.reshape(N, S, H, W)                 # already NCHW


# ----------------------------------------------------------------------------
# Parameter init (HWIO weights, matching nn.Conv2d semantics)
# ----------------------------------------------------------------------------
def init_params(key, spectral_num=4, channel=32):
    def conv_w(k, cin, cout):
        return 0.1 * jax.random.normal(k, (3, 3, cin, cout), jnp.float32)  # HWIO

    keys = jax.random.split(key, 20)
    p = {
        "conv1_w": conv_w(keys[0], spectral_num, channel),
        "conv1_b": 0.01 * jax.random.normal(keys[1], (channel,), jnp.float32),
        "conv3_w": conv_w(keys[2], channel, spectral_num),
        "conv3_b": 0.01 * jax.random.normal(keys[3], (spectral_num,), jnp.float32),
    }
    for r in range(4):
        base = 4 + 4 * r
        p[f"res{r}_w0"] = conv_w(keys[base + 0], channel, channel)
        p[f"res{r}_b0"] = 0.01 * jax.random.normal(keys[base + 1], (channel,), jnp.float32)
        p[f"res{r}_w1"] = conv_w(keys[base + 2], channel, channel)
        p[f"res{r}_b1"] = 0.01 * jax.random.normal(keys[base + 3], (channel,), jnp.float32)
    return p


# ----------------------------------------------------------------------------
# Pure-JAX f32 reference (lax.conv) for correctness check
# ----------------------------------------------------------------------------
def _conv_ref(x, w, b):
    dn = lax.conv_dimension_numbers(x.shape, w.shape, ("NHWC", "HWIO", "NHWC"))
    return lax.conv_general_dilated(x, w, (1, 1), "SAME", dimension_numbers=dn) + b


def fusionnet_reference(params, x_nchw, y_nchw):
    inp = jnp.broadcast_to(y_nchw, x_nchw.shape) - x_nchw
    h = jnp.transpose(inp, (0, 2, 3, 1))
    h = jnp.maximum(_conv_ref(h, params["conv1_w"], params["conv1_b"]), 0.0)
    for r in range(4):
        t = jnp.maximum(_conv_ref(h, params[f"res{r}_w0"], params[f"res{r}_b0"]), 0.0)
        h = h + _conv_ref(t, params[f"res{r}_w1"], params[f"res{r}_b1"])
    out = _conv_ref(h, params["conv3_w"], params["conv3_b"])
    return jnp.transpose(out, (0, 3, 1, 2))


if __name__ == "__main__":
    SPECTRAL = 4
    N, H, W = 2, 16, 16

    key = jax.random.PRNGKey(0)
    kx, ky, kp = jax.random.split(key, 3)
    x = jax.random.normal(kx, (N, SPECTRAL, H, W), jnp.float32)   # ms image
    y = jax.random.normal(ky, (N, 1, H, W), jnp.float32)          # pan image
    params = init_params(kp, SPECTRAL, CHANNEL)

    out = jax.block_until_ready(fusionnet_forward(params, x, y))
    ref = jax.block_until_ready(fusionnet_reference(params, x, y))

    assert out.shape == (N, SPECTRAL, H, W), out.shape
    # bf16 matmul operands (f32 accumulation) vs f32 reference -> loosened
    # relative tolerance (documented for downstream users).
    err = float(jnp.max(jnp.abs(out - ref)))
    tol = 3e-2 * float(jnp.max(jnp.abs(ref))) + 1e-2
    assert err <= tol, (err, tol)

    print("KERNEL_OK")
</pallas_src>

<mosaic_0001>
module attributes {stable_mosaic.version = 11 : i64} {
  func.func @_fusionnet_kernel(%arg0: i32, %arg1: memref<1x32x256xbf16, #tpu.memory_space<vmem>>, %arg2: memref<9x256xbf16, #tpu.memory_space<vmem>>, %arg3: memref<32x288xbf16, #tpu.memory_space<vmem>>, %arg4: memref<32x1xf32, #tpu.memory_space<vmem>>, %arg5: memref<8x32x288xbf16, #tpu.memory_space<vmem>>, %arg6: memref<8x32x1xf32, #tpu.memory_space<vmem>>, %arg7: memref<32x288xbf16, #tpu.memory_space<vmem>>, %arg8: memref<32x1xf32, #tpu.memory_space<vmem>>, %arg9: memref<1x4x256xf32, #tpu.memory_space<vmem>>, %arg10: memref<288x256xbf16, #tpu.memory_space<vmem>>, %arg11: memref<32x256xbf16, #tpu.memory_space<vmem>>, %arg12: memref<32x256xf32, #tpu.memory_space<vmem>>) attributes {dimension_semantics = [#tpu.dimension_semantics<parallel>], iteration_bounds = array<i64: 2>, scalar_prefetch = 0 : i64, scratch_operands = 3 : i64, tpu.core_type = #tpu.core_type<tc>, window_params = [{transform_indices = @transform_0, window_bounds = array<i64: 1, 32, 256>}, {pipeline_mode = #tpu.pipeline_mode<synchronous>, transform_indices = @transform_1, window_bounds = array<i64: 9, 256>}, {pipeline_mode = #tpu.pipeline_mode<synchronous>, transform_indices = @transform_2, window_bounds = array<i64: 32, 288>}, {pipeline_mode = #tpu.pipeline_mode<synchronous>, transform_indices = @transform_3, window_bounds = array<i64: 32, 1>}, {pipeline_mode = #tpu.pipeline_mode<synchronous>, transform_indices = @transform_4, window_bounds = array<i64: 8, 32, 288>}, {pipeline_mode = #tpu.pipeline_mode<synchronous>, transform_indices = @transform_5, window_bounds = array<i64: 8, 32, 1>}, {pipeline_mode = #tpu.pipeline_mode<synchronous>, transform_indices = @transform_6, window_bounds = array<i64: 32, 288>}, {pipeline_mode = #tpu.pipeline_mode<synchronous>, transform_indices = @transform_7, window_bounds = array<i64: 32, 1>}, {transform_indices = @transform_8, window_bounds = array<i64: 1, 4, 256>}]} {
    %c0 = arith.constant 0 : index
    %c0_0 = arith.constant 0 : index
    %c0_1 = arith.constant 0 : index
    %0 = vector.load %arg1[%c0, %c0_0, %c0_1] : memref<1x32x256xbf16, #tpu.memory_space<vmem>>, vector<1x32x256xbf16>
    %1 = vector.shape_cast %0 : vector<1x32x256xbf16> to vector<32x256xbf16>
    %2 = vector.extract_strided_slice %1 {offsets = [0, 239], sizes = [32, 17], strides = [1, 1]} : vector<32x256xbf16> to vector<32x17xbf16>
    %3 = vector.extract_strided_slice %1 {offsets = [0, 0], sizes = [32, 239], strides = [1, 1]} : vector<32x256xbf16> to vector<32x239xbf16>
    %4 = tpu.concatenate %2, %3 in 1 : vector<32x17xbf16>, vector<32x239xbf16> -> vector<32x256xbf16>
    %c0_2 = arith.constant 0 : index
    %c0_3 = arith.constant 0 : index
    %5 = vector.load %arg2[%c0_2, %c0_3] : memref<9x256xbf16, #tpu.memory_space<vmem>>, vector<1x256xbf16>
    %6 = vector.broadcast %5 : vector<1x256xbf16> to vector<32x256xbf16>
    %7 = arith.mulf %4, %6 : vector<32x256xbf16>
    %c0_4 = arith.constant 0 : index
    %c0_5 = arith.constant 0 : index
    %8 = vector.load %arg10[%c0_4, %c0_5] : memref<288x256xbf16, #tpu.memory_space<vmem>>, vector<32x256xbf16>
    tpu.vector_store %arg10[%c0_4, %c0_5], %7 {strides = array<i32>} : memref<288x256xbf16, #tpu.memory_space<vmem>>, vector<32x256xbf16>,
    %9 = vector.extract_strided_slice %1 {offsets = [0, 240], sizes = [32, 16], strides = [1, 1]} : vector<32x256xbf16> to vector<32x16xbf16>
    %10 = vector.extract_strided_slice %1 {offsets = [0, 0], sizes = [32, 240], strides = [1, 1]} : vector<32x256xbf16> to vector<32x240xbf16>
    %11 = tpu.concatenate %9, %10 in 1 : vector<32x16xbf16>, vector<32x240xbf16> -> vector<32x256xbf16>
    %c1 = arith.constant 1 : index
    %c0_6 = arith.constant 0 : index
    %12 = vector.load %arg2[%c1, %c0_6] : memref<9x256xbf16, #tpu.memory_space<vmem>>, vector<1x256xbf16>
    %13 = vector.broadcast %12 : vector<1x256xbf16> to vector<32x256xbf16>
    %14 = arith.mulf %11, %13 : vector<32x256xbf16>
    %c32 = arith.constant 32 : index
    %c0_7 = arith.constant 0 : index
    %15 = vector.load %arg10[%c32, %c0_7] : memref<288x256xbf16, #tpu.memory_space<vmem>>, vector<32x256xbf16>
    tpu.vector_store %arg10[%c32, %c0_7], %14 {strides = array<i32>} : memref<288x256xbf16, #tpu.memory_space<vmem>>, vector<32x256xbf16>,
    %16 = vector.extract_strided_slice %1 {offsets = [0, 241], sizes = [32, 15], strides = [1, 1]} : vector<32x256xbf16> to vector<32x15xbf16>
    %17 = vector.extract_strided_slice %1 {offsets = [0, 0], sizes = [32, 241], strides = [1, 1]} : vector<32x256xbf16> to vector<32x241xbf16>
    %18 = tpu.concatenate %16, %17 in 1 : vector<32x15xbf16>, vector<32x241xbf16> -> vector<32x256xbf16>
    %c2 = arith.constant 2 : index
    %c0_8 = arith.constant 0 : index
    %19 = vector.load %arg2[%c2, %c0_8] : memref<9x256xbf16, #tpu.memory_space<vmem>>, vector<1x256xbf16>
    %20 = vector.broadcast %19 : vector<1x256xbf16> to vector<32x256xbf16>
    %21 = arith.mulf %18, %20 : vector<32x256xbf16>
    %c64 = arith.constant 64 : index
    %c0_9 = arith.constant 0 : index
    %22 = vector.load %arg10[%c64, %c0_9] : memref<288x256xbf16, #tpu.memory_space<vmem>>, vector<32x256xbf16>
    tpu.vector_store %arg10[%c64, %c0_9], %21 {strides = array<i32>} : memref<288x256xbf16, #tpu.memory_space<vmem>>, vector<32x256xbf16>,
    %23 = vector.extract_strided_slice %1 {offsets = [0, 255], sizes = [32, 1], strides = [1, 1]} : vector<32x256xbf16> to vector<32x1xbf16>
    %24 = vector.extract_strided_slice %1 {offsets = [0, 0], sizes = [32, 255], strides = [1, 1]} : vector<32x256xbf16> to vector<32x255xbf16>
    %25 = tpu.concatenate %23, %24 in 1 : vector<32x1xbf16>, vector<32x255xbf16> -> vector<32x256xbf16>
    %c3 = arith.constant 3 : index
    %c0_10 = arith.constant 0 : index
    %26 = vector.load %arg2[%c3, %c0_10] : memref<9x256xbf16, #tpu.memory_space<vmem>>, vector<1x256xbf16>
    %27 = vector.broadcast %26 : vector<1x256xbf16> to vector<32x256xbf16>
    %28 = arith.mulf %25, %27 : vector<32x256xbf16>
    %c96 = arith.constant 96 : index
    %c0_11 = arith.constant 0 : index
    %29 = vector.load %arg10[%c96, %c0_11] : memref<288x256xbf16, #tpu.memory_space<vmem>>, vector<32x256xbf16>
    tpu.vector_store %arg10[%c96, %c0_11], %28 {strides = array<i32>} : memref<288x256xbf16, #tpu.memory_space<vmem>>, vector<32x256xbf16>,
    %c128 = arith.constant 128 : index
    %c0_12 = arith.constant 0 : index
    %30 = vector.load %arg10[%c128, %c0_12] : memref<288x256xbf16, #tpu.memory_space<vmem>>, vector<32x256xbf16>
    tpu.vector_store %arg10[%c128, %c0_12], %1 {strides = array<i32>} : memref<288x256xbf16, #tpu.memory_space<vmem>>, vector<32x256xbf16>,
    %31 = vector.extract_strided_slice %1 {offsets = [0, 1], sizes = [32, 255], strides = [1, 1]} : vector<32x256xbf16> to vector<32x255xbf16>
    %32 = vector.extract_strided_slice %1 {offsets = [0, 0], sizes = [32, 1], strides = [1, 1]} : vector<32x256xbf16> to vector<32x1xbf16>
    %33 = tpu.concatenate %31, %32 in 1 : vector<32x255xbf16>, vector<32x1xbf16> -> vector<32x256xbf16>
    %c5 = arith.constant 5 : index
    %c0_13 = arith.constant 0 : index
    %34 = vector.load %arg2[%c5, %c0_13] : memref<9x256xbf16, #tpu.memory_space<vmem>>, vector<1x256xbf16>
    %35 = vector.broadcast %34 : vector<1x256xbf16> to vector<32x256xbf16>
    %36 = arith.mulf %33, %35 : vector<32x256xbf16>
    %c160 = arith.constant 160 : index
    %c0_14 = arith.constant 0 : index
    %37 = vector.load %arg10[%c160, %c0_14] : memref<288x256xbf16, #tpu.memory_space<vmem>>, vector<32x256xbf16>
    tpu.vector_store %arg10[%c160, %c0_14], %36 {strides = array<i32>} : memref<288x256xbf16, #tpu.memory_space<vmem>>, vector<32x256xbf16>,
    %38 = vector.extract_strided_slice %1 {offsets = [0, 15], sizes = [32, 241], strides = [1, 1]} : vector<32x256xbf16> to vector<32x241xbf16>
    %39 = vector.extract_strided_slice %1 {offsets = [0, 0], sizes = [32, 15], strides = [1, 1]} : vector<32x256xbf16> to vector<32x15xbf16>
    %40 = tpu.concatenate %38, %39 in 1 : vector<32x241xbf16>, vector<32x15xbf16> -> vector<32x256xbf16>
    %c6 = arith.constant 6 : index
    %c0_15 = arith.constant 0 : index
    %41 = vector.load %arg2[%c6, %c0_15] : memref<9x256xbf16, #tpu.memory_space<vmem>>, vector<1x256xbf16>
    %42 = vector.broadcast %41 : vector<1x256xbf16> to vector<32x256xbf16>
    %43 = arith.mulf %40, %42 : vector<32x256xbf16>
    %c192 = arith.constant 192 : index
    %c0_16 = arith.constant 0 : index
    %44 = vector.load %arg10[%c192, %c0_16] : memref<288x256xbf16, #tpu.memory_space<vmem>>, vector<32x256xbf16>
    tpu.vector_store %arg10[%c192, %c0_16], %43 {strides = array<i32>} : memref<288x256xbf16, #tpu.memory_space<vmem>>, vector<32x256xbf16>,
    %45 = vector.extract_strided_slice %1 {offsets = [0, 16], sizes = [32, 240], strides = [1, 1]} : vector<32x256xbf16> to vector<32x240xbf16>
    %46 = vector.extract_strided_slice %1 {offsets = [0, 0], sizes = [32, 16], strides = [1, 1]} : vector<32x256xbf16> to vector<32x16xbf16>
    %47 = tpu.concatenate %45, %46 in 1 : vector<32x240xbf16>, vector<32x16xbf16> -> vector<32x256xbf16>
    %c7 = arith.constant 7 : index
    %c0_17 = arith.constant 0 : index
    %48 = vector.load %arg2[%c7, %c0_17] : memref<9x256xbf16, #tpu.memory_space<vmem>>, vector<1x256xbf16>
    %49 = vector.broadcast %48 : vector<1x256xbf16> to vector<32x256xbf16>
    %50 = arith.mulf %47, %49 : vector<32x256xbf16>
    %c224 = arith.constant 224 : index
    %c0_18 = arith.constant 0 : index
    %51 = vector.load %arg10[%c224, %c0_18] : memref<288x256xbf16, #tpu.memory_space<vmem>>, vector<32x256xbf16>
    tpu.vector_store %arg10[%c224, %c0_18], %50 {strides = array<i32>} : memref<288x256xbf16, #tpu.memory_space<vmem>>, vector<32x256xbf16>,
    %52 = vector.extract_strided_slice %1 {offsets = [0, 17], sizes = [32, 239], strides = [1, 1]} : vector<32x256xbf16> to vector<32x239xbf16>
    %53 = vector.extract_strided_slice %1 {offsets = [0, 0], sizes = [32, 17], strides = [1, 1]} : vector<32x256xbf16> to vector<32x17xbf16>
    %54 = tpu.concatenate %52, %53 in 1 : vector<32x239xbf16>, vector<32x17xbf16> -> vector<32x256xbf16>
    %c8 = arith.constant 8 : index
    %c0_19 = arith.constant 0 : index
    %55 = vector.load %arg2[%c8, %c0_19] : memref<9x256xbf16, #tpu.memory_space<vmem>>, vector<1x256xbf16>
    %56 = vector.broadcast %55 : vector<1x256xbf16> to vector<32x256xbf16>
    %57 = arith.mulf %54, %56 : vector<32x256xbf16>
    %c256 = arith.constant 256 : index
    %c0_20 = arith.constant 0 : index
    %58 = vector.load %arg10[%c256, %c0_20] : memref<288x256xbf16, #tpu.memory_space<vmem>>, vector<32x256xbf16>
    tpu.vector_store %arg10[%c256, %c0_20], %57 {strides = array<i32>} : memref<288x256xbf16, #tpu.memory_space<vmem>>, vector<32x256xbf16>,
    %c0_21 = arith.constant 0 : index
    %c0_22 = arith.constant 0 : index
    %59 = vector.load %arg3[%c0_21, %c0_22] : memref<32x288xbf16, #tpu.memory_space<vmem>>, vector<32x288xbf16>
    %c0_23 = arith.constant 0 : index
    %c0_24 = arith.constant 0 : index
    %60 = vector.load %arg4[%c0_23, %c0_24] : memref<32x1xf32, #tpu.memory_space<vmem>>, vector<32x1xf32>
    %c0_25 = arith.constant 0 : index
    %c0_26 = arith.constant 0 : index
    %61 = vector.load %arg10[%c0_25, %c0_26] : memref<288x256xbf16, #tpu.memory_space<vmem>>, vector<288x256xbf16>
    %cst = arith.constant dense<0.000000e+00> : vector<32x256xf32>
    %62 = tpu.matmul %59, %61, %cst {dimension_numbers = #tpu.dot_dimension_numbers<[1], [0], [0], [1], [0, 0, 1, 1], [], []>} : vector<32x288xbf16>, vector<288x256xbf16>, vector<32x256xf32> -> vector<32x256xf32>
    %63 = vector.broadcast %60 : vector<32x1xf32> to vector<32x256xf32>
    %64 = arith.addf %62, %63 : vector<32x256xf32>
    %cst_27 = arith.constant 0.000000e+00 : f32
    %65 = vector.broadcast %cst_27 : f32 to vector<32x256xf32>
    %66 = arith.maximumf %64, %65 : vector<32x256xf32>
    %c0_28 = arith.constant 0 : index
    %c0_29 = arith.constant 0 : index
    %67 = vector.load %arg12[%c0_28, %c0_29] : memref<32x256xf32, #tpu.memory_space<vmem>>, vector<32x256xf32>
    tpu.vector_store %arg12[%c0_28, %c0_29], %66 {strides = array<i32>} : memref<32x256xf32, #tpu.memory_space<vmem>>, vector<32x256xf32>,
    %68 = arith.truncf %66 : vector<32x256xf32> to vector<32x256xbf16>
    %c0_30 = arith.constant 0 : index
    %c0_31 = arith.constant 0 : index
    %69 = vector.load %arg11[%c0_30, %c0_31] : memref<32x256xbf16, #tpu.memory_space<vmem>>, vector<32x256xbf16>
    tpu.vector_store %arg11[%c0_30, %c0_31], %68 {strides = array<i32>} : memref<32x256xbf16, #tpu.memory_space<vmem>>, vector<32x256xbf16>,
    %c0_i32 = arith.constant 0 : i32
    %c4_i32 = arith.constant 4 : i32
    %70 = arith.addi %c0_i32, %c4_i32 : i32
    %c1_i32 = arith.constant 1 : i32
    scf.for %arg13 = %c0_i32 to %70 step %c1_i32  : i32 {
      %c0_79 = arith.constant 0 : index
      %c0_80 = arith.constant 0 : index
      %138 = vector.load %arg11[%c0_79, %c0_80] : memref<32x256xbf16, #tpu.memory_space<vmem>>, vector<32x256xbf16>
      %139 = vector.extract_strided_slice %138 {offsets = [0, 239], sizes = [32, 17], strides = [1, 1]} : vector<32x256xbf16> to vector<32x17xbf16>
      %140 = vector.extract_strided_slice %138 {offsets = [0, 0], sizes = [32, 239], strides = [1, 1]} : vector<32x256xbf16> to vector<32x239xbf16>
      %141 = tpu.concatenate %139, %140 in 1 : vector<32x17xbf16>, vector<32x239xbf16> -> vector<32x256xbf16>
      %c0_81 = arith.constant 0 : index
      %c0_82 = arith.constant 0 : index
      %142 = vector.load %arg2[%c0_81, %c0_82] : memref<9x256xbf16, #tpu.memory_space<vmem>>, vector<1x256xbf16>
      %143 = vector.broadcast %142 : vector<1x256xbf16> to vector<32x256xbf16>
      %144 = arith.mulf %141, %143 : vector<32x256xbf16>
      %c0_83 = arith.constant 0 : index
      %c0_84 = arith.constant 0 : index
      %145 = vector.load %arg10[%c0_83, %c0_84] : memref<288x256xbf16, #tpu.memory_space<vmem>>, vector<32x256xbf16>
      tpu.vector_store %arg10[%c0_83, %c0_84], %144 {strides = array<i32>} : memref<288x256xbf16, #tpu.memory_space<vmem>>, vector<32x256xbf16>,
      %146 = vector.extract_strided_slice %138 {offsets = [0, 240], sizes = [32, 16], strides = [1, 1]} : vector<32x256xbf16> to vector<32x16xbf16>
      %147 = vector.extract_strided_slice %138 {offsets = [0, 0], sizes = [32, 240], strides = [1, 1]} : vector<32x256xbf16> to vector<32x240xbf16>
      %148 = tpu.concatenate %146, %147 in 1 : vector<32x16xbf16>, vector<32x240xbf16> -> vector<32x256xbf16>
      %c1_85 = arith.constant 1 : index
      %c0_86 = arith.constant 0 : index
      %149 = vector.load %arg2[%c1_85, %c0_86] : memref<9x256xbf16, #tpu.memory_space<vmem>>, vector<1x256xbf16>
      %150 = vector.broadcast %149 : vector<1x256xbf16> to vector<32x256xbf16>
      %151 = arith.mulf %148, %150 : vector<32x256xbf16>
      %c32_87 = arith.constant 32 : index
      %c0_88 = arith.constant 0 : index
      %152 = vector.load %arg10[%c32_87, %c0_88] : memref<288x256xbf16, #tpu.memory_space<vmem>>, vector<32x256xbf16>
      tpu.vector_store %arg10[%c32_87, %c0_88], %151 {strides = array<i32>} : memref<288x256xbf16, #tpu.memory_space<vmem>>, vector<32x256xbf16>,
      %153 = vector.extract_strided_slice %138 {offsets = [0, 241], sizes = [32, 15], strides = [1, 1]} : vector<32x256xbf16> to vector<32x15xbf16>
      %154 = vector.extract_strided_slice %138 {offsets = [0, 0], sizes = [32, 241], strides = [1, 1]} : vector<32x256xbf16> to vector<32x241xbf16>
      %155 = tpu.concatenate %153, %154 in 1 : vector<32x15xbf16>, vector<32x241xbf16> -> vector<32x256xbf16>
      %c2_89 = arith.constant 2 : index
      %c0_90 = arith.constant 0 : index
      %156 = vector.load %arg2[%c2_89, %c0_90] : memref<9x256xbf16, #tpu.memory_space<vmem>>, vector<1x256xbf16>
      %157 = vector.broadcast %156 : vector<1x256xbf16> to vector<32x256xbf16>
      %158 = arith.mulf %155, %157 : vector<32x256xbf16>
      %c64_91 = arith.constant 64 : index
      %c0_92 = arith.constant 0 : index
      %159 = vector.load %arg10[%c64_91, %c0_92] : memref<288x256xbf16, #tpu.memory_space<vmem>>, vector<32x256xbf16>
      tpu.vector_store %arg10[%c64_91, %c0_92], %158 {strides = array<i32>} : memref<288x256xbf16, #tpu.memory_space<vmem>>, vector<32x256xbf16>,
      %160 = vector.extract_strided_slice %138 {offsets = [0, 255], sizes = [32, 1], strides = [1, 1]} : vector<32x256xbf16> to vector<32x1xbf16>
      %161 = vector.extract_strided_slice %138 {offsets = [0, 0], sizes = [32, 255], strides = [1, 1]} : vector<32x256xbf16> to vector<32x255xbf16>
      %162 = tpu.concatenate %160, %161 in 1 : vector<32x1xbf16>, vector<32x255xbf16> -> vector<32x256xbf16>
      %c3_93 = arith.constant 3 : index
      %c0_94 = arith.constant 0 : index
      %163 = vector.load %arg2[%c3_93, %c0_94] : memref<9x256xbf16, #tpu.memory_space<vmem>>, vector<1x256xbf16>
      %164 = vector.broadcast %163 : vector<1x256xbf16> to vector<32x256xbf16>
      %165 = arith.mulf %162, %164 : vector<32x256xbf16>
      %c96_95 = arith.constant 96 : index
      %c0_96 = arith.constant 0 : index
      %166 = vector.load %arg10[%c96_95, %c0_96] : memref<288x256xbf16, #tpu.memory_space<vmem>>, vector<32x256xbf16>
      tpu.vector_store %arg10[%c96_95, %c0_96], %165 {strides = array<i32>} : memref<288x256xbf16, #tpu.memory_space<vmem>>, vector<32x256xbf16>,
      %c128_97 = arith.constant 128 : index
      %c0_98 = arith.constant 0 : index
      %167 = vector.load %arg10[%c128_97, %c0_98] : memref<288x256xbf16, #tpu.memory_space<vmem>>, vector<32x256xbf16>
      tpu.vector_store %arg10[%c128_97, %c0_98], %138 {strides = array<i32>} : memref<288x256xbf16, #tpu.memory_space<vmem>>, vector<32x256xbf16>,
      %168 = vector.extract_strided_slice %138 {offsets = [0, 1], sizes = [32, 255], strides = [1, 1]} : vector<32x256xbf16> to vector<32x255xbf16>
      %169 = vector.extract_strided_slice %138 {offsets = [0, 0], sizes = [32, 1], strides = [1, 1]} : vector<32x256xbf16> to vector<32x1xbf16>
      %170 = tpu.concatenate %168, %169 in 1 : vector<32x255xbf16>, vector<32x1xbf16> -> vector<32x256xbf16>
      %c5_99 = arith.constant 5 : index
      %c0_100 = arith.constant 0 : index
      %171 = vector.load %arg2[%c5_99, %c0_100] : memref<9x256xbf16, #tpu.memory_space<vmem>>, vector<1x256xbf16>
      %172 = vector.broadcast %171 : vector<1x256xbf16> to vector<32x256xbf16>
      %173 = arith.mulf %170, %172 : vector<32x256xbf16>
      %c160_101 = arith.constant 160 : index
      %c0_102 = arith.constant 0 : index
      %174 = vector.load %arg10[%c160_101, %c0_102] : memref<288x256xbf16, #tpu.memory_space<vmem>>, vector<32x256xbf16>
      tpu.vector_store %arg10[%c160_101, %c0_102], %173 {strides = array<i32>} : memref<288x256xbf16, #tpu.memory_space<vmem>>, vector<32x256xbf16>,
      %175 = vector.extract_strided_slice %138 {offsets = [0, 15], sizes = [32, 241], strides = [1, 1]} : vector<32x256xbf16> to vector<32x241xbf16>
      %176 = vector.extract_strided_slice %138 {offsets = [0, 0], sizes = [32, 15], strides = [1, 1]} : vector<32x256xbf16> to vector<32x15xbf16>
      %177 = tpu.concatenate %175, %176 in 1 : vector<32x241xbf16>, vector<32x15xbf16> -> vector<32x256xbf16>
      %c6_103 = arith.constant 6 : index
      %c0_104 = arith.constant 0 : index
      %178 = vector.load %arg2[%c6_103, %c0_104] : memref<9x256xbf16, #tpu.memory_space<vmem>>, vector<1x256xbf16>
      %179 = vector.broadcast %178 : vector<1x256xbf16> to vector<32x256xbf16>
      %180 = arith.mulf %177, %179 : vector<32x256xbf16>
      %c192_105 = arith.constant 192 : index
      %c0_106 = arith.constant 0 : index
      %181 = vector.load %arg10[%c192_105, %c0_106] : memref<288x256xbf16, #tpu.memory_space<vmem>>, vector<32x256xbf16>
      tpu.vector_store %arg10[%c192_105, %c0_106], %180 {strides = array<i32>} : memref<288x256xbf16, #tpu.memory_space<vmem>>, vector<32x256xbf16>,
      %182 = vector.extract_strided_slice %138 {offsets = [0, 16], sizes = [32, 240], strides = [1, 1]} : vector<32x256xbf16> to vector<32x240xbf16>
      %183 = vector.extract_strided_slice %138 {offsets = [0, 0], sizes = [32, 16], strides = [1, 1]} : vector<32x256xbf16> to vector<32x16xbf16>
      %184 = tpu.concatenate %182, %183 in 1 : vector<32x240xbf16>, vector<32x16xbf16> -> vector<32x256xbf16>
      %c7_107 = arith.constant 7 : index
      %c0_108 = arith.constant 0 : index
      %185 = vector.load %arg2[%c7_107, %c0_108] : memref<9x256xbf16, #tpu.memory_space<vmem>>, vector<1x256xbf16>
      %186 = vector.broadcast %185 : vector<1x256xbf16> to vector<32x256xbf16>
      %187 = arith.mulf %184, %186 : vector<32x256xbf16>
      %c224_109 = arith.constant 224 : index
      %c0_110 = arith.constant 0 : index
      %188 = vector.load %arg10[%c224_109, %c0_110] : memref<288x256xbf16, #tpu.memory_space<vmem>>, vector<32x256xbf16>
      tpu.vector_store %arg10[%c224_109, %c0_110], %187 {strides = array<i32>} : memref<288x256xbf16, #tpu.memory_space<vmem>>, vector<32x256xbf16>,
      %189 = vector.extract_strided_slice %138 {offsets = [0, 17], sizes = [32, 239], strides = [1, 1]} : vector<32x256xbf16> to vector<32x239xbf16>
      %190 = vector.extract_strided_slice %138 {offsets = [0, 0], sizes = [32, 17], strides = [1, 1]} : vector<32x256xbf16> to vector<32x17xbf16>
      %191 = tpu.concatenate %189, %190 in 1 : vector<32x239xbf16>, vector<32x17xbf16> -> vector<32x256xbf16>
      %c8_111 = arith.constant 8 : index
      %c0_112 = arith.constant 0 : index
      %192 = vector.load %arg2[%c8_111, %c0_112] : memref<9x256xbf16, #tpu.memory_space<vmem>>, vector<1x256xbf16>
      %193 = vector.broadcast %192 : vector<1x256xbf16> to vector<32x256xbf16>
      %194 = arith.mulf %191, %193 : vector<32x256xbf16>
      %c256_113 = arith.constant 256 : index
      %c0_114 = arith.constant 0 : index
      %195 = vector.load %arg10[%c256_113, %c0_114] : memref<288x256xbf16, #tpu.memory_space<vmem>>, vector<32x256xbf16>
      tpu.vector_store %arg10[%c256_113, %c0_114], %194 {strides = array<i32>} : memref<288x256xbf16, #tpu.memory_space<vmem>>, vector<32x256xbf16>,
      %c2_i32 = arith.constant 2 : i32
      %196 = arith.muli %c2_i32, %arg13 : i32
      %197 = arith.index_cast %196 : i32 to index
      %c0_115 = arith.constant 0 : index
      %c0_116 = arith.constant 0 : index
      %198 = vector.load %arg5[%197, %c0_115, %c0_116] : memref<8x32x288xbf16, #tpu.memory_space<vmem>>, vector<1x32x288xbf16>
      %199 = vector.shape_cast %198 : vector<1x32x288xbf16> to vector<32x288xbf16>
      %c2_i32_117 = arith.constant 2 : i32
      %200 = arith.muli %c2_i32_117, %arg13 : i32
      %201 = arith.index_cast %200 : i32 to index
      %c0_118 = arith.constant 0 : index
      %c0_119 = arith.constant 0 : index
      %202 = vector.load %arg6[%201, %c0_118, %c0_119] : memref<8x32x1xf32, #tpu.memory_space<vmem>>, vector<1x32x1xf32>
      %203 = vector.shape_cast %202 : vector<1x32x1xf32> to vector<32x1xf32>
      %c0_120 = arith.constant 0 : index
      %c0_121 = arith.constant 0 : index
      %204 = vector.load %arg10[%c0_120, %c0_121] : memref<288x256xbf16, #tpu.memory_space<vmem>>, vector<288x256xbf16>
      %cst_122 = arith.constant dense<0.000000e+00> : vector<32x256xf32>
      %205 = tpu.matmul %199, %204, %cst_122 {dimension_numbers = #tpu.dot_dimension_numbers<[1], [0], [0], [1], [0, 0, 1, 1], [], []>} : vector<32x288xbf16>, vector<288x256xbf16>, vector<32x256xf32> -> vector<32x256xf32>
      %206 = vector.broadcast %203 : vector<32x1xf32> to vector<32x256xf32>
      %207 = arith.addf %205, %206 : vector<32x256xf32>
      %cst_123 = arith.constant 0.000000e+00 : f32
      %208 = vector.broadcast %cst_123 : f32 to vector<32x256xf32>
      %209 = arith.maximumf %207, %208 : vector<32x256xf32>
      %210 = arith.truncf %209 : vector<32x256xf32> to vector<32x256xbf16>
      %211 = vector.extract_strided_slice %210 {offsets = [0, 239], sizes = [32, 17], strides = [1, 1]} : vector<32x256xbf16> to vector<32x17xbf16>
      %212 = vector.extract_strided_slice %210 {offsets = [0, 0], sizes = [32, 239], strides = [1, 1]} : vector<32x256xbf16> to vector<32x239xbf16>
      %213 = tpu.concatenate %211, %212 in 1 : vector<32x17xbf16>, vector<32x239xbf16> -> vector<32x256xbf16>
      %c0_124 = arith.constant 0 : index
      %c0_125 = arith.constant 0 : index
      %214 = vector.load %arg2[%c0_124, %c0_125] : memref<9x256xbf16, #tpu.memory_space<vmem>>, vector<1x256xbf16>
      %215 = vector.broadcast %214 : vector<1x256xbf16> to vector<32x256xbf16>
      %216 = arith.mulf %213, %215 : vector<32x256xbf16>
      %c0_126 = arith.constant 0 : index
      %c0_127 = arith.constant 0 : index
      %217 = vector.load %arg10[%c0_126, %c0_127] : memref<288x256xbf16, #tpu.memory_space<vmem>>, vector<32x256xbf16>
      tpu.vector_store %arg10[%c0_126, %c0_127], %216 {strides = array<i32>} : memref<288x256xbf16, #tpu.memory_space<vmem>>, vector<32x256xbf16>,
      %218 = vector.extract_strided_slice %210 {offsets = [0, 240], sizes = [32, 16], strides = [1, 1]} : vector<32x256xbf16> to vector<32x16xbf16>
      %219 = vector.extract_strided_slice %210 {offsets = [0, 0], sizes = [32, 240], strides = [1, 1]} : vector<32x256xbf16> to vector<32x240xbf16>
      %220 = tpu.concatenate %218, %219 in 1 : vector<32x16xbf16>, vector<32x240xbf16> -> vector<32x256xbf16>
      %c1_128 = arith.constant 1 : index
      %c0_129 = arith.constant 0 : index
      %221 = vector.load %arg2[%c1_128, %c0_129] : memref<9x256xbf16, #tpu.memory_space<vmem>>, vector<1x256xbf16>
      %222 = vector.broadcast %221 : vector<1x256xbf16> to vector<32x256xbf16>
      %223 = arith.mulf %220, %222 : vector<32x256xbf16>
      %c32_130 = arith.constant 32 : index
      %c0_131 = arith.constant 0 : index
      %224 = vector.load %arg10[%c32_130, %c0_131] : memref<288x256xbf16, #tpu.memory_space<vmem>>, vector<32x256xbf16>
      tpu.vector_store %arg10[%c32_130, %c0_131], %223 {strides = array<i32>} : memref<288x256xbf16, #tpu.memory_space<vmem>>, vector<32x256xbf16>,
      %225 = vector.extract_strided_slice %210 {offsets = [0, 241], sizes = [32, 15], strides = [1, 1]} : vector<32x256xbf16> to vector<32x15xbf16>
      %226 = vector.extract_strided_slice %210 {offsets = [0, 0], sizes = [32, 241], strides = [1, 1]} : vector<32x256xbf16> to vector<32x241xbf16>
      %227 = tpu.concatenate %225, %226 in 1 : vector<32x15xbf16>, vector<32x241xbf16> -> vector<32x256xbf16>
      %c2_132 = arith.constant 2 : index
      %c0_133 = arith.constant 0 : index
      %228 = vector.load %arg2[%c2_132, %c0_133] : memref<9x256xbf16, #tpu.memory_space<vmem>>, vector<1x256xbf16>
      %229 = vector.broadcast %228 : vector<1x256xbf16> to vector<32x256xbf16>
      %230 = arith.mulf %227, %229 : vector<32x256xbf16>
      %c64_134 = arith.constant 64 : index
      %c0_135 = arith.constant 0 : index
      %231 = vector.load %arg10[%c64_134, %c0_135] : memref<288x256xbf16, #tpu.memory_space<vmem>>, vector<32x256xbf16>
      tpu.vector_store %arg10[%c64_134, %c0_135], %230 {strides = array<i32>} : memref<288x256xbf16, #tpu.memory_space<vmem>>, vector<32x256xbf16>,
      %232 = vector.extract_strided_slice %210 {offsets = [0, 255], sizes = [32, 1], strides = [1, 1]} : vector<32x256xbf16> to vector<32x1xbf16>
      %233 = vector.extract_strided_slice %210 {offsets = [0, 0], sizes = [32, 255], strides = [1, 1]} : vector<32x256xbf16> to vector<32x255xbf16>
      %234 = tpu.concatenate %232, %233 in 1 : vector<32x1xbf16>, vector<32x255xbf16> -> vector<32x256xbf16>
      %c3_136 = arith.constant 3 : index
      %c0_137 = arith.constant 0 : index
      %235 = vector.load %arg2[%c3_136, %c0_137] : memref<9x256xbf16, #tpu.memory_space<vmem>>, vector<1x256xbf16>
      %236 = vector.broadcast %235 : vector<1x256xbf16> to vector<32x256xbf16>
      %237 = arith.mulf %234, %236 : vector<32x256xbf16>
      %c96_138 = arith.constant 96 : index
      %c0_139 = arith.constant 0 : index
      %238 = vector.load %arg10[%c96_138, %c0_139] : memref<288x256xbf16, #tpu.memory_space<vmem>>, vector<32x256xbf16>
      tpu.vector_store %arg10[%c96_138, %c0_139], %237 {strides = array<i32>} : memref<288x256xbf16, #tpu.memory_space<vmem>>, vector<32x256xbf16>,
      %c128_140 = arith.constant 128 : index
      %c0_141 = arith.constant 0 : index
      %239 = vector.load %arg10[%c128_140, %c0_141] : memref<288x256xbf16, #tpu.memory_space<vmem>>, vector<32x256xbf16>
      tpu.vector_store %arg10[%c128_140, %c0_141], %210 {strides = array<i32>} : memref<288x256xbf16, #tpu.memory_space<vmem>>, vector<32x256xbf16>,
      %240 = vector.extract_strided_slice %210 {offsets = [0, 1], sizes = [32, 255], strides = [1, 1]} : vector<32x256xbf16> to vector<32x255xbf16>
      %241 = vector.extract_strided_slice %210 {offsets = [0, 0], sizes = [32, 1], strides = [1, 1]} : vector<32x256xbf16> to vector<32x1xbf16>
      %242 = tpu.concatenate %240, %241 in 1 : vector<32x255xbf16>, vector<32x1xbf16> -> vector<32x256xbf16>
      %c5_142 = arith.constant 5 : index
      %c0_143 = arith.constant 0 : index
      %243 = vector.load %arg2[%c5_142, %c0_143] : memref<9x256xbf16, #tpu.memory_space<vmem>>, vector<1x256xbf16>
      %244 = vector.broadcast %243 : vector<1x256xbf16> to vector<32x256xbf16>
      %245 = arith.mulf %242, %244 : vector<32x256xbf16>
      %c160_144 = arith.constant 160 : index
      %c0_145 = arith.constant 0 : index
      %246 = vector.load %arg10[%c160_144, %c0_145] : memref<288x256xbf16, #tpu.memory_space<vmem>>, vector<32x256xbf16>
      tpu.vector_store %arg10[%c160_144, %c0_145], %245 {strides = array<i32>} : memref<288x256xbf16, #tpu.memory_space<vmem>>, vector<32x256xbf16>,
      %247 = vector.extract_strided_slice %210 {offsets = [0, 15], sizes = [32, 241], strides = [1, 1]} : vector<32x256xbf16> to vector<32x241xbf16>
      %248 = vector.extract_strided_slice %210 {offsets = [0, 0], sizes = [32, 15], strides = [1, 1]} : vector<32x256xbf16> to vector<32x15xbf16>
      %249 = tpu.concatenate %247, %248 in 1 : vector<32x241xbf16>, vector<32x15xbf16> -> vector<32x256xbf16>
      %c6_146 = arith.constant 6 : index
      %c0_147 = arith.constant 0 : index
      %250 = vector.load %arg2[%c6_146, %c0_147] : memref<9x256xbf16, #tpu.memory_space<vmem>>, vector<1x256xbf16>
      %251 = vector.broadcast %250 : vector<1x256xbf16> to vector<32x256xbf16>
      %252 = arith.mulf %249, %251 : vector<32x256xbf16>
      %c192_148 = arith.constant 192 : index
      %c0_149 = arith.constant 0 : index
      %253 = vector.load %arg10[%c192_148, %c0_149] : memref<288x256xbf16, #tpu.memory_space<vmem>>, vector<32x256xbf16>
      tpu.vector_store %arg10[%c192_148, %c0_149], %252 {strides = array<i32>} : memref<288x256xbf16, #tpu.memory_space<vmem>>, vector<32x256xbf16>,
      %254 = vector.extract_strided_slice %210 {offsets = [0, 16], sizes = [32, 240], strides = [1, 1]} : vector<32x256xbf16> to vector<32x240xbf16>
      %255 = vector.extract_strided_slice %210 {offsets = [0, 0], sizes = [32, 16], strides = [1, 1]} : vector<32x256xbf16> to vector<32x16xbf16>
      %256 = tpu.concatenate %254, %255 in 1 : vector<32x240xbf16>, vector<32x16xbf16> -> vector<32x256xbf16>
      %c7_150 = arith.constant 7 : index
      %c0_151 = arith.constant 0 : index
      %257 = vector.load %arg2[%c7_150, %c0_151] : memref<9x256xbf16, #tpu.memory_space<vmem>>, vector<1x256xbf16>
      %258 = vector.broadcast %257 : vector<1x256xbf16> to vector<32x256xbf16>
      %259 = arith.mulf %256, %258 : vector<32x256xbf16>
      %c224_152 = arith.constant 224 : index
      %c0_153 = arith.constant 0 : index
      %260 = vector.load %arg10[%c224_152, %c0_153] : memref<288x256xbf16, #tpu.memory_space<vmem>>, vector<32x256xbf16>
      tpu.vector_store %arg10[%c224_152, %c0_153], %259 {strides = array<i32>} : memref<288x256xbf16, #tpu.memory_space<vmem>>, vector<32x256xbf16>,
      %261 = vector.extract_strided_slice %210 {offsets = [0, 17], sizes = [32, 239], strides = [1, 1]} : vector<32x256xbf16> to vector<32x239xbf16>
      %262 = vector.extract_strided_slice %210 {offsets = [0, 0], sizes = [32, 17], strides = [1, 1]} : vector<32x256xbf16> to vector<32x17xbf16>
      %263 = tpu.concatenate %261, %262 in 1 : vector<32x239xbf16>, vector<32x17xbf16> -> vector<32x256xbf16>
      %c8_154 = arith.constant 8 : index
      %c0_155 = arith.constant 0 : index
      %264 = vector.load %arg2[%c8_154, %c0_155] : memref<9x256xbf16, #tpu.memory_space<vmem>>, vector<1x256xbf16>
      %265 = vector.broadcast %264 : vector<1x256xbf16> to vector<32x256xbf16>
      %266 = arith.mulf %263, %265 : vector<32x256xbf16>
      %c256_156 = arith.constant 256 : index
      %c0_157 = arith.constant 0 : index
      %267 = vector.load %arg10[%c256_156, %c0_157] : memref<288x256xbf16, #tpu.memory_space<vmem>>, vector<32x256xbf16>
      tpu.vector_store %arg10[%c256_156, %c0_157], %266 {strides = array<i32>} : memref<288x256xbf16, #tpu.memory_space<vmem>>, vector<32x256xbf16>,
      %c2_i32_158 = arith.constant 2 : i32
      %268 = arith.muli %c2_i32_158, %arg13 : i32
      %c1_i32_159 = arith.constant 1 : i32
      %269 = arith.addi %268, %c1_i32_159 : i32
      %270 = arith.index_cast %269 : i32 to index
      %c0_160 = arith.constant 0 : index
      %c0_161 = arith.constant 0 : index
      %271 = vector.load %arg5[%270, %c0_160, %c0_161] : memref<8x32x288xbf16, #tpu.memory_space<vmem>>, vector<1x32x288xbf16>
      %272 = vector.shape_cast %271 : vector<1x32x288xbf16> to vector<32x288xbf16>
      %c2_i32_162 = arith.constant 2 : i32
      %273 = arith.muli %c2_i32_162, %arg13 : i32
      %c1_i32_163 = arith.constant 1 : i32
      %274 = arith.addi %273, %c1_i32_163 : i32
      %275 = arith.index_cast %274 : i32 to index
      %c0_164 = arith.constant 0 : index
      %c0_165 = arith.constant 0 : index
      %276 = vector.load %arg6[%275, %c0_164, %c0_165] : memref<8x32x1xf32, #tpu.memory_space<vmem>>, vector<1x32x1xf32>
      %277 = vector.shape_cast %276 : vector<1x32x1xf32> to vector<32x1xf32>
      %c0_166 = arith.constant 0 : index
      %c0_167 = arith.constant 0 : index
      %278 = vector.load %arg10[%c0_166, %c0_167] : memref<288x256xbf16, #tpu.memory_space<vmem>>, vector<288x256xbf16>
      %cst_168 = arith.constant dense<0.000000e+00> : vector<32x256xf32>
      %279 = tpu.matmul %272, %278, %cst_168 {dimension_numbers = #tpu.dot_dimension_numbers<[1], [0], [0], [1], [0, 0, 1, 1], [], []>} : vector<32x288xbf16>, vector<288x256xbf16>, vector<32x256xf32> -> vector<32x256xf32>
      %280 = vector.broadcast %277 : vector<32x1xf32> to vector<32x256xf32>
      %281 = arith.addf %279, %280 : vector<32x256xf32>
      %c0_169 = arith.constant 0 : index
      %c0_170 = arith.constant 0 : index
      %282 = vector.load %arg12[%c0_169, %c0_170] : memref<32x256xf32, #tpu.memory_space<vmem>>, vector<32x256xf32>
      %283 = arith.addf %282, %281 : vector<32x256xf32>
      %c0_171 = arith.constant 0 : index
      %c0_172 = arith.constant 0 : index
      %284 = vector.load %arg12[%c0_171, %c0_172] : memref<32x256xf32, #tpu.memory_space<vmem>>, vector<32x256xf32>
      tpu.vector_store %arg12[%c0_171, %c0_172], %283 {strides = array<i32>} : memref<32x256xf32, #tpu.memory_space<vmem>>, vector<32x256xf32>,
      %285 = arith.truncf %283 : vector<32x256xf32> to vector<32x256xbf16>
      %c0_173 = arith.constant 0 : index
      %c0_174 = arith.constant 0 : index
      %286 = vector.load %arg11[%c0_173, %c0_174] : memref<32x256xbf16, #tpu.memory_space<vmem>>, vector<32x256xbf16>
      tpu.vector_store %arg11[%c0_173, %c0_174], %285 {strides = array<i32>} : memref<32x256xbf16, #tpu.memory_space<vmem>>, vector<32x256xbf16>,
    }
    %c4_i32_32 = arith.constant 4 : i32
    %c0_33 = arith.constant 0 : index
    %c0_34 = arith.constant 0 : index
    %71 = vector.load %arg11[%c0_33, %c0_34] : memref<32x256xbf16, #tpu.memory_space<vmem>>, vector<32x256xbf16>
    %72 = vector.extract_strided_slice %71 {offsets = [0, 239], sizes = [32, 17], strides = [1, 1]} : vector<32x256xbf16> to vector<32x17xbf16>
    %73 = vector.extract_strided_slice %71 {offsets = [0, 0], sizes = [32, 239], strides = [1, 1]} : vector<32x256xbf16> to vector<32x239xbf16>
    %74 = tpu.concatenate %72, %73 in 1 : vector<32x17xbf16>, vector<32x239xbf16> -> vector<32x256xbf16>
    %c0_35 = arith.constant 0 : index
    %c0_36 = arith.constant 0 : index
    %75 = vector.load %arg2[%c0_35, %c0_36] : memref<9x256xbf16, #tpu.memory_space<vmem>>, vector<1x256xbf16>
    %76 = vector.broadcast %75 : vector<1x256xbf16> to vector<32x256xbf16>
    %77 = arith.mulf %74, %76 : vector<32x256xbf16>
    %c0_37 = arith.constant 0 : index
    %c0_38 = arith.constant 0 : index
    %78 = vector.load %arg10[%c0_37, %c0_38] : memref<288x256xbf16, #tpu.memory_space<vmem>>, vector<32x256xbf16>
    tpu.vector_store %arg10[%c0_37, %c0_38], %77 {strides = array<i32>} : memref<288x256xbf16, #tpu.memory_space<vmem>>, vector<32x256xbf16>,
    %79 = vector.extract_strided_slice %71 {offsets = [0, 240], sizes = [32, 16], strides = [1, 1]} : vector<32x256xbf16> to vector<32x16xbf16>
    %80 = vector.extract_strided_slice %71 {offsets = [0, 0], sizes = [32, 240], strides = [1, 1]} : vector<32x256xbf16> to vector<32x240xbf16>
    %81 = tpu.concatenate %79, %80 in 1 : vector<32x16xbf16>, vector<32x240xbf16> -> vector<32x256xbf16>
    %c1_39 = arith.constant 1 : index
    %c0_40 = arith.constant 0 : index
    %82 = vector.load %arg2[%c1_39, %c0_40] : memref<9x256xbf16, #tpu.memory_space<vmem>>, vector<1x256xbf16>
    %83 = vector.broadcast %82 : vector<1x256xbf16> to vector<32x256xbf16>
    %84 = arith.mulf %81, %83 : vector<32x256xbf16>
    %c32_41 = arith.constant 32 : index
    %c0_42 = arith.constant 0 : index
    %85 = vector.load %arg10[%c32_41, %c0_42] : memref<288x256xbf16, #tpu.memory_space<vmem>>, vector<32x256xbf16>
    tpu.vector_store %arg10[%c32_41, %c0_42], %84 {strides = array<i32>} : memref<288x256xbf16, #tpu.memory_space<vmem>>, vector<32x256xbf16>,
    %86 = vector.extract_strided_slice %71 {offsets = [0, 241], sizes = [32, 15], strides = [1, 1]} : vector<32x256xbf16> to vector<32x15xbf16>
    %87 = vector.extract_strided_slice %71 {offsets = [0, 0], sizes = [32, 241], strides = [1, 1]} : vector<32x256xbf16> to vector<32x241xbf16>
    %88 = tpu.concatenate %86, %87 in 1 : vector<32x15xbf16>, vector<32x241xbf16> -> vector<32x256xbf16>
    %c2_43 = arith.constant 2 : index
    %c0_44 = arith.constant 0 : index
    %89 = vector.load %arg2[%c2_43, %c0_44] : memref<9x256xbf16, #tpu.memory_space<vmem>>, vector<1x256xbf16>
    %90 = vector.broadcast %89 : vector<1x256xbf16> to vector<32x256xbf16>
    %91 = arith.mulf %88, %90 : vector<32x256xbf16>
    %c64_45 = arith.constant 64 : index
    %c0_46 = arith.constant 0 : index
    %92 = vector.load %arg10[%c64_45, %c0_46] : memref<288x256xbf16, #tpu.memory_space<vmem>>, vector<32x256xbf16>
    tpu.vector_store %arg10[%c64_45, %c0_46], %91 {strides = array<i32>} : memref<288x256xbf16, #tpu.memory_space<vmem>>, vector<32x256xbf16>,
    %93 = vector.extract_strided_slice %71 {offsets = [0, 255], sizes = [32, 1], strides = [1, 1]} : vector<32x256xbf16> to vector<32x1xbf16>
    %94 = vector.extract_strided_slice %71 {offsets = [0, 0], sizes = [32, 255], strides = [1, 1]} : vector<32x256xbf16> to vector<32x255xbf16>
    %95 = tpu.concatenate %93, %94 in 1 : vector<32x1xbf16>, vector<32x255xbf16> -> vector<32x256xbf16>
    %c3_47 = arith.constant 3 : index
    %c0_48 = arith.constant 0 : index
    %96 = vector.load %arg2[%c3_47, %c0_48] : memref<9x256xbf16, #tpu.memory_space<vmem>>, vector<1x256xbf16>
    %97 = vector.broadcast %96 : vector<1x256xbf16> to vector<32x256xbf16>
    %98 = arith.mulf %95, %97 : vector<32x256xbf16>
    %c96_49 = arith.constant 96 : index
    %c0_50 = arith.constant 0 : index
    %99 = vector.load %arg10[%c96_49, %c0_50] : memref<288x256xbf16, #tpu.memory_space<vmem>>, vector<32x256xbf16>
    tpu.vector_store %arg10[%c96_49, %c0_50], %98 {strides = array<i32>} : memref<288x256xbf16, #tpu.memory_space<vmem>>, vector<32x256xbf16>,
    %c128_51 = arith.constant 128 : index
    %c0_52 = arith.constant 0 : index
    %100 = vector.load %arg10[%c128_51, %c0_52] : memref<288x256xbf16, #tpu.memory_space<vmem>>, vector<32x256xbf16>
    tpu.vector_store %arg10[%c128_51, %c0_52], %71 {strides = array<i32>} : memref<288x256xbf16, #tpu.memory_space<vmem>>, vector<32x256xbf16>,
    %101 = vector.extract_strided_slice %71 {offsets = [0, 1], sizes = [32, 255], strides = [1, 1]} : vector<32x256xbf16> to vector<32x255xbf16>
    %102 = vector.extract_strided_slice %71 {offsets = [0, 0], sizes = [32, 1], strides = [1, 1]} : vector<32x256xbf16> to vector<32x1xbf16>
    %103 = tpu.concatenate %101, %102 in 1 : vector<32x255xbf16>, vector<32x1xbf16> -> vector<32x256xbf16>
    %c5_53 = arith.constant 5 : index
    %c0_54 = arith.constant 0 : index
    %104 = vector.load %arg2[%c5_53, %c0_54] : memref<9x256xbf16, #tpu.memory_space<vmem>>, vector<1x256xbf16>
    %105 = vector.broadcast %104 : vector<1x256xbf16> to vector<32x256xbf16>
    %106 = arith.mulf %103, %105 : vector<32x256xbf16>
    %c160_55 = arith.constant 160 : index
    %c0_56 = arith.constant 0 : index
    %107 = vector.load %arg10[%c160_55, %c0_56] : memref<288x256xbf16, #tpu.memory_space<vmem>>, vector<32x256xbf16>
    tpu.vector_store %arg10[%c160_55, %c0_56], %106 {strides = array<i32>} : memref<288x256xbf16, #tpu.memory_space<vmem>>, vector<32x256xbf16>,
    %108 = vector.extract_strided_slice %71 {offsets = [0, 15], sizes = [32, 241], strides = [1, 1]} : vector<32x256xbf16> to vector<32x241xbf16>
    %109 = vector.extract_strided_slice %71 {offsets = [0, 0], sizes = [32, 15], strides = [1, 1]} : vector<32x256xbf16> to vector<32x15xbf16>
    %110 = tpu.concatenate %108, %109 in 1 : vector<32x241xbf16>, vector<32x15xbf16> -> vector<32x256xbf16>
    %c6_57 = arith.constant 6 : index
    %c0_58 = arith.constant 0 : index
    %111 = vector.load %arg2[%c6_57, %c0_58] : memref<9x256xbf16, #tpu.memory_space<vmem>>, vector<1x256xbf16>
    %112 = vector.broadcast %111 : vector<1x256xbf16> to vector<32x256xbf16>
    %113 = arith.mulf %110, %112 : vector<32x256xbf16>
    %c192_59 = arith.constant 192 : index
    %c0_60 = arith.constant 0 : index
    %114 = vector.load %arg10[%c192_59, %c0_60] : memref<288x256xbf16, #tpu.memory_space<vmem>>, vector<32x256xbf16>
    tpu.vector_store %arg10[%c192_59, %c0_60], %113 {strides = array<i32>} : memref<288x256xbf16, #tpu.memory_space<vmem>>, vector<32x256xbf16>,
    %115 = vector.extract_strided_slice %71 {offsets = [0, 16], sizes = [32, 240], strides = [1, 1]} : vector<32x256xbf16> to vector<32x240xbf16>
    %116 = vector.extract_strided_slice %71 {offsets = [0, 0], sizes = [32, 16], strides = [1, 1]} : vector<32x256xbf16> to vector<32x16xbf16>
    %117 = tpu.concatenate %115, %116 in 1 : vector<32x240xbf16>, vector<32x16xbf16> -> vector<32x256xbf16>
    %c7_61 = arith.constant 7 : index
    %c0_62 = arith.constant 0 : index
    %118 = vector.load %arg2[%c7_61, %c0_62] : memref<9x256xbf16, #tpu.memory_space<vmem>>, vector<1x256xbf16>
    %119 = vector.broadcast %118 : vector<1x256xbf16> to vector<32x256xbf16>
    %120 = arith.mulf %117, %119 : vector<32x256xbf16>
    %c224_63 = arith.constant 224 : index
    %c0_64 = arith.constant 0 : index
    %121 = vector.load %arg10[%c224_63, %c0_64] : memref<288x256xbf16, #tpu.memory_space<vmem>>, vector<32x256xbf16>
    tpu.vector_store %arg10[%c224_63, %c0_64], %120 {strides = array<i32>} : memref<288x256xbf16, #tpu.memory_space<vmem>>, vector<32x256xbf16>,
    %122 = vector.extract_strided_slice %71 {offsets = [0, 17], sizes = [32, 239], strides = [1, 1]} : vector<32x256xbf16> to vector<32x239xbf16>
    %123 = vector.extract_strided_slice %71 {offsets = [0, 0], sizes = [32, 17], strides = [1, 1]} : vector<32x256xbf16> to vector<32x17xbf16>
    %124 = tpu.concatenate %122, %123 in 1 : vector<32x239xbf16>, vector<32x17xbf16> -> vector<32x256xbf16>
    %c8_65 = arith.constant 8 : index
    %c0_66 = arith.constant 0 : index
    %125 = vector.load %arg2[%c8_65, %c0_66] : memref<9x256xbf16, #tpu.memory_space<vmem>>, vector<1x256xbf16>
    %126 = vector.broadcast %125 : vector<1x256xbf16> to vector<32x256xbf16>
    %127 = arith.mulf %124, %126 : vector<32x256xbf16>
    %c256_67 = arith.constant 256 : index
    %c0_68 = arith.constant 0 : index
    %128 = vector.load %arg10[%c256_67, %c0_68] : memref<288x256xbf16, #tpu.memory_space<vmem>>, vector<32x256xbf16>
    tpu.vector_store %arg10[%c256_67, %c0_68], %127 {strides = array<i32>} : memref<288x256xbf16, #tpu.memory_space<vmem>>, vector<32x256xbf16>,
    %c0_69 = arith.constant 0 : index
    %c0_70 = arith.constant 0 : index
    %129 = vector.load %arg7[%c0_69, %c0_70] : memref<32x288xbf16, #tpu.memory_space<vmem>>, vector<32x288xbf16>
    %c0_71 = arith.constant 0 : index
    %c0_72 = arith.constant 0 : index
    %130 = vector.load %arg8[%c0_71, %c0_72] : memref<32x1xf32, #tpu.memory_space<vmem>>, vector<32x1xf32>
    %c0_73 = arith.constant 0 : index
    %c0_74 = arith.constant 0 : index
    %131 = vector.load %arg10[%c0_73, %c0_74] : memref<288x256xbf16, #tpu.memory_space<vmem>>, vector<288x256xbf16>
    %cst_75 = arith.constant dense<0.000000e+00> : vector<32x256xf32>
    %132 = tpu.matmul %129, %131, %cst_75 {dimension_numbers = #tpu.dot_dimension_numbers<[1], [0], [0], [1], [0, 0, 1, 1], [], []>} : vector<32x288xbf16>, vector<288x256xbf16>, vector<32x256xf32> -> vector<32x256xf32>
    %133 = vector.broadcast %130 : vector<32x1xf32> to vector<32x256xf32>
    %134 = arith.addf %132, %133 : vector<32x256xf32>
    %135 = vector.extract_strided_slice %134 {offsets = [0, 0], sizes = [4, 256], strides = [1, 1]} : vector<32x256xf32> to vector<4x256xf32>
    %136 = vector.shape_cast %135 : vector<4x256xf32> to vector<1x4x256xf32>
    %c0_76 = arith.constant 0 : index
    %c0_77 = arith.constant 0 : index
    %c0_78 = arith.constant 0 : index
    %137 = vector.load %arg9[%c0_76, %c0_77, %c0_78] : memref<1x4x256xf32, #tpu.memory_space<vmem>>, vector<1x4x256xf32>
    tpu.vector_store %arg9[%c0_76, %c0_77, %c0_78], %136 {strides = array<i32>} : memref<1x4x256xf32, #tpu.memory_space<vmem>>, vector<1x4x256xf32>,
    return
  }
  func.func @transform_0(%arg0: i32) -> (i32, i32, i32) {
    %c0_i32 = arith.constant 0 : i32
    %c0_i32_0 = arith.constant 0 : i32
    %c0_i32_1 = arith.constant 0 : i32
    return %arg0, %c0_i32, %c0_i32_0 : i32, i32, i32
  }
  func.func @transform_1(%arg0: i32) -> (i32, i32) {
    %c0_i32 = arith.constant 0 : i32
    %c0_i32_0 = arith.constant 0 : i32
    %c0_i32_1 = arith.constant 0 : i32
    return %c0_i32, %c0_i32_0 : i32, i32
  }
  func.func @transform_2(%arg0: i32) -> (i32, i32) {
    %c0_i32 = arith.constant 0 : i32
    %c0_i32_0 = arith.constant 0 : i32
    %c0_i32_1 = arith.constant 0 : i32
    return %c0_i32, %c0_i32_0 : i32, i32
  }
  func.func @transform_3(%arg0: i32) -> (i32, i32) {
    %c0_i32 = arith.constant 0 : i32
    %c0_i32_0 = arith.constant 0 : i32
    %c0_i32_1 = arith.constant 0 : i32
    return %c0_i32, %c0_i32_0 : i32, i32
  }
  func.func @transform_4(%arg0: i32) -> (i32, i32, i32) {
    %c0_i32 = arith.constant 0 : i32
    %c0_i32_0 = arith.constant 0 : i32
    %c0_i32_1 = arith.constant 0 : i32
    %c0_i32_2 = arith.constant 0 : i32
    return %c0_i32, %c0_i32_0, %c0_i32_1 : i32, i32, i32
  }
  func.func @transform_5(%arg0: i32) -> (i32, i32, i32) {
    %c0_i32 = arith.constant 0 : i32
    %c0_i32_0 = arith.constant 0 : i32
    %c0_i32_1 = arith.constant 0 : i32
    %c0_i32_2 = arith.constant 0 : i32
    return %c0_i32, %c0_i32_0, %c0_i32_1 : i32, i32, i32
  }
  func.func @transform_6(%arg0: i32) -> (i32, i32) {
    %c0_i32 = arith.constant 0 : i32
    %c0_i32_0 = arith.constant 0 : i32
    %c0_i32_1 = arith.constant 0 : i32
    return %c0_i32, %c0_i32_0 : i32, i32
  }
  func.func @transform_7(%arg0: i32) -> (i32, i32) {
    %c0_i32 = arith.constant 0 : i32
    %c0_i32_0 = arith.constant 0 : i32
    %c0_i32_1 = arith.constant 0 : i32
    return %c0_i32, %c0_i32_0 : i32, i32
  }
  func.func @transform_8(%arg0: i32) -> (i32, i32, i32) {
    %c0_i32 = arith.constant 0 : i32
    %c0_i32_0 = arith.constant 0 : i32
    %c0_i32_1 = arith.constant 0 : i32
    return %arg0, %c0_i32, %c0_i32_0 : i32, i32, i32
  }
}

</mosaic_0001>

<llo_original>
// kernel: fusionnet_forward.1
$region0: #{fusionnet_forward.1}
  #allocation0 [shape = 'u32[]', space=smem, size = 0x4, offset = 0x4, fixed_abs, tag = 'smem constant byte address 0x4 - core index']
  #allocation1 [shape = 'u32[144,128]{1,0:T(1,128)}', space=vmem, size = 0x12000, scoped, tag = 'internal scratch']
  #allocation2 [shape = 'bf16[288,256]{1,0:T(16,128)(2,1)}', space=vmem, size = 0x24000, scoped, tag = 'scratch operand']
  #allocation3 [shape = 'bf16[32,256]{1,0:T(16,128)(2,1)}', space=vmem, size = 0x4000, scoped, tag = 'scratch operand']
  #allocation4 [shape = 'f32[32,256]{1,0:T(8,128)}', space=vmem, size = 0x8000, scoped, tag = 'scratch operand']
  %s0 = inlined_call_operand.vmem [shape: bf16[2,32,256], index: 0, kind: input, shape index: {}]
  %s1 = inlined_call_operand.vmem [shape: bf16[9,256], index: 1, kind: input, shape index: {}]
  %s2 = inlined_call_operand.vmem [shape: bf16[32,288], index: 2, kind: input, shape index: {}]
  %s3 = inlined_call_operand.vmem [shape: f32[32,1], index: 3, kind: input, shape index: {}]
  %s4 = inlined_call_operand.vmem [shape: bf16[8,32,288], index: 4, kind: input, shape index: {}]
  %s5 = inlined_call_operand.vmem [shape: f32[8,32,1], index: 5, kind: input, shape index: {}]
  %s6 = inlined_call_operand.vmem [shape: bf16[32,288], index: 6, kind: input, shape index: {}]
  %s7 = inlined_call_operand.vmem [shape: f32[32,1], index: 7, kind: input, shape index: {}]
  %s8 = inlined_call_operand.vmem [shape: f32[2,4,256], index: 8, kind: output, shape index: {}]
  %s9 = sld [smem:[#allocation0]]
  $region72: #{fusionnet_forward.1} parent=0
    _
  %s11 = ssub.s32 1, %s9
  %s12 = scalar_select 0, %s11, %s9
  loop: start=0, step=1, limit=4
  $region2: #{fusionnet_forward.1} parent=0 // loop_pre_header
    _
  $region3: #{fusionnet_forward.1} parent=0 // loop_header
    %s14 = sphi 0, %s18
    %p15 = scmp.ge.s32.totalorder %s14, 4
    %s24 = sphi 0, %s26
    %s27 = sphi 0, %s24
    %s28 = sphi 0, %s27
    %s44 = sphi 0, %s28
    %s48 = sphi 0, %s48
    %s50 = sphi 0, %s48
    %s51 = sphi 0, %s50
    %s65 = sphi 0, %s51
    %s69 = sphi 0, %s69
    %s71 = sphi 0, %s69
    %s72 = sphi 0, %s71
    %s86 = sphi 0, %s72
    %s90 = sphi 0, %s90
    %s92 = sphi 0, %s90
    %s93 = sphi 0, %s92
    %s107 = sphi 0, %s93
    %s111 = sphi 0, %s111
    %s113 = sphi 0, %s111
    %s114 = sphi 0, %s113
    %s128 = sphi 0, %s114
    %s132 = sphi 0, %s132
    %s134 = sphi 0, %s132
    %s135 = sphi 0, %s134
    %s149 = sphi 0, %s135
    %s153 = sphi 0, %s153
    %s155 = sphi 0, %s153
    %s156 = sphi 0, %s155
    %s170 = sphi 0, %s156
    %s174 = sphi 0, %s174
    %s176 = sphi 0, %s174
    %s177 = sphi 0, %s176
    %s191 = sphi 0, %s177
    %s197 = sphi 0, %s199
    %s200 = sphi 0, %s197
    %s201 = sphi 0, %s200
    %s217 = sphi 0, %s201
  $region4: #{fusionnet_forward.1} parent=0 // loop_header_branch
    %17 = sbr.rel (%p15) target = $region8
  $region5: #{fusionnet_forward.1} parent=0 // loop_body
    %s19 = ssub.s32 %s14, 1
    %s20 = ssub.s32 %s14, 2
    %s21 = sadd.s32 %s14, 1
    %s22 = ssub.s32 %s14, %s21
    %p23 = scmp.eq.s32.totalorder %s22, 0
    %s25 = sadd.s32 %s24, 1
    %s26 = scalar_select %p23, %s24, %s25
    %p29 = pneg %p23
    %p30 = scmp.eq.s32.totalorder %s14, 1
    %p31 = por %p29, %p30
    %p32 = scmp.ne.s32.totalorder %s24, %s27
    %p33 = scmp.eq.s32.totalorder %s14, 0
    %p34 = por %p32, %p33
    %p35 = scmp.ne.s32.totalorder %s24, %s27
    %p36 = scmp.eq.s32.totalorder %s19, 1
    %p37 = por %p35, %p36
    %p38 = scmp.ne.s32.totalorder %s27, %s28
    %p39 = scmp.eq.s32.totalorder %s19, 0
    %p40 = por %p38, %p39
    %p41 = scmp.ne.s32.totalorder %s27, %s28
    %p42 = scmp.eq.s32.totalorder %s20, 1
    %p43 = por %p41, %p42
    %p45 = scmp.ne.s32.totalorder %s28, %s44
    %p46 = scmp.eq.s32.totalorder %s20, 0
    %p47 = por %p45, %p46
    %s49 = sadd.s32 %s48, 1
    %p52 = scmp.eq.s32.totalorder %s14, 1
    %p53 = scmp.ne.s32.totalorder %s48, %s50
    %p54 = scmp.eq.s32.totalorder %s14, 0
    %p55 = por %p53, %p54
    %p56 = scmp.ne.s32.totalorder %s48, %s50
    %p57 = scmp.eq.s32.totalorder %s19, 1
    %p58 = por %p56, %p57
    %p59 = scmp.ne.s32.totalorder %s50, %s51
    %p60 = scmp.eq.s32.totalorder %s19, 0
    %p61 = por %p59, %p60
    %p62 = scmp.ne.s32.totalorder %s50, %s51
    %p63 = scmp.eq.s32.totalorder %s20, 1
    %p64 = por %p62, %p63
    %p66 = scmp.ne.s32.totalorder %s51, %s65
    %p67 = scmp.eq.s32.totalorder %s20, 0
    %p68 = por %p66, %p67
    %s70 = sadd.s32 %s69, 1
    %p73 = scmp.eq.s32.totalorder %s14, 1
    %p74 = scmp.ne.s32.totalorder %s69, %s71
    %p75 = scmp.eq.s32.totalorder %s14, 0
    %p76 = por %p74, %p75
    %p77 = scmp.ne.s32.totalorder %s69, %s71
    %p78 = scmp.eq.s32.totalorder %s19, 1
    %p79 = por %p77, %p78
    %p80 = scmp.ne.s32.totalorder %s71, %s72
    %p81 = scmp.eq.s32.totalorder %s19, 0
    %p82 = por %p80, %p81
    %p83 = scmp.ne.s32.totalorder %s71, %s72
    %p84 = scmp.eq.s32.totalorder %s20, 1
    %p85 = por %p83, %p84
    %p87 = scmp.ne.s32.totalorder %s72, %s86
    %p88 = scmp.eq.s32.totalorder %s20, 0
    %p89 = por %p87, %p88
    %s91 = sadd.s32 %s90, 1
    %p94 = scmp.eq.s32.totalorder %s14, 1
    %p95 = scmp.ne.s32.totalorder %s90, %s92
    %p96 = scmp.eq.s32.totalorder %s14, 0
    %p97 = por %p95, %p96
    %p98 = scmp.ne.s32.totalorder %s90, %s92
    %p99 = scmp.eq.s32.totalorder %s19, 1
    %p100 = por %p98, %p99
    %p101 = scmp.ne.s32.totalorder %s92, %s93
    %p102 = scmp.eq.s32.totalorder %s19, 0
    %p103 = por %p101, %p102
    %p104 = scmp.ne.s32.totalorder %s92, %s93
    %p105 = scmp.eq.s32.totalorder %s20, 1
    %p106 = por %p104, %p105
    %p108 = scmp.ne.s32.totalorder %s93, %s107
    %p109 = scmp.eq.s32.totalorder %s20, 0
    %p110 = por %p108, %p109
    %s112 = sadd.s32 %s111, 1
    %p115 = scmp.eq.s32.totalorder %s14, 1
    %p116 = scmp.ne.s32.totalorder %s111, %s113
    %p117 = scmp.eq.s32.totalorder %s14, 0
    %p118 = por %p116, %p117
    %p119 = scmp.ne.s32.totalorder %s111, %s113
    %p120 = scmp.eq.s32.totalorder %s19, 1
    %p121 = por %p119, %p120
    %p122 = scmp.ne.s32.totalorder %s113, %s114
    %p123 = scmp.eq.s32.totalorder %s19, 0
    %p124 = por %p122, %p123
    %p125 = scmp.ne.s32.totalorder %s113, %s114
    %p126 = scmp.eq.s32.totalorder %s20, 1
    %p127 = por %p125, %p126
    %p129 = scmp.ne.s32.totalorder %s114, %s128
    %p130 = scmp.eq.s32.totalorder %s20, 0
    %p131 = por %p129, %p130
    %s133 = sadd.s32 %s132, 1
    %p136 = scmp.eq.s32.totalorder %s14, 1
    %p137 = scmp.ne.s32.totalorder %s132, %s134
    %p138 = scmp.eq.s32.totalorder %s14, 0
    %p139 = por %p137, %p138
    %p140 = scmp.ne.s32.totalorder %s132, %s134
    %p141 = scmp.eq.s32.totalorder %s19, 1
    %p142 = por %p140, %p141
    %p143 = scmp.ne.s32.totalorder %s134, %s135
    %p144 = scmp.eq.s32.totalorder %s19, 0
    %p145 = por %p143, %p144
    %p146 = scmp.ne.s32.totalorder %s134, %s135
    %p147 = scmp.eq.s32.totalorder %s20, 1
    %p148 = por %p146, %p147
    %p150 = scmp.ne.s32.totalorder %s135, %s149
    %p151 = scmp.eq.s32.totalorder %s20, 0
    %p152 = por %p150, %p151
    %s154 = sadd.s32 %s153, 1
    %p157 = scmp.eq.s32.totalorder %s14, 1
    %p158 = scmp.ne.s32.totalorder %s153, %s155
    %p159 = scmp.eq.s32.totalorder %s14, 0
    %p160 = por %p158, %p159
    %p161 = scmp.ne.s32.totalorder %s153, %s155
    %p162 = scmp.eq.s32.totalorder %s19, 1
    %p163 = por %p161, %p162
    %p164 = scmp.ne.s32.totalorder %s155, %s156
    %p165 = scmp.eq.s32.totalorder %s19, 0
    %p166 = por %p164, %p165
    %p167 = scmp.ne.s32.totalorder %s155, %s156
    %p168 = scmp.eq.s32.totalorder %s20, 1
    %p169 = por %p167, %p168
    %p171 = scmp.ne.s32.totalorder %s156, %s170
    %p172 = scmp.eq.s32.totalorder %s20, 0
    %p173 = por %p171, %p172
    %s175 = sadd.s32 %s174, 1
    %p178 = scmp.eq.s32.totalorder %s14, 1
    %p179 = scmp.ne.s32.totalorder %s174, %s176
    %p180 = scmp.eq.s32.totalorder %s14, 0
    %p181 = por %p179, %p180
    %p182 = scmp.ne.s32.totalorder %s174, %s176
    %p183 = scmp.eq.s32.totalorder %s19, 1
    %p184 = por %p182, %p183
    %p185 = scmp.ne.s32.totalorder %s176, %s177
    %p186 = scmp.eq.s32.totalorder %s19, 0
    %p187 = por %p185, %p186
    %p188 = scmp.ne.s32.totalorder %s176, %s177
    %p189 = scmp.eq.s32.totalorder %s20, 1
    %p190 = por %p188, %p189
    %p192 = scmp.ne.s32.totalorder %s177, %s191
    %p193 = scmp.eq.s32.totalorder %s20, 0
    %p194 = por %p192, %p193
    %s195 = ssub.s32 %s14, %s21
    %p196 = scmp.eq.s32.totalorder %s195, 0
    %s198 = sadd.s32 %s197, 1
    %s199 = scalar_select %p196, %s197, %s198
    %p202 = pneg %p196
    %p203 = scmp.eq.s32.totalorder %s14, 1
    %p204 = por %p202, %p203
    %p205 = scmp.ne.s32.totalorder %s197, %s200
    %p206 = scmp.eq.s32.totalorder %s14, 0
    %p207 = por %p205, %p206
    %p208 = scmp.ne.s32.totalorder %s197, %s200
    %p209 = scmp.eq.s32.totalorder %s19, 1
    %p210 = por %p208, %p209
    %p211 = scmp.ne.s32.totalorder %s200, %s201
    %p212 = scmp.eq.s32.totalorder %s19, 0
    %p213 = por %p211, %p212
    %p214 = scmp.ne.s32.totalorder %s200, %s201
    %p215 = scmp.eq.s32.totalorder %s20, 1
    %p216 = por %p214, %p215
    %p218 = scmp.ne.s32.totalorder %s201, %s217
    %p219 = scmp.eq.s32.totalorder %s20, 0
    %p220 = por %p218, %p219
    %p221 = scmp.le.s32.totalorder 1, %s14
    %p222 = scmp.lt.s32.totalorder %s14, 3
    %p223 = pnand %p221, %p222
    %p224 = pneg %p223
    // Predicated region
    $region9: #{fusionnet_forward.1} parent=5 // pred_check
      _
    $region10: #{fusionnet_forward.1} parent=5 // pred_check_branch
      %226 = sbr.rel (%p223) target = $region12
    $region11: #{fusionnet_forward.1} parent=5 // pred_region
      %s227 = ssub.s32 %s14, 1
      // Predicated region
      $region13: #{fusionnet_forward.1} parent=11 // pred_check
        %p228 = pneg %p61
      $region14: #{fusionnet_forward.1} parent=11 // pred_check_branch
        %230 = sbr.rel (%p228) target = $region16
      $region15: #{fusionnet_forward.1} parent=11 // pred_region
        _
      $region16: #{fusionnet_forward.1} parent=11 // pred_fallthru
        _
      // Predicated region
      $region17: #{fusionnet_forward.1} parent=11 // pred_check
        %p231 = pneg %p82
      $region18: #{fusionnet_forward.1} parent=11 // pred_check_branch
        %233 = sbr.rel (%p231) target = $region20
      $region19: #{fusionnet_forward.1} parent=11 // pred_region
        _
      $region20: #{fusionnet_forward.1} parent=11 // pred_fallthru
        _
      // Predicated region
      $region21: #{fusionnet_forward.1} parent=11 // pred_check
        %p234 = pneg %p103
      $region22: #{fusionnet_forward.1} parent=11 // pred_check_branch
        %236 = sbr.rel (%p234) target = $region24
      $region23: #{fusionnet_forward.1} parent=11 // pred_region
        _
      $region24: #{fusionnet_forward.1} parent=11 // pred_fallthru
        _
      // Predicated region
      $region25: #{fusionnet_forward.1} parent=11 // pred_check
        %p237 = pneg %p124
      $region26: #{fusionnet_forward.1} parent=11 // pred_check_branch
        %239 = sbr.rel (%p237) target = $region28
      $region27: #{fusionnet_forward.1} parent=11 // pred_region
        _
      $region28: #{fusionnet_forward.1} parent=11 // pred_fallthru
        _
      // Predicated region
      $region29: #{fusionnet_forward.1} parent=11 // pred_check
        %p240 = pneg %p145
      $region30: #{fusionnet_forward.1} parent=11 // pred_check_branch
        %242 = sbr.rel (%p240) target = $region32
      $region31: #{fusionnet_forward.1} parent=11 // pred_region
        _
      $region32: #{fusionnet_forward.1} parent=11 // pred_fallthru
        _
      // Predicated region
      $region33: #{fusionnet_forward.1} parent=11 // pred_check
        %p243 = pneg %p166
      $region34: #{fusionnet_forward.1} parent=11 // pred_check_branch
        %245 = sbr.rel (%p243) target = $region36
      $region35: #{fusionnet_forward.1} parent=11 // pred_region
        _
      $region36: #{fusionnet_forward.1} parent=11 // pred_fallthru
        _
      // Predicated region
      $region37: #{fusionnet_forward.1} parent=11 // pred_check
        %p246 = pneg %p187
      $region38: #{fusionnet_forward.1} parent=11 // pred_check_branch
        %248 = sbr.rel (%p246) target = $region40
      $region39: #{fusionnet_forward.1} parent=11 // pred_region
        _
      $region40: #{fusionnet_forward.1} parent=11 // pred_fallthru
        _
    $region12: #{fusionnet_forward.1} parent=5 // pred_fallthru
      _
    %p249 = scmp.lt.s32.totalorder %s14, 2
    // Predicated region
    $region41: #{fusionnet_forward.1} parent=5 // pred_check
      %p250 = pneg %p249
    $region42: #{fusionnet_forward.1} parent=5 // pred_check_branch
      %252 = sbr.rel (%p250) target = $region44
    $region43: #{fusionnet_forward.1} parent=5 // pred_region
      // Predicated region
      $region45: #{fusionnet_forward.1} parent=43 // pred_check
        %p253 = pneg %p34
      $region46: #{fusionnet_forward.1} parent=43 // pred_check_branch
        %255 = sbr.rel (%p253) target = $region48
      $region47: #{fusionnet_forward.1} parent=43 // pred_region
        %p256 = scmp.lt.s32.totalorder %s14, 1
        %s257 = scalar_select %p256, %s14, 1
        %s258 = smul.addr %s257, 8
        %s259 = smul.addr %s258, 4
        %s260 = scalar_lea.vmem %s0, %s259
      $region48: #{fusionnet_forward.1} parent=43 // pred_fallthru
        _
    $region44: #{fusionnet_forward.1} parent=5 // pred_fallthru
      _
    %p261 = scmp.le.s32.totalorder 1, %s14
    %p262 = scmp.lt.s32.totalorder %s14, 3
    %p263 = pnand %p261, %p262
    %p264 = pneg %p263
    // Predicated region
    $region49: #{fusionnet_forward.1} parent=5 // pred_check
      _
    $region50: #{fusionnet_forward.1} parent=5 // pred_check_branch
      %266 = sbr.rel (%p263) target = $region52
    $region51: #{fusionnet_forward.1} parent=5 // pred_region
      %s267 = ssub.s32 %s14, 1
      %p268 = scmp.lt.s32.totalorder %s19, 1
      %s269 = scalar_select %p268, %s19, 1
      %s270 = smul.addr %s269, 8
      %s271 = smul.addr %s270, 4
      %s272 = scalar_lea.vmem %s0, %s271
      %p273 = pneg %p40
      %p274 = pneg %p37
      %p275 = pneg %p61
      %p276 = pneg %p58
      %p277 = pneg %p82
      %p278 = pneg %p79
      %p279 = pneg %p103
      %p280 = pneg %p100
      %p281 = pneg %p124
      %p282 = pneg %p121
      %p283 = pneg %p145
      %p284 = pneg %p142
      %p285 = pneg %p166
      %p286 = pneg %p163
      %p287 = pneg %p187
      %p288 = pneg %p184
      %p289 = pneg %p213
      %p290 = pneg %p210
      %p291 = scmp.lt.s32.totalorder %s19, 1
      %s292 = scalar_select %p291, %s19, 1
      %s293 = smul.addr %s292, 2
      %s294 = smul.addr %s293, 4
      %s295 = scalar_lea.vmem %s8, %s294
      %p296 = scmp.lt.s32.totalorder %s19, 1
      %s297 = scalar_select %p296, %s19, 1
      %s298 = smul.addr %s297, 8
      %s299 = smul.addr %s298, 4
      %s300 = scalar_lea.vmem %s0, %s299
      %p301 = scmp.lt.s32.totalorder %s19, 1
      %s302 = scalar_select %p301, %s19, 1
      %s303 = smul.addr %s302, 2
      %s304 = smul.addr %s303, 4
      %s305 = scalar_lea.vmem %s8, %s304
      %v307 = vld [vmem:[%s300] sm:$0xff]
      %v308 = vld [vmem:[%s300 + $0x8] sm:$0xff]
      %v309 = vld [vmem:[%s300 + $0x10] sm:$0xff]
      %v310 = vld [vmem:[%s300 + $0x18] sm:$0xff]
      %v315 = vunpack.c.h.b16 %v307
      %v316 = vunpack.c.h.b16 %v308
      %v317 = vunpack.c.h.b16 %v309
      %v318 = vunpack.c.h.b16 %v310
      %v319 = vpack.c.b16 %v316, %v315
      %v320 = vpack.c.b16 %v318, %v317
      %321 = vrot.lane.b32.xlu0 %v319, 17
      %v322 = vpop.permute.xlu0 %321
      %323 = vrot.lane.b32.xlu0 %v320, 17
      %v324 = vpop.permute.xlu0 %323
      %v325 = vunpack.c.l.b16 %v307
      %v326 = vunpack.c.l.b16 %v308
      %v327 = vunpack.c.l.b16 %v309
      %v328 = vunpack.c.l.b16 %v310
      %v329 = vpack.c.b16 %v326, %v325
      %v330 = vpack.c.b16 %v328, %v327
      %331 = vrot.lane.b32.xlu0 %v329, 17
      %v332 = vpop.permute.xlu0 %331
      %333 = vrot.lane.b32.xlu0 %v330, 17
      %v334 = vpop.permute.xlu0 %333
      %vm335 = vcmask 138240
      %v336 = vsel %vm335, %v332, %v322
      %v337 = vsel %vm335, %v334, %v324
      %vm340 = vcmask 138240
      %v343 = vsel %vm340, %v322, %v332
      %v347 = vsel %vm340, %v324, %v334
      %v349 = vld [vmem:[%s1] sm:$0x11]
      %v351 = vunpack.c.l.b16 %v349
      %v352 = vunpack.c.h.b16 %v349
      %v353 = vpack.c.b16 %v351, %v351
      %v354 = vpack.c.b16 %v352, %v352
      %v356 = vpack.i.b16 %v353, %v353
      %v358 = vlaneseq
      %v359 = vshrl.u32 %v358, 7
      %v360 = vsub.s32 0, %v359
      %v361 = vrot.slane %v356, %v360
      %v363 = vpack.i.b16 %v354, %v354
      %v365 = vlaneseq
      %v366 = vshrl.u32 %v365, 7
      %v367 = vsub.s32 0, %v366
      %v368 = vrot.slane %v363, %v367
      %v369 = vmul.bf16 %v343, %v361
      %v370 = vmul.bf16 %v336, %v368
      %v371 = vmul.bf16 %v347, %v361
      %v372 = vmul.bf16 %v337, %v368
      %373 = vst [vmem:[#allocation2] sm:$0xff] %v369
      %374 = vst [vmem:[#allocation2 + $0x8] sm:$0xff] %v370
      %375 = vst [vmem:[#allocation2 + $0x10] sm:$0xff] %v371
      %376 = vst [vmem:[#allocation2 + $0x18] sm:$0xff] %v372
      %377 = vrot.lane.b32.xlu0 %v319, 16
      %v378 = vpop.permute.xlu0 %377
      %379 = vrot.lane.b32.xlu0 %v320, 16
      %v380 = vpop.permute.xlu0 %379
      %381 = vrot.lane.b32.xlu0 %v329, 16
      %v382 = vpop.permute.xlu0 %381
      %383 = vrot.lane.b32.xlu0 %v330, 16
      %v384 = vpop.permute.xlu0 %383
      %vm385 = vcmask 130048
      %v386 = vsel %vm385, %v382, %v378
      %v387 = vsel %vm385, %v384, %v380
      %vm390 = vcmask 130048
      %v393 = vsel %vm390, %v378, %v382
      %v397 = vsel %vm390, %v380, %v384
      %v399 = vld [vmem:[%s1] sm:$0x11]
      %v401 = vunpack.c.l.b16 %v399
      %v402 = vunpack.c.h.b16 %v399
      %v403 = vpack.c.b16 %v401, %v401
      %v404 = vpack.c.b16 %v402, %v402
      %v406 = vshrl.u32 %v403, 16
      %v407 = vpack.i.b16 %v406, %v406
      %v409 = vlaneseq
      %v410 = vshrl.u32 %v409, 7
      %v411 = vsub.s32 0, %v410
      %v412 = vrot.slane %v407, %v411
      %v414 = vshrl.u32 %v404, 16
      %v415 = vpack.i.b16 %v414, %v414
      %v417 = vlaneseq
      %v418 = vshrl.u32 %v417, 7
      %v419 = vsub.s32 0, %v418
      %v420 = vrot.slane %v415, %v419
      %v421 = vmul.bf16 %v393, %v412
      %v422 = vmul.bf16 %v386, %v420
      %v423 = vmul.bf16 %v397, %v412
      %v424 = vmul.bf16 %v387, %v420
      %425 = vst [vmem:[#allocation2 + $0x20] sm:$0xff] %v421
      %426 = vst [vmem:[#allocation2 + $0x28] sm:$0xff] %v422
      %427 = vst [vmem:[#allocation2 + $0x30] sm:$0xff] %v423
      %428 = vst [vmem:[#allocation2 + $0x38] sm:$0xff] %v424
      %429 = vrot.lane.b32.xlu0 %v319, 15
      %v430 = vpop.permute.xlu0 %429
      %431 = vrot.lane.b32.xlu0 %v320, 15
      %v432 = vpop.permute.xlu0 %431
      %433 = vrot.lane.b32.xlu0 %v329, 15
      %v434 = vpop.permute.xlu0 %433
      %435 = vrot.lane.b32.xlu0 %v330, 15
      %v436 = vpop.permute.xlu0 %435
      %vm437 = vcmask 121856
      %v438 = vsel %vm437, %v434, %v430
      %v439 = vsel %vm437, %v436, %v432
      %vm442 = vcmask 121856
      %v445 = vsel %vm442, %v430, %v434
      %v449 = vsel %vm442, %v432, %v436
      %v451 = vld [vmem:[%s1] sm:$0x22]
      %v453 = vunpack.c.l.b16 %v451
      %v454 = vunpack.c.h.b16 %v451
      %v455 = vpack.c.b16 %v453, %v453
      %v456 = vpack.c.b16 %v454, %v454
      %v458 = vpack.i.b16 %v455, %v455
      %v460 = vlaneseq
      %v461 = vshrl.u32 %v460, 7
      %v462 = vsub.s32 1, %v461
      %v463 = vrot.slane %v458, %v462
      %v465 = vpack.i.b16 %v456, %v456
      %v467 = vlaneseq
      %v468 = vshrl.u32 %v467, 7
      %v469 = vsub.s32 1, %v468
      %v470 = vrot.slane %v465, %v469
      %v471 = vmul.bf16 %v445, %v463
      %v472 = vmul.bf16 %v438, %v470
      %v473 = vmul.bf16 %v449, %v463
      %v474 = vmul.bf16 %v439, %v470
      %475 = vst [vmem:[#allocation2 + $0x40] sm:$0xff] %v471
      %476 = vst [vmem:[#allocation2 + $0x48] sm:$0xff] %v472
      %477 = vst [vmem:[#allocation2 + $0x50] sm:$0xff] %v473
      %478 = vst [vmem:[#allocation2 + $0x58] sm:$0xff] %v474
      %479 = vrot.lane.b32.xlu0 %v319, 1
      %v480 = vpop.permute.xlu0 %479
      %481 = vrot.lane.b32.xlu0 %v320, 1
      %v482 = vpop.permute.xlu0 %481
      %483 = vrot.lane.b32.xlu0 %v329, 1
      %v484 = vpop.permute.xlu0 %483
      %485 = vrot.lane.b32.xlu0 %v330, 1
      %v486 = vpop.permute.xlu0 %485
      %vm487 = vcmask 7168
      %v488 = vsel %vm487, %v484, %v480
      %v489 = vsel %vm487, %v486, %v482
      %vm492 = vcmask 7168
      %v495 = vsel %vm492, %v480, %v484
      %v499 = vsel %vm492, %v482, %v486
      %v501 = vld [vmem:[%s1] sm:$0x22]
      %v503 = vunpack.c.l.b16 %v501
      %v504 = vunpack.c.h.b16 %v501
      %v505 = vpack.c.b16 %v503, %v503
      %v506 = vpack.c.b16 %v504, %v504
      %v508 = vshrl.u32 %v505, 16
      %v509 = vpack.i.b16 %v508, %v508
      %v511 = vlaneseq
      %v512 = vshrl.u32 %v511, 7
      %v513 = vsub.s32 1, %v512
      %v514 = vrot.slane %v509, %v513
      %v516 = vshrl.u32 %v506, 16
      %v517 = vpack.i.b16 %v516, %v516
      %v519 = vlaneseq
      %v520 = vshrl.u32 %v519, 7
      %v521 = vsub.s32 1, %v520
      %v522 = vrot.slane %v517, %v521
      %v523 = vmul.bf16 %v495, %v514
      %v524 = vmul.bf16 %v488, %v522
      %v525 = vmul.bf16 %v499, %v514
      %v526 = vmul.bf16 %v489, %v522
      %527 = vst [vmem:[#allocation2 + $0x60] sm:$0xff] %v523
      %528 = vst [vmem:[#allocation2 + $0x68] sm:$0xff] %v524
      %529 = vst [vmem:[#allocation2 + $0x70] sm:$0xff] %v525
      %530 = vst [vmem:[#allocation2 + $0x78] sm:$0xff] %v526
      %535 = vst [vmem:[#allocation2 + $0x80] sm:$0xff] %v329
      %536 = vst [vmem:[#allocation2 + $0x88] sm:$0xff] %v319
      %537 = vst [vmem:[#allocation2 + $0x90] sm:$0xff] %v330
      %538 = vst [vmem:[#allocation2 + $0x98] sm:$0xff] %v320
      %539 = vrot.lane.b32.xlu0 %v329, 127
      %v540 = vpop.permute.xlu0 %539
      %541 = vrot.lane.b32.xlu0 %v319, 127
      %v542 = vpop.permute.xlu0 %541
      %543 = vrot.lane.b32.xlu0 %v330, 127
      %v544 = vpop.permute.xlu0 %543
      %545 = vrot.lane.b32.xlu0 %v320, 127
      %v546 = vpop.permute.xlu0 %545
      %vm547 = vcmask 1039360
      %v548 = vsel %vm547, %v540, %v542
      %v549 = vsel %vm547, %v544, %v546
      %vm552 = vcmask 1039360
      %v555 = vsel %vm552, %v542, %v540
      %v559 = vsel %vm552, %v546, %v544
      %v561 = vld [vmem:[%s1] sm:$0x44]
      %v563 = vunpack.c.l.b16 %v561
      %v564 = vunpack.c.h.b16 %v561
      %v565 = vpack.c.b16 %v563, %v563
      %v566 = vpack.c.b16 %v564, %v564
      %v568 = vshrl.u32 %v565, 16
      %v569 = vpack.i.b16 %v568, %v568
      %v571 = vlaneseq
      %v572 = vshrl.u32 %v571, 7
      %v573 = vsub.s32 2, %v572
      %v574 = vrot.slane %v569, %v573
      %v576 = vshrl.u32 %v566, 16
      %v577 = vpack.i.b16 %v576, %v576
      %v579 = vlaneseq
      %v580 = vshrl.u32 %v579, 7
      %v581 = vsub.s32 2, %v580
      %v582 = vrot.slane %v577, %v581
      %v583 = vmul.bf16 %v548, %v574
      %v584 = vmul.bf16 %v555, %v582
      %v585 = vmul.bf16 %v549, %v574
      %v586 = vmul.bf16 %v559, %v582
      %587 = vst [vmem:[#allocation2 + $0xa0] sm:$0xff] %v583
      %588 = vst [vmem:[#allocation2 + $0xa8] sm:$0xff] %v584
      %589 = vst [vmem:[#allocation2 + $0xb0] sm:$0xff] %v585
      %590 = vst [vmem:[#allocation2 + $0xb8] sm:$0xff] %v586
      %591 = vrot.lane.b32.xlu0 %v329, 113
      %v592 = vpop.permute.xlu0 %591
      %593 = vrot.lane.b32.xlu0 %v319, 113
      %v594 = vpop.permute.xlu0 %593
      %595 = vrot.lane.b32.xlu0 %v330, 113
      %v596 = vpop.permute.xlu0 %595
      %597 = vrot.lane.b32.xlu0 %v320, 113
      %v598 = vpop.permute.xlu0 %597
      %vm599 = vcmask 924672
      %v600 = vsel %vm599, %v592, %v594
      %v601 = vsel %vm599, %v596, %v598
      %vm604 = vcmask 924672
      %v607 = vsel %vm604, %v594, %v592
      %v611 = vsel %vm604, %v598, %v596
      %v613 = vld [vmem:[%s1] sm:$0x88]
      %v615 = vunpack.c.l.b16 %v613
      %v616 = vunpack.c.h.b16 %v613
      %v617 = vpack.c.b16 %v615, %v615
      %v618 = vpack.c.b16 %v616, %v616
      %v620 = vpack.i.b16 %v617, %v617
      %v622 = vlaneseq
      %v623 = vshrl.u32 %v622, 7
      %v624 = vsub.s32 3, %v623
      %v625 = vrot.slane %v620, %v624
      %v627 = vpack.i.b16 %v618, %v618
      %v629 = vlaneseq
      %v630 = vshrl.u32 %v629, 7
      %v631 = vsub.s32 3, %v630
      %v632 = vrot.slane %v627, %v631
      %v633 = vmul.bf16 %v600, %v625
      %v634 = vmul.bf16 %v607, %v632
      %v635 = vmul.bf16 %v601, %v625
      %v636 = vmul.bf16 %v611, %v632
      %637 = vst [vmem:[#allocation2 + $0xc0] sm:$0xff] %v633
      %638 = vst [vmem:[#allocation2 + $0xc8] sm:$0xff] %v634
      %639 = vst [vmem:[#allocation2 + $0xd0] sm:$0xff] %v635
      %640 = vst [vmem:[#allocation2 + $0xd8] sm:$0xff] %v636
      %641 = vrot.lane.b32.xlu0 %v329, 112
      %v642 = vpop.permute.xlu0 %641
      %643 = vrot.lane.b32.xlu0 %v319, 112
      %v644 = vpop.permute.xlu0 %643
      %645 = vrot.lane.b32.xlu0 %v330, 112
      %v646 = vpop.permute.xlu0 %645
      %647 = vrot.lane.b32.xlu0 %v320, 112
      %v648 = vpop.permute.xlu0 %647
      %vm649 = vcmask 916480
      %v650 = vsel %vm649, %v642, %v644
      %v651 = vsel %vm649, %v646, %v648
      %vm654 = vcmask 916480
      %v657 = vsel %vm654, %v644, %v642
      %v661 = vsel %vm654, %v648, %v646
      %v663 = vld [vmem:[%s1] sm:$0x88]
      %v665 = vunpack.c.l.b16 %v663
      %v666 = vunpack.c.h.b16 %v663
      %v667 = vpack.c.b16 %v665, %v665
      %v668 = vpack.c.b16 %v666, %v666
      %v670 = vshrl.u32 %v667, 16
      %v671 = vpack.i.b16 %v670, %v670
      %v673 = vlaneseq
      %v674 = vshrl.u32 %v673, 7
      %v675 = vsub.s32 3, %v674
      %v676 = vrot.slane %v671, %v675
      %v678 = vshrl.u32 %v668, 16
      %v679 = vpack.i.b16 %v678, %v678
      %v681 = vlaneseq
      %v682 = vshrl.u32 %v681, 7
      %v683 = vsub.s32 3, %v682
      %v684 = vrot.slane %v679, %v683
      %v685 = vmul.bf16 %v650, %v676
      %v686 = vmul.bf16 %v657, %v684
      %v687 = vmul.bf16 %v651, %v676
      %v688 = vmul.bf16 %v661, %v684
      %689 = vst [vmem:[#allocation2 + $0xe0] sm:$0xff] %v685
      %690 = vst [vmem:[#allocation2 + $0xe8] sm:$0xff] %v686
      %691 = vst [vmem:[#allocation2 + $0xf0] sm:$0xff] %v687
      %692 = vst [vmem:[#allocation2 + $0xf8] sm:$0xff] %v688
      %693 = vrot.lane.b32.xlu0 %v329, 111
      %v694 = vpop.permute.xlu0 %693
      %695 = vrot.lane.b32.xlu0 %v319, 111
      %v696 = vpop.permute.xlu0 %695
      %697 = vrot.lane.b32.xlu0 %v330, 111
      %v698 = vpop.permute.xlu0 %697
      %699 = vrot.lane.b32.xlu0 %v320, 111
      %v700 = vpop.permute.xlu0 %699
      %vm701 = vcmask 908288
      %v702 = vsel %vm701, %v694, %v696
      %v703 = vsel %vm701, %v698, %v700
      %vm706 = vcmask 908288
      %v709 = vsel %vm706, %v696, %v694
      %v713 = vsel %vm706, %v700, %v698
      %v715 = vld [vmem:[%s1 + $0x8] sm:$0x11]
      %v717 = vunpack.c.l.b16 %v715
      %v718 = vunpack.c.h.b16 %v715
      %v719 = vpack.c.b16 %v717, %v717
      %v720 = vpack.c.b16 %v718, %v718
      %v722 = vpack.i.b16 %v719, %v719
      %v724 = vlaneseq
      %v725 = vshrl.u32 %v724, 7
      %v726 = vsub.s32 0, %v725
      %v727 = vrot.slane %v722, %v726
      %v729 = vpack.i.b16 %v720, %v720
      %v731 = vlaneseq
      %v732 = vshrl.u32 %v731, 7
      %v733 = vsub.s32 0, %v732
      %v734 = vrot.slane %v729, %v733
      %v735 = vmul.bf16 %v702, %v727
      %v736 = vmul.bf16 %v709, %v734
      %v737 = vmul.bf16 %v703, %v727
      %v738 = vmul.bf16 %v713, %v734
      %739 = vst [vmem:[#allocation2 + $0x100] sm:$0xff] %v735
      %740 = vst [vmem:[#allocation2 + $0x108] sm:$0xff] %v736
      %741 = vst [vmem:[#allocation2 + $0x110] sm:$0xff] %v737
      %742 = vst [vmem:[#allocation2 + $0x118] sm:$0xff] %v738
      %v743 = vld [vmem:[%s2] sm:$0xff]
      %v744 = vld [vmem:[%s2 + $0x8] sm:$0xf]
      %v745 = vld [vmem:[%s2 + $0xc] sm:$0xff]
      %v746 = vld [vmem:[%s2 + $0x14] sm:$0xf]
      %v747 = vld [vmem:[%s2 + $0x18] sm:$0xff]
      %v748 = vld [vmem:[%s2 + $0x20] sm:$0xf]
      %v749 = vld [vmem:[%s2 + $0x24] sm:$0xff]
      %v750 = vld [vmem:[%s2 + $0x2c] sm:$0xf]
      %v751 = vld [vmem:[%s3] sm:$0xff]
      %v752 = vld [vmem:[%s3 + $0x8] sm:$0xff]
      %v753 = vld [vmem:[%s3 + $0x10] sm:$0xff]
      %v754 = vld [vmem:[%s3 + $0x18] sm:$0xff]
      %v755 = vld [vmem:[#allocation2] sm:$0xff]
      %v756 = vld [vmem:[#allocation2 + $0x8] sm:$0xff]
      %v757 = vld [vmem:[#allocation2 + $0x10] sm:$0xff]
      %v758 = vld [vmem:[#allocation2 + $0x18] sm:$0xff]
      %v759 = vld [vmem:[#allocation2 + $0x20] sm:$0xff]
      %v760 = vld [vmem:[#allocation2 + $0x28] sm:$0xff]
      %v761 = vld [vmem:[#allocation2 + $0x30] sm:$0xff]
      %v762 = vld [vmem:[#allocation2 + $0x38] sm:$0xff]
      %v763 = vld [vmem:[#allocation2 + $0x40] sm:$0xff]
      %v764 = vld [vmem:[#allocation2 + $0x48] sm:$0xff]
      %v765 = vld [vmem:[#allocation2 + $0x50] sm:$0xff]
      %v766 = vld [vmem:[#allocation2 + $0x58] sm:$0xff]
      %v767 = vld [vmem:[#allocation2 + $0x60] sm:$0xff]
      %v768 = vld [vmem:[#allocation2 + $0x68] sm:$0xff]
      %v769 = vld [vmem:[#allocation2 + $0x70] sm:$0xff]
      %v770 = vld [vmem:[#allocation2 + $0x78] sm:$0xff]
      %v771 = vld [vmem:[#allocation2 + $0x80] sm:$0xff]
      %v772 = vld [vmem:[#allocation2 + $0x88] sm:$0xff]
      %v773 = vld [vmem:[#allocation2 + $0x90] sm:$0xff]
      %v774 = vld [vmem:[#allocation2 + $0x98] sm:$0xff]
      %v775 = vld [vmem:[#allocation2 + $0xa0] sm:$0xff]
      %v776 = vld [vmem:[#allocation2 + $0xa8] sm:$0xff]
      %v777 = vld [vmem:[#allocation2 + $0xb0] sm:$0xff]
      %v778 = vld [vmem:[#allocation2 + $0xb8] sm:$0xff]
      %v779 = vld [vmem:[#allocation2 + $0xc0] sm:$0xff]
      %v780 = vld [vmem:[#allocation2 + $0xc8] sm:$0xff]
      %v781 = vld [vmem:[#allocation2 + $0xd0] sm:$0xff]
      %v782 = vld [vmem:[#allocation2 + $0xd8] sm:$0xff]
      %v783 = vld [vmem:[#allocation2 + $0xe0] sm:$0xff]
      %v784 = vld [vmem:[#allocation2 + $0xe8] sm:$0xff]
      %v785 = vld [vmem:[#allocation2 + $0xf0] sm:$0xff]
      %v786 = vld [vmem:[#allocation2 + $0xf8] sm:$0xff]
      %v787 = vld [vmem:[#allocation2 + $0x100] sm:$0xff]
      %v788 = vld [vmem:[#allocation2 + $0x108] sm:$0xff]
      %v789 = vld [vmem:[#allocation2 + $0x110] sm:$0xff]
      %v790 = vld [vmem:[#allocation2 + $0x118] sm:$0xff]
      %792 = vset.pattern.permute.xlu0 0
      %793 = vperm.xlu0 %792, %v751
      %v794 = vpop.permute.xlu0 %793
      %797 = vset.pattern.permute.xlu0 0
      %798 = vperm.xlu0 %797, %v752
      %v799 = vpop.permute.xlu0 %798
      %802 = vset.pattern.permute.xlu0 0
      %803 = vperm.xlu0 %802, %v753
      %v804 = vpop.permute.xlu0 %803
      %807 = vset.pattern.permute.xlu0 0
      %808 = vperm.xlu0 %807, %v754
      %v809 = vpop.permute.xlu0 %808
      %v819 = vunpack.c.l.b16 %v743
      %v820 = vunpack.c.h.b16 %v743
      %v821 = vunpack.c.l.b16 %v744
      %v822 = vunpack.c.l.b16 %v745
      %v823 = vunpack.c.h.b16 %v745
      %v824 = vunpack.c.l.b16 %v746
      %v825 = vunpack.c.l.b16 %v747
      %v826 = vunpack.c.h.b16 %v747
      %v827 = vunpack.c.l.b16 %v748
      %v828 = vunpack.c.l.b16 %v749
      %v829 = vunpack.c.h.b16 %v749
      %v830 = vunpack.c.l.b16 %v750
      %v831 = vpack.c.b16 %v822, %v819
      %v832 = vpack.c.b16 %v823, %v820
      %v833 = vpack.c.b16 %v824, %v821
      %v834 = vpack.c.b16 %v828, %v825
      %v835 = vpack.c.b16 %v829, %v826
      %v836 = vpack.c.b16 %v830, %v827
      %vm841 = vcmask 261120
      %v843 = vsel %vm841, %v833, 0
      %v846 = vsel %vm841, %v836, 0
      %848 = vmatprep.subr.bf16.mxu0 %v756
      %849 = vmatpush1.bf16.msra.mxu0 %v755
      %850 = vmatprep.subr.bf16.mxu0 %v758
      %851 = vmatpush1.bf16.msra.mxu0 %v757
      %852 = vmatprep.subr.bf16.mxu0 %v760
      %853 = vmatpush1.bf16.msra.mxu0 %v759
      %854 = vmatprep.subr.bf16.mxu0 %v762
      %855 = vmatpush1.bf16.msra.mxu0 %v761
      %856 = vmatprep.subr.bf16.mxu0 %v764
      %857 = vmatpush1.bf16.msra.mxu0 %v763
      %858 = vmatprep.subr.bf16.mxu0 %v766
      %859 = vmatpush1.bf16.msra.mxu0 %v765
      %860 = vmatprep.subr.bf16.mxu0 %v768
      %861 = vmatpush1.bf16.msra.mxu0 %v767
      %862 = vmatprep.subr.bf16.mxu0 %v770
      %863 = vmatpush1.bf16.msra.mxu0 %v769
      %864 = vmatprep.subr.bf16.mxu0 %v772
      %865 = vmatpush1.bf16.msra.mxu0 %v771
      %866 = vmatprep.subr.bf16.mxu0 %v774
      %867 = vmatpush1.bf16.msra.mxu0 %v773
      %868 = vmatprep.subr.bf16.mxu0 %v776
      %869 = vmatpush1.bf16.msra.mxu0 %v775
      %870 = vmatprep.subr.bf16.mxu0 %v778
      %871 = vmatpush1.bf16.msra.mxu0 %v777
      %872 = vmatprep.subr.bf16.mxu0 %v780
      %873 = vmatpush1.bf16.msra.mxu0 %v779
      %874 = vmatprep.subr.bf16.mxu0 %v782
      %875 = vmatpush1.bf16.msra.mxu0 %v781
      %876 = vmatprep.subr.bf16.mxu0 %v784
      %877 = vmatpush1.bf16.msra.mxu0 %v783
      %878 = vmatprep.subr.bf16.mxu0 %v786
      %879 = vmatpush1.bf16.msra.mxu0 %v785
      %880 = vmatprep.mubr.bf16.mxu0 %v832
      %881 = vmatmul.mubr.bf16.gmra.mrb[0].mxu0 %v831
      %v882 = vpop.f32.mrb[0].mxu0
      %v883 = vadd.f32 %v794, %v882
      %v884 = vpop.f32.mrb[0].mxu0
      %v885 = vadd.f32 %v794, %v884
      %v886 = vpop.f32.mrb[0].mxu0
      %v887 = vadd.f32 %v799, %v886
      %v888 = vpop.f32.mrb[0].mxu0
      %v889 = vadd.f32 %v799, %v888
      %890 = vmatprep.mubr.bf16.mxu0 %v835
      %891 = vmatmul.mubr.bf16.gmra.mrb[0].mxu0 %v834
      %v892 = vpop.f32.mrb[0].mxu0
      %v893 = vadd.f32 %v804, %v892
      %v894 = vpop.f32.mrb[0].mxu0
      %v895 = vadd.f32 %v804, %v894
      %v896 = vpop.f32.mrb[0].mxu0
      %v897 = vadd.f32 %v809, %v896
      %v898 = vpop.f32.mrb[0].mxu0
      %v899 = vadd.f32 %v809, %v898
      %900 = vdwg.mxu0
      %901 = vmatprep.subr.bf16.mxu0 %v788
      %902 = vmatpush1.bf16.msra.mxu0 %v787
      %903 = vmatprep.subr.bf16.mxu0 %v790
      %904 = vmatpush1.bf16.msra.mxu0 %v789
      %905 = vmatprep.subr.bf16.mxu0 0
      %906 = vmatpush1.bf16.msra.mxu0 0
      %907 = vmatprep.subr.bf16.mxu0 0
      %908 = vmatpush1.bf16.msra.mxu0 0
      %909 = vmatprep.subr.bf16.mxu0 0
      %910 = vmatpush1.bf16.msra.mxu0 0
      %911 = vmatprep.subr.bf16.mxu0 0
      %912 = vmatpush1.bf16.msra.mxu0 0
      %913 = vmatprep.subr.bf16.mxu0 0
      %914 = vmatpush1.bf16.msra.mxu0 0
      %915 = vmatprep.subr.bf16.mxu0 0
      %916 = vmatpush1.bf16.msra.mxu0 0
      %917 = vmatprep.subr.bf16.mxu0 0
      %918 = vmatpush1.bf16.msra.mxu0 0
      %919 = vmatprep.subr.bf16.mxu0 0
      %920 = vmatpush1.bf16.msra.mxu0 0
      %921 = vmatprep.subr.bf16.mxu0 0
      %922 = vmatpush1.bf16.msra.mxu0 0
      %923 = vmatprep.subr.bf16.mxu0 0
      %924 = vmatpush1.bf16.msra.mxu0 0
      %925 = vmatprep.subr.bf16.mxu0 0
      %926 = vmatpush1.bf16.msra.mxu0 0
      %927 = vmatprep.subr.bf16.mxu0 0
      %928 = vmatpush1.bf16.msra.mxu0 0
      %929 = vmatprep.subr.bf16.mxu0 0
      %930 = vmatpush1.bf16.msra.mxu0 0
      %931 = vmatprep.subr.bf16.mxu0 0
      %932 = vmatpush1.bf16.msra.mxu0 0
      %933 = vmatprep.mubr.bf16.mxu0 0
      %934 = vmatmul.mubr.bf16.gmra.mrb[0].mxu0 %v843
      %v935 = vpop.f32.mrb[0].mxu0
      %v936 = vadd.f32 %v883, %v935
      %v937 = vpop.f32.mrb[0].mxu0
      %v938 = vadd.f32 %v885, %v937
      %v939 = vpop.f32.mrb[0].mxu0
      %v940 = vadd.f32 %v887, %v939
      %v941 = vpop.f32.mrb[0].mxu0
      %v942 = vadd.f32 %v889, %v941
      %943 = vmatprep.mubr.bf16.mxu0 0
      %944 = vmatmul.mubr.bf16.gmra.mrb[0].mxu0 %v846
      %v945 = vpop.f32.mrb[0].mxu0
      %v946 = vadd.f32 %v893, %v945
      %v947 = vpop.f32.mrb[0].mxu0
      %v948 = vadd.f32 %v895, %v947
      %v949 = vpop.f32.mrb[0].mxu0
      %v950 = vadd.f32 %v897, %v949
      %v951 = vpop.f32.mrb[0].mxu0
      %v952 = vadd.f32 %v899, %v951
      %953 = vdwg.mxu0
      %v954 = vmax.f32 %v936, 0.0
      %v955 = vmax.f32 %v938, 0.0
      %v956 = vmax.f32 %v940, 0.0
      %v957 = vmax.f32 %v942, 0.0
      %v958 = vmax.f32 %v946, 0.0
      %v959 = vmax.f32 %v948, 0.0
      %v960 = vmax.f32 %v950, 0.0
      %v961 = vmax.f32 %v952, 0.0
      %962 = vst [vmem:[#allocation4] sm:$0xff] %v954
      %963 = vst [vmem:[#allocation4 + $0x8] sm:$0xff] %v955
      %964 = vst [vmem:[#allocation4 + $0x10] sm:$0xff] %v956
      %965 = vst [vmem:[#allocation4 + $0x18] sm:$0xff] %v957
      %966 = vst [vmem:[#allocation4 + $0x20] sm:$0xff] %v958
      %967 = vst [vmem:[#allocation4 + $0x28] sm:$0xff] %v959
      %968 = vst [vmem:[#allocation4 + $0x30] sm:$0xff] %v960
      %969 = vst [vmem:[#allocation4 + $0x38] sm:$0xff] %v961
      %v970 = vpack.c.bf16 %v956, %v954
      %v971 = vpack.c.bf16 %v957, %v955
      %v972 = vpack.c.bf16 %v960, %v958
      %v973 = vpack.c.bf16 %v961, %v959
      %974 = vst [vmem:[#allocation3] sm:$0xff] %v970
      %975 = vst [vmem:[#allocation3 + $0x8] sm:$0xff] %v971
      %976 = vst [vmem:[#allocation3 + $0x10] sm:$0xff] %v972
      %977 = vst [vmem:[#allocation3 + $0x18] sm:$0xff] %v973
      loop: start=0, step=1, limit=4
      $region53: #{fusionnet_forward.1} parent=51 // loop_pre_header
        _
      $region54: #{fusionnet_forward.1} parent=51 // loop_header
        %s979 = sphi 0, %s983
        %p980 = scmp.ge.s32.totalorder %s979, 4
      $region55: #{fusionnet_forward.1} parent=51 // loop_header_branch
        %982 = sbr.rel (%p980) target = $region59
      $region56: #{fusionnet_forward.1} parent=51 // loop_body
        %v984 = vld [vmem:[#allocation3] sm:$0xff]
        %v985 = vld [vmem:[#allocation3 + $0x8] sm:$0xff]
        %v986 = vld [vmem:[#allocation3 + $0x10] sm:$0xff]
        %v987 = vld [vmem:[#allocation3 + $0x18] sm:$0xff]
        %990 = vrot.lane.b32.xlu0 %v985, 17
        %v991 = vpop.permute.xlu0 %990
        %992 = vrot.lane.b32.xlu0 %v987, 17
        %v993 = vpop.permute.xlu0 %992
        %996 = vrot.lane.b32.xlu0 %v984, 17
        %v997 = vpop.permute.xlu0 %996
        %998 = vrot.lane.b32.xlu0 %v986, 17
        %v999 = vpop.permute.xlu0 %998
        %v1000 = vsel %vm335, %v997, %v991
        %v1001 = vsel %vm335, %v999, %v993
        %v1006 = vsel %vm340, %v991, %v997
        %v1010 = vsel %vm340, %v993, %v999
        %v1012 = vld [vmem:[%s1] sm:$0x11]
        %v1014 = vunpack.c.l.b16 %v1012
        %v1015 = vunpack.c.h.b16 %v1012
        %v1016 = vpack.c.b16 %v1014, %v1014
        %v1017 = vpack.c.b16 %v1015, %v1015
        %v1019 = vpack.i.b16 %v1016, %v1016
        %v1021 = vlaneseq
        %v1022 = vshrl.u32 %v1021, 7
        %v1023 = vsub.s32 0, %v1022
        %v1024 = vrot.slane %v1019, %v1023
        %v1026 = vpack.i.b16 %v1017, %v1017
        %v1028 = vlaneseq
        %v1029 = vshrl.u32 %v1028, 7
        %v1030 = vsub.s32 0, %v1029
        %v1031 = vrot.slane %v1026, %v1030
        %v1032 = vmul.bf16 %v1006, %v1024
        %v1033 = vmul.bf16 %v1000, %v1031
        %v1034 = vmul.bf16 %v1010, %v1024
        %v1035 = vmul.bf16 %v1001, %v1031
        %1036 = vst [vmem:[#allocation2] sm:$0xff] %v1032
        %1037 = vst [vmem:[#allocation2 + $0x8] sm:$0xff] %v1033
        %1038 = vst [vmem:[#allocation2 + $0x10] sm:$0xff] %v1034
        %1039 = vst [vmem:[#allocation2 + $0x18] sm:$0xff] %v1035
        %1040 = vrot.lane.b32.xlu0 %v985, 16
        %v1041 = vpop.permute.xlu0 %1040
        %1042 = vrot.lane.b32.xlu0 %v987, 16
        %v1043 = vpop.permute.xlu0 %1042
        %1044 = vrot.lane.b32.xlu0 %v984, 16
        %v1045 = vpop.permute.xlu0 %1044
        %1046 = vrot.lane.b32.xlu0 %v986, 16
        %v1047 = vpop.permute.xlu0 %1046
        %v1048 = vsel %vm385, %v1045, %v1041
        %v1049 = vsel %vm385, %v1047, %v1043
        %v1054 = vsel %vm390, %v1041, %v1045
        %v1058 = vsel %vm390, %v1043, %v1047
        %v1060 = vld [vmem:[%s1] sm:$0x11]
        %v1062 = vunpack.c.l.b16 %v1060
        %v1063 = vunpack.c.h.b16 %v1060
        %v1064 = vpack.c.b16 %v1062, %v1062
        %v1065 = vpack.c.b16 %v1063, %v1063
        %v1067 = vshrl.u32 %v1064, 16
        %v1068 = vpack.i.b16 %v1067, %v1067
        %v1070 = vlaneseq
        %v1071 = vshrl.u32 %v1070, 7
        %v1072 = vsub.s32 0, %v1071
        %v1073 = vrot.slane %v1068, %v1072
        %v1075 = vshrl.u32 %v1065, 16
        %v1076 = vpack.i.b16 %v1075, %v1075
        %v1078 = vlaneseq
        %v1079 = vshrl.u32 %v1078, 7
        %v1080 = vsub.s32 0, %v1079
        %v1081 = vrot.slane %v1076, %v1080
        %v1082 = vmul.bf16 %v1054, %v1073
        %v1083 = vmul.bf16 %v1048, %v1081
        %v1084 = vmul.bf16 %v1058, %v1073
        %v1085 = vmul.bf16 %v1049, %v1081
        %1086 = vst [vmem:[#allocation2 + $0x20] sm:$0xff] %v1082
        %1087 = vst [vmem:[#allocation2 + $0x28] sm:$0xff] %v1083
        %1088 = vst [vmem:[#allocation2 + $0x30] sm:$0xff] %v1084
        %1089 = vst [vmem:[#allocation2 + $0x38] sm:$0xff] %v1085
        %1090 = vrot.lane.b32.xlu0 %v985, 15
        %v1091 = vpop.permute.xlu0 %1090
        %1092 = vrot.lane.b32.xlu0 %v987, 15
        %v1093 = vpop.permute.xlu0 %1092
        %1094 = vrot.lane.b32.xlu0 %v984, 15
        %v1095 = vpop.permute.xlu0 %1094
        %1096 = vrot.lane.b32.xlu0 %v986, 15
        %v1097 = vpop.permute.xlu0 %1096
        %v1098 = vsel %vm437, %v1095, %v1091
        %v1099 = vsel %vm437, %v1097, %v1093
        %v1104 = vsel %vm442, %v1091, %v1095
        %v1108 = vsel %vm442, %v1093, %v1097
        %v1110 = vld [vmem:[%s1] sm:$0x22]
        %v1112 = vunpack.c.l.b16 %v1110
        %v1113 = vunpack.c.h.b16 %v1110
        %v1114 = vpack.c.b16 %v1112, %v1112
        %v1115 = vpack.c.b16 %v1113, %v1113
        %v1117 = vpack.i.b16 %v1114, %v1114
        %v1119 = vlaneseq
        %v1120 = vshrl.u32 %v1119, 7
        %v1121 = vsub.s32 1, %v1120
        %v1122 = vrot.slane %v1117, %v1121
        %v1124 = vpack.i.b16 %v1115, %v1115
        %v1126 = vlaneseq
        %v1127 = vshrl.u32 %v1126, 7
        %v1128 = vsub.s32 1, %v1127
        %v1129 = vrot.slane %v1124, %v1128
        %v1130 = vmul.bf16 %v1104, %v1122
        %v1131 = vmul.bf16 %v1098, %v1129
        %v1132 = vmul.bf16 %v1108, %v1122
        %v1133 = vmul.bf16 %v1099, %v1129
        %1134 = vst [vmem:[#allocation2 + $0x40] sm:$0xff] %v1130
        %1135 = vst [vmem:[#allocation2 + $0x48] sm:$0xff] %v1131
        %1136 = vst [vmem:[#allocation2 + $0x50] sm:$0xff] %v1132
        %1137 = vst [vmem:[#allocation2 + $0x58] sm:$0xff] %v1133
        %1138 = vrot.lane.b32.xlu0 %v985, 1
        %v1139 = vpop.permute.xlu0 %1138
        %1140 = vrot.lane.b32.xlu0 %v987, 1
        %v1141 = vpop.permute.xlu0 %1140
        %1142 = vrot.lane.b32.xlu0 %v984, 1
        %v1143 = vpop.permute.xlu0 %1142
        %1144 = vrot.lane.b32.xlu0 %v986, 1
        %v1145 = vpop.permute.xlu0 %1144
        %v1146 = vsel %vm487, %v1143, %v1139
        %v1147 = vsel %vm487, %v1145, %v1141
        %v1152 = vsel %vm492, %v1139, %v1143
        %v1156 = vsel %vm492, %v1141, %v1145
        %v1158 = vld [vmem:[%s1] sm:$0x22]
        %v1160 = vunpack.c.l.b16 %v1158
        %v1161 = vunpack.c.h.b16 %v1158
        %v1162 = vpack.c.b16 %v1160, %v1160
        %v1163 = vpack.c.b16 %v1161, %v1161
        %v1165 = vshrl.u32 %v1162, 16
        %v1166 = vpack.i.b16 %v1165, %v1165
        %v1168 = vlaneseq
        %v1169 = vshrl.u32 %v1168, 7
        %v1170 = vsub.s32 1, %v1169
        %v1171 = vrot.slane %v1166, %v1170
        %v1173 = vshrl.u32 %v1163, 16
        %v1174 = vpack.i.b16 %v1173, %v1173
        %v1176 = vlaneseq
        %v1177 = vshrl.u32 %v1176, 7
        %v1178 = vsub.s32 1, %v1177
        %v1179 = vrot.slane %v1174, %v1178
        %v1180 = vmul.bf16 %v1152, %v1171
        %v1181 = vmul.bf16 %v1146, %v1179
        %v1182 = vmul.bf16 %v1156, %v1171
        %v1183 = vmul.bf16 %v1147, %v1179
        %1184 = vst [vmem:[#allocation2 + $0x60] sm:$0xff] %v1180
        %1185 = vst [vmem:[#allocation2 + $0x68] sm:$0xff] %v1181
        %1186 = vst [vmem:[#allocation2 + $0x70] sm:$0xff] %v1182
        %1187 = vst [vmem:[#allocation2 + $0x78] sm:$0xff] %v1183
        %1188 = vst [vmem:[#allocation2 + $0x80] sm:$0xff] %v984
        %1189 = vst [vmem:[#allocation2 + $0x88] sm:$0xff] %v985
        %1190 = vst [vmem:[#allocation2 + $0x90] sm:$0xff] %v986
        %1191 = vst [vmem:[#allocation2 + $0x98] sm:$0xff] %v987
        %1192 = vrot.lane.b32.xlu0 %v984, 127
        %v1193 = vpop.permute.xlu0 %1192
        %1194 = vrot.lane.b32.xlu0 %v985, 127
        %v1195 = vpop.permute.xlu0 %1194
        %1196 = vrot.lane.b32.xlu0 %v986, 127
        %v1197 = vpop.permute.xlu0 %1196
        %1198 = vrot.lane.b32.xlu0 %v987, 127
        %v1199 = vpop.permute.xlu0 %1198
        %v1200 = vsel %vm547, %v1193, %v1195
        %v1201 = vsel %vm547, %v1197, %v1199
        %v1206 = vsel %vm552, %v1195, %v1193
        %v1210 = vsel %vm552, %v1199, %v1197
        %v1212 = vld [vmem:[%s1] sm:$0x44]
        %v1214 = vunpack.c.l.b16 %v1212
        %v1215 = vunpack.c.h.b16 %v1212
        %v1216 = vpack.c.b16 %v1214, %v1214
        %v1217 = vpack.c.b16 %v1215, %v1215
        %v1219 = vshrl.u32 %v1216, 16
        %v1220 = vpack.i.b16 %v1219, %v1219
        %v1222 = vlaneseq
        %v1223 = vshrl.u32 %v1222, 7
        %v1224 = vsub.s32 2, %v1223
        %v1225 = vrot.slane %v1220, %v1224
        %v1227 = vshrl.u32 %v1217, 16
        %v1228 = vpack.i.b16 %v1227, %v1227
        %v1230 = vlaneseq
        %v1231 = vshrl.u32 %v1230, 7
        %v1232 = vsub.s32 2, %v1231
        %v1233 = vrot.slane %v1228, %v1232
        %v1234 = vmul.bf16 %v1200, %v1225
        %v1235 = vmul.bf16 %v1206, %v1233
        %v1236 = vmul.bf16 %v1201, %v1225
        %v1237 = vmul.bf16 %v1210, %v1233
        %1238 = vst [vmem:[#allocation2 + $0xa0] sm:$0xff] %v1234
        %1239 = vst [vmem:[#allocation2 + $0xa8] sm:$0xff] %v1235
        %1240 = vst [vmem:[#allocation2 + $0xb0] sm:$0xff] %v1236
        %1241 = vst [vmem:[#allocation2 + $0xb8] sm:$0xff] %v1237
        %1242 = vrot.lane.b32.xlu0 %v984, 113
        %v1243 = vpop.permute.xlu0 %1242
        %1244 = vrot.lane.b32.xlu0 %v985, 113
        %v1245 = vpop.permute.xlu0 %1244
        %1246 = vrot.lane.b32.xlu0 %v986, 113
        %v1247 = vpop.permute.xlu0 %1246
        %1248 = vrot.lane.b32.xlu0 %v987, 113
        %v1249 = vpop.permute.xlu0 %1248
        %v1250 = vsel %vm599, %v1243, %v1245
        %v1251 = vsel %vm599, %v1247, %v1249
        %v1256 = vsel %vm604, %v1245, %v1243
        %v1260 = vsel %vm604, %v1249, %v1247
        %v1262 = vld [vmem:[%s1] sm:$0x88]
        %v1264 = vunpack.c.l.b16 %v1262
        %v1265 = vunpack.c.h.b16 %v1262
        %v1266 = vpack.c.b16 %v1264, %v1264
        %v1267 = vpack.c.b16 %v1265, %v1265
        %v1269 = vpack.i.b16 %v1266, %v1266
        %v1271 = vlaneseq
        %v1272 = vshrl.u32 %v1271, 7
        %v1273 = vsub.s32 3, %v1272
        %v1274 = vrot.slane %v1269, %v1273
        %v1276 = vpack.i.b16 %v1267, %v1267
        %v1278 = vlaneseq
        %v1279 = vshrl.u32 %v1278, 7
        %v1280 = vsub.s32 3, %v1279
        %v1281 = vrot.slane %v1276, %v1280
        %v1282 = vmul.bf16 %v1250, %v1274
        %v1283 = vmul.bf16 %v1256, %v1281
        %v1284 = vmul.bf16 %v1251, %v1274
        %v1285 = vmul.bf16 %v1260, %v1281
        %1286 = vst [vmem:[#allocation2 + $0xc0] sm:$0xff] %v1282
        %1287 = vst [vmem:[#allocation2 + $0xc8] sm:$0xff] %v1283
        %1288 = vst [vmem:[#allocation2 + $0xd0] sm:$0xff] %v1284
        %1289 = vst [vmem:[#allocation2 + $0xd8] sm:$0xff] %v1285
        %1290 = vrot.lane.b32.xlu0 %v984, 112
        %v1291 = vpop.permute.xlu0 %1290
        %1292 = vrot.lane.b32.xlu0 %v985, 112
        %v1293 = vpop.permute.xlu0 %1292
        %1294 = vrot.lane.b32.xlu0 %v986, 112
        %v1295 = vpop.permute.xlu0 %1294
        %1296 = vrot.lane.b32.xlu0 %v987, 112
        %v1297 = vpop.permute.xlu0 %1296
        %v1298 = vsel %vm649, %v1291, %v1293
        %v1299 = vsel %vm649, %v1295, %v1297
        %v1304 = vsel %vm654, %v1293, %v1291
        %v1308 = vsel %vm654, %v1297, %v1295
        %v1310 = vld [vmem:[%s1] sm:$0x88]
        %v1312 = vunpack.c.l.b16 %v1310
        %v1313 = vunpack.c.h.b16 %v1310
        %v1314 = vpack.c.b16 %v1312, %v1312
        %v1315 = vpack.c.b16 %v1313, %v1313
        %v1317 = vshrl.u32 %v1314, 16
        %v1318 = vpack.i.b16 %v1317, %v1317
        %v1320 = vlaneseq
        %v1321 = vshrl.u32 %v1320, 7
        %v1322 = vsub.s32 3, %v1321
        %v1323 = vrot.slane %v1318, %v1322
        %v1325 = vshrl.u32 %v1315, 16
        %v1326 = vpack.i.b16 %v1325, %v1325
        %v1328 = vlaneseq
        %v1329 = vshrl.u32 %v1328, 7
        %v1330 = vsub.s32 3, %v1329
        %v1331 = vrot.slane %v1326, %v1330
        %v1332 = vmul.bf16 %v1298, %v1323
        %v1333 = vmul.bf16 %v1304, %v1331
        %v1334 = vmul.bf16 %v1299, %v1323
        %v1335 = vmul.bf16 %v1308, %v1331
        %1336 = vst [vmem:[#allocation2 + $0xe0] sm:$0xff] %v1332
        %1337 = vst [vmem:[#allocation2 + $0xe8] sm:$0xff] %v1333
        %1338 = vst [vmem:[#allocation2 + $0xf0] sm:$0xff] %v1334
        %1339 = vst [vmem:[#allocation2 + $0xf8] sm:$0xff] %v1335
        %1340 = vrot.lane.b32.xlu0 %v984, 111
        %v1341 = vpop.permute.xlu0 %1340
        %1342 = vrot.lane.b32.xlu0 %v985, 111
        %v1343 = vpop.permute.xlu0 %1342
        %1344 = vrot.lane.b32.xlu0 %v986, 111
        %v1345 = vpop.permute.xlu0 %1344
        %1346 = vrot.lane.b32.xlu0 %v987, 111
        %v1347 = vpop.permute.xlu0 %1346
        %v1348 = vsel %vm701, %v1341, %v1343
        %v1349 = vsel %vm701, %v1345, %v1347
        %v1354 = vsel %vm706, %v1343, %v1341
        %v1358 = vsel %vm706, %v1347, %v1345
        %v1360 = vld [vmem:[%s1 + $0x8] sm:$0x11]
        %v1362 = vunpack.c.l.b16 %v1360
        %v1363 = vunpack.c.h.b16 %v1360
        %v1364 = vpack.c.b16 %v1362, %v1362
        %v1365 = vpack.c.b16 %v1363, %v1363
        %v1367 = vpack.i.b16 %v1364, %v1364
        %v1369 = vlaneseq
        %v1370 = vshrl.u32 %v1369, 7
        %v1371 = vsub.s32 0, %v1370
        %v1372 = vrot.slane %v1367, %v1371
        %v1374 = vpack.i.b16 %v1365, %v1365
        %v1376 = vlaneseq
        %v1377 = vshrl.u32 %v1376, 7
        %v1378 = vsub.s32 0, %v1377
        %v1379 = vrot.slane %v1374, %v1378
        %v1380 = vmul.bf16 %v1348, %v1372
        %v1381 = vmul.bf16 %v1354, %v1379
        %v1382 = vmul.bf16 %v1349, %v1372
        %v1383 = vmul.bf16 %v1358, %v1379
        %1384 = vst [vmem:[#allocation2 + $0x100] sm:$0xff] %v1380
        %1385 = vst [vmem:[#allocation2 + $0x108] sm:$0xff] %v1381
        %1386 = vst [vmem:[#allocation2 + $0x110] sm:$0xff] %v1382
        %1387 = vst [vmem:[#allocation2 + $0x118] sm:$0xff] %v1383
        %s1388 = smul.u32 %s979, 2
        %s1389 = smul.u32 %s1388, 12
        %s1390 = smul.addr %s1389, 4
        %s1391 = scalar_lea.vmem %s4, %s1390
        %v1392 = vld [vmem:[%s1391] sm:$0xff]
        %v1393 = vld [vmem:[%s1391 + $0x8] sm:$0xf]
        %v1394 = vld [vmem:[%s1391 + $0xc] sm:$0xff]
        %v1395 = vld [vmem:[%s1391 + $0x14] sm:$0xf]
        %v1396 = vld [vmem:[%s1391 + $0x18] sm:$0xff]
        %v1397 = vld [vmem:[%s1391 + $0x20] sm:$0xf]
        %v1398 = vld [vmem:[%s1391 + $0x24] sm:$0xff]
        %v1399 = vld [vmem:[%s1391 + $0x2c] sm:$0xf]
        %s1400 = smul.u32 %s1388, 32
        %s1401 = scalar_lea.vmem %s5, %s1400
        %v1402 = vld [vmem:[%s1401] sm:$0xff]
        %v1403 = vld [vmem:[%s1401 + $0x8] sm:$0xff]
        %v1404 = vld [vmem:[%s1401 + $0x10] sm:$0xff]
        %v1405 = vld [vmem:[%s1401 + $0x18] sm:$0xff]
        %v1406 = vld [vmem:[#allocation2] sm:$0xff]
        %v1407 = vld [vmem:[#allocation2 + $0x8] sm:$0xff]
        %v1408 = vld [vmem:[#allocation2 + $0x10] sm:$0xff]
        %v1409 = vld [vmem:[#allocation2 + $0x18] sm:$0xff]
        %v1410 = vld [vmem:[#allocation2 + $0x20] sm:$0xff]
        %v1411 = vld [vmem:[#allocation2 + $0x28] sm:$0xff]
        %v1412 = vld [vmem:[#allocation2 + $0x30] sm:$0xff]
        %v1413 = vld [vmem:[#allocation2 + $0x38] sm:$0xff]
        %v1414 = vld [vmem:[#allocation2 + $0x40] sm:$0xff]
        %v1415 = vld [vmem:[#allocation2 + $0x48] sm:$0xff]
        %v1416 = vld [vmem:[#allocation2 + $0x50] sm:$0xff]
        %v1417 = vld [vmem:[#allocation2 + $0x58] sm:$0xff]
        %v1418 = vld [vmem:[#allocation2 + $0x60] sm:$0xff]
        %v1419 = vld [vmem:[#allocation2 + $0x68] sm:$0xff]
        %v1420 = vld [vmem:[#allocation2 + $0x70] sm:$0xff]
        %v1421 = vld [vmem:[#allocation2 + $0x78] sm:$0xff]
        %v1422 = vld [vmem:[#allocation2 + $0x80] sm:$0xff]
        %v1423 = vld [vmem:[#allocation2 + $0x88] sm:$0xff]
        %v1424 = vld [vmem:[#allocation2 + $0x90] sm:$0xff]
        %v1425 = vld [vmem:[#allocation2 + $0x98] sm:$0xff]
        %v1426 = vld [vmem:[#allocation2 + $0xa0] sm:$0xff]
        %v1427 = vld [vmem:[#allocation2 + $0xa8] sm:$0xff]
        %v1428 = vld [vmem:[#allocation2 + $0xb0] sm:$0xff]
        %v1429 = vld [vmem:[#allocation2 + $0xb8] sm:$0xff]
        %v1430 = vld [vmem:[#allocation2 + $0xc0] sm:$0xff]
        %v1431 = vld [vmem:[#allocation2 + $0xc8] sm:$0xff]
        %v1432 = vld [vmem:[#allocation2 + $0xd0] sm:$0xff]
        %v1433 = vld [vmem:[#allocation2 + $0xd8] sm:$0xff]
        %v1434 = vld [vmem:[#allocation2 + $0xe0] sm:$0xff]
        %v1435 = vld [vmem:[#allocation2 + $0xe8] sm:$0xff]
        %v1436 = vld [vmem:[#allocation2 + $0xf0] sm:$0xff]
        %v1437 = vld [vmem:[#allocation2 + $0xf8] sm:$0xff]
        %v1438 = vld [vmem:[#allocation2 + $0x100] sm:$0xff]
        %v1439 = vld [vmem:[#allocation2 + $0x108] sm:$0xff]
        %v1440 = vld [vmem:[#allocation2 + $0x110] sm:$0xff]
        %v1441 = vld [vmem:[#allocation2 + $0x118] sm:$0xff]
        %1443 = vset.pattern.permute.xlu0 0
        %1444 = vperm.xlu0 %1443, %v1402
        %v1445 = vpop.permute.xlu0 %1444
        %1448 = vset.pattern.permute.xlu0 0
        %1449 = vperm.xlu0 %1448, %v1403
        %v1450 = vpop.permute.xlu0 %1449
        %1453 = vset.pattern.permute.xlu0 0
        %1454 = vperm.xlu0 %1453, %v1404
        %v1455 = vpop.permute.xlu0 %1454
        %1458 = vset.pattern.permute.xlu0 0
        %1459 = vperm.xlu0 %1458, %v1405
        %v1460 = vpop.permute.xlu0 %1459
        %v1470 = vunpack.c.l.b16 %v1392
        %v1471 = vunpack.c.h.b16 %v1392
        %v1472 = vunpack.c.l.b16 %v1393
        %v1473 = vunpack.c.l.b16 %v1394
        %v1474 = vunpack.c.h.b16 %v1394
        %v1475 = vunpack.c.l.b16 %v1395
        %v1476 = vunpack.c.l.b16 %v1396
        %v1477 = vunpack.c.h.b16 %v1396
        %v1478 = vunpack.c.l.b16 %v1397
        %v1479 = vunpack.c.l.b16 %v1398
        %v1480 = vunpack.c.h.b16 %v1398
        %v1481 = vunpack.c.l.b16 %v1399
        %v1482 = vpack.c.b16 %v1473, %v1470
        %v1483 = vpack.c.b16 %v1474, %v1471
        %v1484 = vpack.c.b16 %v1475, %v1472
        %v1485 = vpack.c.b16 %v1479, %v1476
        %v1486 = vpack.c.b16 %v1480, %v1477
        %v1487 = vpack.c.b16 %v1481, %v1478
        %v1493 = vsel %vm841, %v1484, 0
        %v1496 = vsel %vm841, %v1487, 0
        %1498 = vmatprep.subr.bf16.mxu0 %v1407
        %1499 = vmatpush1.bf16.msra.mxu0 %v1406
        %1500 = vmatprep.subr.bf16.mxu0 %v1409
        %1501 = vmatpush1.bf16.msra.mxu0 %v1408
        %1502 = vmatprep.subr.bf16.mxu0 %v1411
        %1503 = vmatpush1.bf16.msra.mxu0 %v1410
        %1504 = vmatprep.subr.bf16.mxu0 %v1413
        %1505 = vmatpush1.bf16.msra.mxu0 %v1412
        %1506 = vmatprep.subr.bf16.mxu0 %v1415
        %1507 = vmatpush1.bf16.msra.mxu0 %v1414
        %1508 = vmatprep.subr.bf16.mxu0 %v1417
        %1509 = vmatpush1.bf16.msra.mxu0 %v1416
        %1510 = vmatprep.subr.bf16.mxu0 %v1419
        %1511 = vmatpush1.bf16.msra.mxu0 %v1418
        %1512 = vmatprep.subr.bf16.mxu0 %v1421
        %1513 = vmatpush1.bf16.msra.mxu0 %v1420
        %1514 = vmatprep.subr.bf16.mxu0 %v1423
        %1515 = vmatpush1.bf16.msra.mxu0 %v1422
        %1516 = vmatprep.subr.bf16.mxu0 %v1425
        %1517 = vmatpush1.bf16.msra.mxu0 %v1424
        %1518 = vmatprep.subr.bf16.mxu0 %v1427
        %1519 = vmatpush1.bf16.msra.mxu0 %v1426
        %1520 = vmatprep.subr.bf16.mxu0 %v1429
        %1521 = vmatpush1.bf16.msra.mxu0 %v1428
        %1522 = vmatprep.subr.bf16.mxu0 %v1431
        %1523 = vmatpush1.bf16.msra.mxu0 %v1430
        %1524 = vmatprep.subr.bf16.mxu0 %v1433
        %1525 = vmatpush1.bf16.msra.mxu0 %v1432
        %1526 = vmatprep.subr.bf16.mxu0 %v1435
        %1527 = vmatpush1.bf16.msra.mxu0 %v1434
        %1528 = vmatprep.subr.bf16.mxu0 %v1437
        %1529 = vmatpush1.bf16.msra.mxu0 %v1436
        %1530 = vmatprep.mubr.bf16.mxu0 %v1483
        %1531 = vmatmul.mubr.bf16.gmra.mrb[0].mxu0 %v1482
        %v1532 = vpop.f32.mrb[0].mxu0
        %v1533 = vadd.f32 %v1445, %v1532
        %v1534 = vpop.f32.mrb[0].mxu0
        %v1535 = vadd.f32 %v1445, %v1534
        %v1536 = vpop.f32.mrb[0].mxu0
        %v1537 = vadd.f32 %v1450, %v1536
        %v1538 = vpop.f32.mrb[0].mxu0
        %v1539 = vadd.f32 %v1450, %v1538
        %1540 = vmatprep.mubr.bf16.mxu0 %v1486
        %1541 = vmatmul.mubr.bf16.gmra.mrb[0].mxu0 %v1485
        %v1542 = vpop.f32.mrb[0].mxu0
        %v1543 = vadd.f32 %v1455, %v1542
        %v1544 = vpop.f32.mrb[0].mxu0
        %v1545 = vadd.f32 %v1455, %v1544
        %v1546 = vpop.f32.mrb[0].mxu0
        %v1547 = vadd.f32 %v1460, %v1546
        %v1548 = vpop.f32.mrb[0].mxu0
        %v1549 = vadd.f32 %v1460, %v1548
        %1550 = vdwg.mxu0
        %1551 = vmatprep.subr.bf16.mxu0 %v1439
        %1552 = vmatpush1.bf16.msra.mxu0 %v1438
        %1553 = vmatprep.subr.bf16.mxu0 %v1441
        %1554 = vmatpush1.bf16.msra.mxu0 %v1440
        %1555 = vmatprep.subr.bf16.mxu0 0
        %1556 = vmatpush1.bf16.msra.mxu0 0
        %1557 = vmatprep.subr.bf16.mxu0 0
        %1558 = vmatpush1.bf16.msra.mxu0 0
        %1559 = vmatprep.subr.bf16.mxu0 0
        %1560 = vmatpush1.bf16.msra.mxu0 0
        %1561 = vmatprep.subr.bf16.mxu0 0
        %1562 = vmatpush1.bf16.msra.mxu0 0
        %1563 = vmatprep.subr.bf16.mxu0 0
        %1564 = vmatpush1.bf16.msra.mxu0 0
        %1565 = vmatprep.subr.bf16.mxu0 0
        %1566 = vmatpush1.bf16.msra.mxu0 0
        %1567 = vmatprep.subr.bf16.mxu0 0
        %1568 = vmatpush1.bf16.msra.mxu0 0
        %1569 = vmatprep.subr.bf16.mxu0 0
        %1570 = vmatpush1.bf16.msra.mxu0 0
        %1571 = vmatprep.subr.bf16.mxu0 0
        %1572 = vmatpush1.bf16.msra.mxu0 0
        %1573 = vmatprep.subr.bf16.mxu0 0
        %1574 = vmatpush1.bf16.msra.mxu0 0
        %1575 = vmatprep.subr.bf16.mxu0 0
        %1576 = vmatpush1.bf16.msra.mxu0 0
        %1577 = vmatprep.subr.bf16.mxu0 0
        %1578 = vmatpush1.bf16.msra.mxu0 0
        %1579 = vmatprep.subr.bf16.mxu0 0
        %1580 = vmatpush1.bf16.msra.mxu0 0
        %1581 = vmatprep.subr.bf16.mxu0 0
        %1582 = vmatpush1.bf16.msra.mxu0 0
        %1583 = vmatprep.mubr.bf16.mxu0 0
        %1584 = vmatmul.mubr.bf16.gmra.mrb[0].mxu0 %v1493
        %v1585 = vpop.f32.mrb[0].mxu0
        %v1586 = vadd.f32 %v1533, %v1585
        %v1587 = vpop.f32.mrb[0].mxu0
        %v1588 = vadd.f32 %v1535, %v1587
        %v1589 = vpop.f32.mrb[0].mxu0
        %v1590 = vadd.f32 %v1537, %v1589
        %v1591 = vpop.f32.mrb[0].mxu0
        %v1592 = vadd.f32 %v1539, %v1591
        %1593 = vmatprep.mubr.bf16.mxu0 0
        %1594 = vmatmul.mubr.bf16.gmra.mrb[0].mxu0 %v1496
        %v1595 = vpop.f32.mrb[0].mxu0
        %v1596 = vadd.f32 %v1543, %v1595
        %v1597 = vpop.f32.mrb[0].mxu0
        %v1598 = vadd.f32 %v1545, %v1597
        %v1599 = vpop.f32.mrb[0].mxu0
        %v1600 = vadd.f32 %v1547, %v1599
        %v1601 = vpop.f32.mrb[0].mxu0
        %v1602 = vadd.f32 %v1549, %v1601
        %1603 = vdwg.mxu0
        %v1604 = vmax.f32 %v1586, 0.0
        %v1605 = vmax.f32 %v1588, 0.0
        %v1606 = vmax.f32 %v1590, 0.0
        %v1607 = vmax.f32 %v1592, 0.0
        %v1608 = vmax.f32 %v1596, 0.0
        %v1609 = vmax.f32 %v1598, 0.0
        %v1610 = vmax.f32 %v1600, 0.0
        %v1611 = vmax.f32 %v1602, 0.0
        %v1612 = vpack.c.bf16 %v1606, %v1604
        %v1613 = vpack.c.bf16 %v1607, %v1605
        %v1614 = vpack.c.bf16 %v1610, %v1608
        %v1615 = vpack.c.bf16 %v1611, %v1609
        %1618 = vrot.lane.b32.xlu0 %v1613, 17
        %v1619 = vpop.permute.xlu0 %1618
        %1620 = vrot.lane.b32.xlu0 %v1615, 17
        %v1621 = vpop.permute.xlu0 %1620
        %1624 = vrot.lane.b32.xlu0 %v1612, 17
        %v1625 = vpop.permute.xlu0 %1624
        %1626 = vrot.lane.b32.xlu0 %v1614, 17
        %v1627 = vpop.permute.xlu0 %1626
        %v1628 = vsel %vm335, %v1625, %v1619
        %v1629 = vsel %vm335, %v1627, %v1621
        %v1634 = vsel %vm340, %v1619, %v1625
        %v1638 = vsel %vm340, %v1621, %v1627
        %v1640 = vld [vmem:[%s1] sm:$0x11]
        %v1642 = vunpack.c.l.b16 %v1640
        %v1643 = vunpack.c.h.b16 %v1640
        %v1644 = vpack.c.b16 %v1642, %v1642
        %v1645 = vpack.c.b16 %v1643, %v1643
        %v1647 = vpack.i.b16 %v1644, %v1644
        %v1649 = vlaneseq
        %v1650 = vshrl.u32 %v1649, 7
        %v1651 = vsub.s32 0, %v1650
        %v1652 = vrot.slane %v1647, %v1651
        %v1654 = vpack.i.b16 %v1645, %v1645
        %v1656 = vlaneseq
        %v1657 = vshrl.u32 %v1656, 7
        %v1658 = vsub.s32 0, %v1657
        %v1659 = vrot.slane %v1654, %v1658
        %v1660 = vmul.bf16 %v1634, %v1652
        %v1661 = vmul.bf16 %v1628, %v1659
        %v1662 = vmul.bf16 %v1638, %v1652
        %v1663 = vmul.bf16 %v1629, %v1659
        %1664 = vst [vmem:[#allocation2] sm:$0xff] %v1660
        %1665 = vst [vmem:[#allocation2 + $0x8] sm:$0xff] %v1661
        %1666 = vst [vmem:[#allocation2 + $0x10] sm:$0xff] %v1662
        %1667 = vst [vmem:[#allocation2 + $0x18] sm:$0xff] %v1663
        %1668 = vrot.lane.b32.xlu0 %v1613, 16
        %v1669 = vpop.permute.xlu0 %1668
        %1670 = vrot.lane.b32.xlu0 %v1615, 16
        %v1671 = vpop.permute.xlu0 %1670
        %1672 = vrot.lane.b32.xlu0 %v1612, 16
        %v1673 = vpop.permute.xlu0 %1672
        %1674 = vrot.lane.b32.xlu0 %v1614, 16
        %v1675 = vpop.permute.xlu0 %1674
        %v1676 = vsel %vm385, %v1673, %v1669
        %v1677 = vsel %vm385, %v1675, %v1671
        %v1682 = vsel %vm390, %v1669, %v1673
        %v1686 = vsel %vm390, %v1671, %v1675
        %v1688 = vld [vmem:[%s1] sm:$0x11]
        %v1690 = vunpack.c.l.b16 %v1688
        %v1691 = vunpack.c.h.b16 %v1688
        %v1692 = vpack.c.b16 %v1690, %v1690
        %v1693 = vpack.c.b16 %v1691, %v1691
        %v1695 = vshrl.u32 %v1692, 16
        %v1696 = vpack.i.b16 %v1695, %v1695
        %v1698 = vlaneseq
        %v1699 = vshrl.u32 %v1698, 7
        %v1700 = vsub.s32 0, %v1699
        %v1701 = vrot.slane %v1696, %v1700
        %v1703 = vshrl.u32 %v1693, 16
        %v1704 = vpack.i.b16 %v1703, %v1703
        %v1706 = vlaneseq
        %v1707 = vshrl.u32 %v1706, 7
        %v1708 = vsub.s32 0, %v1707
        %v1709 = vrot.slane %v1704, %v1708
        %v1710 = vmul.bf16 %v1682, %v1701
        %v1711 = vmul.bf16 %v1676, %v1709
        %v1712 = vmul.bf16 %v1686, %v1701
        %v1713 = vmul.bf16 %v1677, %v1709
        %1714 = vst [vmem:[#allocation2 + $0x20] sm:$0xff] %v1710
        %1715 = vst [vmem:[#allocation2 + $0x28] sm:$0xff] %v1711
        %1716 = vst [vmem:[#allocation2 + $0x30] sm:$0xff] %v1712
        %1717 = vst [vmem:[#allocation2 + $0x38] sm:$0xff] %v1713
        %1718 = vrot.lane.b32.xlu0 %v1613, 15
        %v1719 = vpop.permute.xlu0 %1718
        %1720 = vrot.lane.b32.xlu0 %v1615, 15
        %v1721 = vpop.permute.xlu0 %1720
        %1722 = vrot.lane.b32.xlu0 %v1612, 15
        %v1723 = vpop.permute.xlu0 %1722
        %1724 = vrot.lane.b32.xlu0 %v1614, 15
        %v1725 = vpop.permute.xlu0 %1724
        %v1726 = vsel %vm437, %v1723, %v1719
        %v1727 = vsel %vm437, %v1725, %v1721
        %v1732 = vsel %vm442, %v1719, %v1723
        %v1736 = vsel %vm442, %v1721, %v1725
        %v1738 = vld [vmem:[%s1] sm:$0x22]
        %v1740 = vunpack.c.l.b16 %v1738
        %v1741 = vunpack.c.h.b16 %v1738
        %v1742 = vpack.c.b16 %v1740, %v1740
        %v1743 = vpack.c.b16 %v1741, %v1741
        %v1745 = vpack.i.b16 %v1742, %v1742
        %v1747 = vlaneseq
        %v1748 = vshrl.u32 %v1747, 7
        %v1749 = vsub.s32 1, %v1748
        %v1750 = vrot.slane %v1745, %v1749
        %v1752 = vpack.i.b16 %v1743, %v1743
        %v1754 = vlaneseq
        %v1755 = vshrl.u32 %v1754, 7
        %v1756 = vsub.s32 1, %v1755
        %v1757 = vrot.slane %v1752, %v1756
        %v1758 = vmul.bf16 %v1732, %v1750
        %v1759 = vmul.bf16 %v1726, %v1757
        %v1760 = vmul.bf16 %v1736, %v1750
        %v1761 = vmul.bf16 %v1727, %v1757
        %1762 = vst [vmem:[#allocation2 + $0x40] sm:$0xff] %v1758
        %1763 = vst [vmem:[#allocation2 + $0x48] sm:$0xff] %v1759
        %1764 = vst [vmem:[#allocation2 + $0x50] sm:$0xff] %v1760
        %1765 = vst [vmem:[#allocation2 + $0x58] sm:$0xff] %v1761
        %1766 = vrot.lane.b32.xlu0 %v1613, 1
        %v1767 = vpop.permute.xlu0 %1766
        %1768 = vrot.lane.b32.xlu0 %v1615, 1
        %v1769 = vpop.permute.xlu0 %1768
        %1770 = vrot.lane.b32.xlu0 %v1612, 1
        %v1771 = vpop.permute.xlu0 %1770
        %1772 = vrot.lane.b32.xlu0 %v1614, 1
        %v1773 = vpop.permute.xlu0 %1772
        %v1774 = vsel %vm487, %v1771, %v1767
        %v1775 = vsel %vm487, %v1773, %v1769
        %v1780 = vsel %vm492, %v1767, %v1771
        %v1784 = vsel %vm492, %v1769, %v1773
        %v1786 = vld [vmem:[%s1] sm:$0x22]
        %v1788 = vunpack.c.l.b16 %v1786
        %v1789 = vunpack.c.h.b16 %v1786
        %v1790 = vpack.c.b16 %v1788, %v1788
        %v1791 = vpack.c.b16 %v1789, %v1789
        %v1793 = vshrl.u32 %v1790, 16
        %v1794 = vpack.i.b16 %v1793, %v1793
        %v1796 = vlaneseq
        %v1797 = vshrl.u32 %v1796, 7
        %v1798 = vsub.s32 1, %v1797
        %v1799 = vrot.slane %v1794, %v1798
        %v1801 = vshrl.u32 %v1791, 16
        %v1802 = vpack.i.b16 %v1801, %v1801
        %v1804 = vlaneseq
        %v1805 = vshrl.u32 %v1804, 7
        %v1806 = vsub.s32 1, %v1805
        %v1807 = vrot.slane %v1802, %v1806
        %v1808 = vmul.bf16 %v1780, %v1799
        %v1809 = vmul.bf16 %v1774, %v1807
        %v1810 = vmul.bf16 %v1784, %v1799
        %v1811 = vmul.bf16 %v1775, %v1807
        %1812 = vst [vmem:[#allocation2 + $0x60] sm:$0xff] %v1808
        %1813 = vst [vmem:[#allocation2 + $0x68] sm:$0xff] %v1809
        %1814 = vst [vmem:[#allocation2 + $0x70] sm:$0xff] %v1810
        %1815 = vst [vmem:[#allocation2 + $0x78] sm:$0xff] %v1811
        %1816 = vst [vmem:[#allocation2 + $0x80] sm:$0xff] %v1612
        %1817 = vst [vmem:[#allocation2 + $0x88] sm:$0xff] %v1613
        %1818 = vst [vmem:[#allocation2 + $0x90] sm:$0xff] %v1614
        %1819 = vst [vmem:[#allocation2 + $0x98] sm:$0xff] %v1615
        %1820 = vrot.lane.b32.xlu0 %v1612, 127
        %v1821 = vpop.permute.xlu0 %1820
        %1822 = vrot.lane.b32.xlu0 %v1613, 127
        %v1823 = vpop.permute.xlu0 %1822
        %1824 = vrot.lane.b32.xlu0 %v1614, 127
        %v1825 = vpop.permute.xlu0 %1824
        %1826 = vrot.lane.b32.xlu0 %v1615, 127
        %v1827 = vpop.permute.xlu0 %1826
        %v1828 = vsel %vm547, %v1821, %v1823
        %v1829 = vsel %vm547, %v1825, %v1827
        %v1834 = vsel %vm552, %v1823, %v1821
        %v1838 = vsel %vm552, %v1827, %v1825
        %v1840 = vld [vmem:[%s1] sm:$0x44]
        %v1842 = vunpack.c.l.b16 %v1840
        %v1843 = vunpack.c.h.b16 %v1840
        %v1844 = vpack.c.b16 %v1842, %v1842
        %v1845 = vpack.c.b16 %v1843, %v1843
        %v1847 = vshrl.u32 %v1844, 16
        %v1848 = vpack.i.b16 %v1847, %v1847
        %v1850 = vlaneseq
        %v1851 = vshrl.u32 %v1850, 7
        %v1852 = vsub.s32 2, %v1851
        %v1853 = vrot.slane %v1848, %v1852
        %v1855 = vshrl.u32 %v1845, 16
        %v1856 = vpack.i.b16 %v1855, %v1855
        %v1858 = vlaneseq
        %v1859 = vshrl.u32 %v1858, 7
        %v1860 = vsub.s32 2, %v1859
        %v1861 = vrot.slane %v1856, %v1860
        %v1862 = vmul.bf16 %v1828, %v1853
        %v1863 = vmul.bf16 %v1834, %v1861
        %v1864 = vmul.bf16 %v1829, %v1853
        %v1865 = vmul.bf16 %v1838, %v1861
        %1866 = vst [vmem:[#allocation2 + $0xa0] sm:$0xff] %v1862
        %1867 = vst [vmem:[#allocation2 + $0xa8] sm:$0xff] %v1863
        %1868 = vst [vmem:[#allocation2 + $0xb0] sm:$0xff] %v1864
        %1869 = vst [vmem:[#allocation2 + $0xb8] sm:$0xff] %v1865
        %1870 = vrot.lane.b32.xlu0 %v1612, 113
        %v1871 = vpop.permute.xlu0 %1870
        %1872 = vrot.lane.b32.xlu0 %v1613, 113
        %v1873 = vpop.permute.xlu0 %1872
        %1874 = vrot.lane.b32.xlu0 %v1614, 113
        %v1875 = vpop.permute.xlu0 %1874
        %1876 = vrot.lane.b32.xlu0 %v1615, 113
        %v1877 = vpop.permute.xlu0 %1876
        %v1878 = vsel %vm599, %v1871, %v1873
        %v1879 = vsel %vm599, %v1875, %v1877
        %v1884 = vsel %vm604, %v1873, %v1871
        %v1888 = vsel %vm604, %v1877, %v1875
        %v1890 = vld [vmem:[%s1] sm:$0x88]
        %v1892 = vunpack.c.l.b16 %v1890
        %v1893 = vunpack.c.h.b16 %v1890
        %v1894 = vpack.c.b16 %v1892, %v1892
        %v1895 = vpack.c.b16 %v1893, %v1893
        %v1897 = vpack.i.b16 %v1894, %v1894
        %v1899 = vlaneseq
        %v1900 = vshrl.u32 %v1899, 7
        %v1901 = vsub.s32 3, %v1900
        %v1902 = vrot.slane %v1897, %v1901
        %v1904 = vpack.i.b16 %v1895, %v1895
        %v1906 = vlaneseq
        %v1907 = vshrl.u32 %v1906, 7
        %v1908 = vsub.s32 3, %v1907
        %v1909 = vrot.slane %v1904, %v1908
        %v1910 = vmul.bf16 %v1878, %v1902
        %v1911 = vmul.bf16 %v1884, %v1909
        %v1912 = vmul.bf16 %v1879, %v1902
        %v1913 = vmul.bf16 %v1888, %v1909
        %1914 = vst [vmem:[#allocation2 + $0xc0] sm:$0xff] %v1910
        %1915 = vst [vmem:[#allocation2 + $0xc8] sm:$0xff] %v1911
        %1916 = vst [vmem:[#allocation2 + $0xd0] sm:$0xff] %v1912
        %1917 = vst [vmem:[#allocation2 + $0xd8] sm:$0xff] %v1913
        %1918 = vrot.lane.b32.xlu0 %v1612, 112
        %v1919 = vpop.permute.xlu0 %1918
        %1920 = vrot.lane.b32.xlu0 %v1613, 112
        %v1921 = vpop.permute.xlu0 %1920
        %1922 = vrot.lane.b32.xlu0 %v1614, 112
        %v1923 = vpop.permute.xlu0 %1922
        %1924 = vrot.lane.b32.xlu0 %v1615, 112
        %v1925 = vpop.permute.xlu0 %1924
        %v1926 = vsel %vm649, %v1919, %v1921
        %v1927 = vsel %vm649, %v1923, %v1925
        %v1932 = vsel %vm654, %v1921, %v1919
        %v1936 = vsel %vm654, %v1925, %v1923
        %v1938 = vld [vmem:[%s1] sm:$0x88]
        %v1940 = vunpack.c.l.b16 %v1938
        %v1941 = vunpack.c.h.b16 %v1938
        %v1942 = vpack.c.b16 %v1940, %v1940
        %v1943 = vpack.c.b16 %v1941, %v1941
        %v1945 = vshrl.u32 %v1942, 16
        %v1946 = vpack.i.b16 %v1945, %v1945
        %v1948 = vlaneseq
        %v1949 = vshrl.u32 %v1948, 7
        %v1950 = vsub.s32 3, %v1949
        %v1951 = vrot.slane %v1946, %v1950
        %v1953 = vshrl.u32 %v1943, 16
        %v1954 = vpack.i.b16 %v1953, %v1953
        %v1956 = vlaneseq
        %v1957 = vshrl.u32 %v1956, 7
        %v1958 = vsub.s32 3, %v1957
        %v1959 = vrot.slane %v1954, %v1958
        %v1960 = vmul.bf16 %v1926, %v1951
        %v1961 = vmul.bf16 %v1932, %v1959
        %v1962 = vmul.bf16 %v1927, %v1951
        %v1963 = vmul.bf16 %v1936, %v1959
        %1964 = vst [vmem:[#allocation2 + $0xe0] sm:$0xff] %v1960
        %1965 = vst [vmem:[#allocation2 + $0xe8] sm:$0xff] %v1961
        %1966 = vst [vmem:[#allocation2 + $0xf0] sm:$0xff] %v1962
        %1967 = vst [vmem:[#allocation2 + $0xf8] sm:$0xff] %v1963
        %1968 = vrot.lane.b32.xlu0 %v1612, 111
        %v1969 = vpop.permute.xlu0 %1968
        %1970 = vrot.lane.b32.xlu0 %v1613, 111
        %v1971 = vpop.permute.xlu0 %1970
        %1972 = vrot.lane.b32.xlu0 %v1614, 111
        %v1973 = vpop.permute.xlu0 %1972
        %1974 = vrot.lane.b32.xlu0 %v1615, 111
        %v1975 = vpop.permute.xlu0 %1974
        %v1976 = vsel %vm701, %v1969, %v1971
        %v1977 = vsel %vm701, %v1973, %v1975
        %v1982 = vsel %vm706, %v1971, %v1969
        %v1986 = vsel %vm706, %v1975, %v1973
        %v1988 = vld [vmem:[%s1 + $0x8] sm:$0x11]
        %v1990 = vunpack.c.l.b16 %v1988
        %v1991 = vunpack.c.h.b16 %v1988
        %v1992 = vpack.c.b16 %v1990, %v1990
        %v1993 = vpack.c.b16 %v1991, %v1991
        %v1995 = vpack.i.b16 %v1992, %v1992
        %v1997 = vlaneseq
        %v1998 = vshrl.u32 %v1997, 7
        %v1999 = vsub.s32 0, %v1998
        %v2000 = vrot.slane %v1995, %v1999
        %v2002 = vpack.i.b16 %v1993, %v1993
        %v2004 = vlaneseq
        %v2005 = vshrl.u32 %v2004, 7
        %v2006 = vsub.s32 0, %v2005
        %v2007 = vrot.slane %v2002, %v2006
        %v2008 = vmul.bf16 %v1976, %v2000
        %v2009 = vmul.bf16 %v1982, %v2007
        %v2010 = vmul.bf16 %v1977, %v2000
        %v2011 = vmul.bf16 %v1986, %v2007
        %2012 = vst [vmem:[#allocation2 + $0x100] sm:$0xff] %v2008
        %2013 = vst [vmem:[#allocation2 + $0x108] sm:$0xff] %v2009
        %2014 = vst [vmem:[#allocation2 + $0x110] sm:$0xff] %v2010
        %2015 = vst [vmem:[#allocation2 + $0x118] sm:$0xff] %v2011
        %s2016 = sadd.s32 %s1388, 1
        %s2017 = smul.u32 %s2016, 12
        %s2018 = smul.addr %s2017, 4
        %s2019 = scalar_lea.vmem %s4, %s2018
        %v2020 = vld [vmem:[%s2019] sm:$0xff]
        %v2021 = vld [vmem:[%s2019 + $0x8] sm:$0xf]
        %v2022 = vld [vmem:[%s2019 + $0xc] sm:$0xff]
        %v2023 = vld [vmem:[%s2019 + $0x14] sm:$0xf]
        %v2024 = vld [vmem:[%s2019 + $0x18] sm:$0xff]
        %v2025 = vld [vmem:[%s2019 + $0x20] sm:$0xf]
        %v2026 = vld [vmem:[%s2019 + $0x24] sm:$0xff]
        %v2027 = vld [vmem:[%s2019 + $0x2c] sm:$0xf]
        %s2028 = smul.u32 %s2016, 32
        %s2029 = scalar_lea.vmem %s5, %s2028
        %v2030 = vld [vmem:[%s2029] sm:$0xff]
        %v2031 = vld [vmem:[%s2029 + $0x8] sm:$0xff]
        %v2032 = vld [vmem:[%s2029 + $0x10] sm:$0xff]
        %v2033 = vld [vmem:[%s2029 + $0x18] sm:$0xff]
        %v2034 = vld [vmem:[#allocation2] sm:$0xff]
        %v2035 = vld [vmem:[#allocation2 + $0x8] sm:$0xff]
        %v2036 = vld [vmem:[#allocation2 + $0x10] sm:$0xff]
        %v2037 = vld [vmem:[#allocation2 + $0x18] sm:$0xff]
        %v2038 = vld [vmem:[#allocation2 + $0x20] sm:$0xff]
        %v2039 = vld [vmem:[#allocation2 + $0x28] sm:$0xff]
        %v2040 = vld [vmem:[#allocation2 + $0x30] sm:$0xff]
        %v2041 = vld [vmem:[#allocation2 + $0x38] sm:$0xff]
        %v2042 = vld [vmem:[#allocation2 + $0x40] sm:$0xff]
        %v2043 = vld [vmem:[#allocation2 + $0x48] sm:$0xff]
        %v2044 = vld [vmem:[#allocation2 + $0x50] sm:$0xff]
        %v2045 = vld [vmem:[#allocation2 + $0x58] sm:$0xff]
        %v2046 = vld [vmem:[#allocation2 + $0x60] sm:$0xff]
        %v2047 = vld [vmem:[#allocation2 + $0x68] sm:$0xff]
        %v2048 = vld [vmem:[#allocation2 + $0x70] sm:$0xff]
        %v2049 = vld [vmem:[#allocation2 + $0x78] sm:$0xff]
        %v2050 = vld [vmem:[#allocation2 + $0x80] sm:$0xff]
        %v2051 = vld [vmem:[#allocation2 + $0x88] sm:$0xff]
        %v2052 = vld [vmem:[#allocation2 + $0x90] sm:$0xff]
        %v2053 = vld [vmem:[#allocation2 + $0x98] sm:$0xff]
        %v2054 = vld [vmem:[#allocation2 + $0xa0] sm:$0xff]
        %v2055 = vld [vmem:[#allocation2 + $0xa8] sm:$0xff]
        %v2056 = vld [vmem:[#allocation2 + $0xb0] sm:$0xff]
        %v2057 = vld [vmem:[#allocation2 + $0xb8] sm:$0xff]
        %v2058 = vld [vmem:[#allocation2 + $0xc0] sm:$0xff]
        %v2059 = vld [vmem:[#allocation2 + $0xc8] sm:$0xff]
        %v2060 = vld [vmem:[#allocation2 + $0xd0] sm:$0xff]
        %v2061 = vld [vmem:[#allocation2 + $0xd8] sm:$0xff]
        %v2062 = vld [vmem:[#allocation2 + $0xe0] sm:$0xff]
        %v2063 = vld [vmem:[#allocation2 + $0xe8] sm:$0xff]
        %v2064 = vld [vmem:[#allocation2 + $0xf0] sm:$0xff]
        %v2065 = vld [vmem:[#allocation2 + $0xf8] sm:$0xff]
        %v2066 = vld [vmem:[#allocation2 + $0x100] sm:$0xff]
        %v2067 = vld [vmem:[#allocation2 + $0x108] sm:$0xff]
        %v2068 = vld [vmem:[#allocation2 + $0x110] sm:$0xff]
        %v2069 = vld [vmem:[#allocation2 + $0x118] sm:$0xff]
        %2071 = vset.pattern.permute.xlu0 0
        %2072 = vperm.xlu0 %2071, %v2030
        %v2073 = vpop.permute.xlu0 %2072
        %2076 = vset.pattern.permute.xlu0 0
        %2077 = vperm.xlu0 %2076, %v2031
        %v2078 = vpop.permute.xlu0 %2077
        %2081 = vset.pattern.permute.xlu0 0
        %2082 = vperm.xlu0 %2081, %v2032
        %v2083 = vpop.permute.xlu0 %2082
        %2086 = vset.pattern.permute.xlu0 0
        %2087 = vperm.xlu0 %2086, %v2033
        %v2088 = vpop.permute.xlu0 %2087
        %v2098 = vunpack.c.l.b16 %v2020
        %v2099 = vunpack.c.h.b16 %v2020
        %v2100 = vunpack.c.l.b16 %v2021
        %v2101 = vunpack.c.l.b16 %v2022
        %v2102 = vunpack.c.h.b16 %v2022
        %v2103 = vunpack.c.l.b16 %v2023
        %v2104 = vunpack.c.l.b16 %v2024
        %v2105 = vunpack.c.h.b16 %v2024
        %v2106 = vunpack.c.l.b16 %v2025
        %v2107 = vunpack.c.l.b16 %v2026
        %v2108 = vunpack.c.h.b16 %v2026
        %v2109 = vunpack.c.l.b16 %v2027
        %v2110 = vpack.c.b16 %v2101, %v2098
        %v2111 = vpack.c.b16 %v2102, %v2099
        %v2112 = vpack.c.b16 %v2103, %v2100
        %v2113 = vpack.c.b16 %v2107, %v2104
        %v2114 = vpack.c.b16 %v2108, %v2105
        %v2115 = vpack.c.b16 %v2109, %v2106
        %v2121 = vsel %vm841, %v2112, 0
        %v2124 = vsel %vm841, %v2115, 0
        %2126 = vmatprep.subr.bf16.mxu0 %v2035
        %2127 = vmatpush1.bf16.msra.mxu0 %v2034
        %2128 = vmatprep.subr.bf16.mxu0 %v2037
        %2129 = vmatpush1.bf16.msra.mxu0 %v2036
        %2130 = vmatprep.subr.bf16.mxu0 %v2039
        %2131 = vmatpush1.bf16.msra.mxu0 %v2038
        %2132 = vmatprep.subr.bf16.mxu0 %v2041
        %2133 = vmatpush1.bf16.msra.mxu0 %v2040
        %2134 = vmatprep.subr.bf16.mxu0 %v2043
        %2135 = vmatpush1.bf16.msra.mxu0 %v2042
        %2136 = vmatprep.subr.bf16.mxu0 %v2045
        %2137 = vmatpush1.bf16.msra.mxu0 %v2044
        %2138 = vmatprep.subr.bf16.mxu0 %v2047
        %2139 = vmatpush1.bf16.msra.mxu0 %v2046
        %2140 = vmatprep.subr.bf16.mxu0 %v2049
        %2141 = vmatpush1.bf16.msra.mxu0 %v2048
        %2142 = vmatprep.subr.bf16.mxu0 %v2051
        %2143 = vmatpush1.bf16.msra.mxu0 %v2050
        %2144 = vmatprep.subr.bf16.mxu0 %v2053
        %2145 = vmatpush1.bf16.msra.mxu0 %v2052
        %2146 = vmatprep.subr.bf16.mxu0 %v2055
        %2147 = vmatpush1.bf16.msra.mxu0 %v2054
        %2148 = vmatprep.subr.bf16.mxu0 %v2057
        %2149 = vmatpush1.bf16.msra.mxu0 %v2056
        %2150 = vmatprep.subr.bf16.mxu0 %v2059
        %2151 = vmatpush1.bf16.msra.mxu0 %v2058
        %2152 = vmatprep.subr.bf16.mxu0 %v2061
        %2153 = vmatpush1.bf16.msra.mxu0 %v2060
        %2154 = vmatprep.subr.bf16.mxu0 %v2063
        %2155 = vmatpush1.bf16.msra.mxu0 %v2062
        %2156 = vmatprep.subr.bf16.mxu0 %v2065
        %2157 = vmatpush1.bf16.msra.mxu0 %v2064
        %2158 = vmatprep.mubr.bf16.mxu0 %v2111
        %2159 = vmatmul.mubr.bf16.gmra.mrb[0].mxu0 %v2110
        %v2160 = vpop.f32.mrb[0].mxu0
        %v2161 = vadd.f32 %v2073, %v2160
        %v2162 = vpop.f32.mrb[0].mxu0
        %v2163 = vadd.f32 %v2073, %v2162
        %v2164 = vpop.f32.mrb[0].mxu0
        %v2165 = vadd.f32 %v2078, %v2164
        %v2166 = vpop.f32.mrb[0].mxu0
        %v2167 = vadd.f32 %v2078, %v2166
        %2168 = vmatprep.mubr.bf16.mxu0 %v2114
        %2169 = vmatmul.mubr.bf16.gmra.mrb[0].mxu0 %v2113
        %v2170 = vpop.f32.mrb[0].mxu0
        %v2171 = vadd.f32 %v2083, %v2170
        %v2172 = vpop.f32.mrb[0].mxu0
        %v2173 = vadd.f32 %v2083, %v2172
        %v2174 = vpop.f32.mrb[0].mxu0
        %v2175 = vadd.f32 %v2088, %v2174
        %v2176 = vpop.f32.mrb[0].mxu0
        %v2177 = vadd.f32 %v2088, %v2176
        %2178 = vdwg.mxu0
        %2179 = vmatprep.subr.bf16.mxu0 %v2067
        %2180 = vmatpush1.bf16.msra.mxu0 %v2066
        %2181 = vmatprep.subr.bf16.mxu0 %v2069
        %2182 = vmatpush1.bf16.msra.mxu0 %v2068
        %2183 = vmatprep.subr.bf16.mxu0 0
        %2184 = vmatpush1.bf16.msra.mxu0 0
        %2185 = vmatprep.subr.bf16.mxu0 0
        %2186 = vmatpush1.bf16.msra.mxu0 0
        %2187 = vmatprep.subr.bf16.mxu0 0
        %2188 = vmatpush1.bf16.msra.mxu0 0
        %2189 = vmatprep.subr.bf16.mxu0 0
        %2190 = vmatpush1.bf16.msra.mxu0 0
        %2191 = vmatprep.subr.bf16.mxu0 0
        %2192 = vmatpush1.bf16.msra.mxu0 0
        %2193 = vmatprep.subr.bf16.mxu0 0
        %2194 = vmatpush1.bf16.msra.mxu0 0
        %2195 = vmatprep.subr.bf16.mxu0 0
        %2196 = vmatpush1.bf16.msra.mxu0 0
        %2197 = vmatprep.subr.bf16.mxu0 0
        %2198 = vmatpush1.bf16.msra.mxu0 0
        %2199 = vmatprep.subr.bf16.mxu0 0
        %2200 = vmatpush1.bf16.msra.mxu0 0
        %2201 = vmatprep.subr.bf16.mxu0 0
        %2202 = vmatpush1.bf16.msra.mxu0 0
        %2203 = vmatprep.subr.bf16.mxu0 0
        %2204 = vmatpush1.bf16.msra.mxu0 0
        %2205 = vmatprep.subr.bf16.mxu0 0
        %2206 = vmatpush1.bf16.msra.mxu0 0
        %2207 = vmatprep.subr.bf16.mxu0 0
        %2208 = vmatpush1.bf16.msra.mxu0 0
        %2209 = vmatprep.subr.bf16.mxu0 0
        %2210 = vmatpush1.bf16.msra.mxu0 0
        %2211 = vmatprep.mubr.bf16.mxu0 0
        %2212 = vmatmul.mubr.bf16.gmra.mrb[0].mxu0 %v2121
        %v2213 = vpop.f32.mrb[0].mxu0
        %v2214 = vadd.f32 %v2161, %v2213
        %v2215 = vpop.f32.mrb[0].mxu0
        %v2216 = vadd.f32 %v2163, %v2215
        %v2217 = vpop.f32.mrb[0].mxu0
        %v2218 = vadd.f32 %v2165, %v2217
        %v2219 = vpop.f32.mrb[0].mxu0
        %v2220 = vadd.f32 %v2167, %v2219
        %2221 = vmatprep.mubr.bf16.mxu0 0
        %2222 = vmatmul.mubr.bf16.gmra.mrb[0].mxu0 %v2124
        %v2223 = vpop.f32.mrb[0].mxu0
        %v2224 = vadd.f32 %v2171, %v2223
        %v2225 = vpop.f32.mrb[0].mxu0
        %v2226 = vadd.f32 %v2173, %v2225
        %v2227 = vpop.f32.mrb[0].mxu0
        %v2228 = vadd.f32 %v2175, %v2227
        %v2229 = vpop.f32.mrb[0].mxu0
        %v2230 = vadd.f32 %v2177, %v2229
        %2231 = vdwg.mxu0
        %v2232 = vld [vmem:[#allocation4] sm:$0xff]
        %v2233 = vld [vmem:[#allocation4 + $0x8] sm:$0xff]
        %v2234 = vld [vmem:[#allocation4 + $0x10] sm:$0xff]
        %v2235 = vld [vmem:[#allocation4 + $0x18] sm:$0xff]
        %v2236 = vld [vmem:[#allocation4 + $0x20] sm:$0xff]
        %v2237 = vld [vmem:[#allocation4 + $0x28] sm:$0xff]
        %v2238 = vld [vmem:[#allocation4 + $0x30] sm:$0xff]
        %v2239 = vld [vmem:[#allocation4 + $0x38] sm:$0xff]
        %v2240 = vadd.f32 %v2232, %v2214
        %v2241 = vadd.f32 %v2233, %v2216
        %v2242 = vadd.f32 %v2234, %v2218
        %v2243 = vadd.f32 %v2235, %v2220
        %v2244 = vadd.f32 %v2236, %v2224
        %v2245 = vadd.f32 %v2237, %v2226
        %v2246 = vadd.f32 %v2238, %v2228
        %v2247 = vadd.f32 %v2239, %v2230
        %2248 = vst [vmem:[#allocation4] sm:$0xff] %v2240
        %2249 = vst [vmem:[#allocation4 + $0x8] sm:$0xff] %v2241
        %2250 = vst [vmem:[#allocation4 + $0x10] sm:$0xff] %v2242
        %2251 = vst [vmem:[#allocation4 + $0x18] sm:$0xff] %v2243
        %2252 = vst [vmem:[#allocation4 + $0x20] sm:$0xff] %v2244
        %2253 = vst [vmem:[#allocation4 + $0x28] sm:$0xff] %v2245
        %2254 = vst [vmem:[#allocation4 + $0x30] sm:$0xff] %v2246
        %2255 = vst [vmem:[#allocation4 + $0x38] sm:$0xff] %v2247
        %v2256 = vpack.c.bf16 %v2242, %v2240
        %v2257 = vpack.c.bf16 %v2243, %v2241
        %v2258 = vpack.c.bf16 %v2246, %v2244
        %v2259 = vpack.c.bf16 %v2247, %v2245
        %2260 = vst [vmem:[#allocation3] sm:$0xff] %v2256
        %2261 = vst [vmem:[#allocation3 + $0x8] sm:$0xff] %v2257
        %2262 = vst [vmem:[#allocation3 + $0x10] sm:$0xff] %v2258
        %2263 = vst [vmem:[#allocation3 + $0x18] sm:$0xff] %v2259
      $region57: #{fusionnet_forward.1} parent=51 // loop_footer
        %s983 = sadd.s32 1, %s979
      $region58: #{fusionnet_forward.1} parent=51 // loop_footer_branch
        %978 = sbr.rel target = $region54
      $region59: #{fusionnet_forward.1} parent=51 // loop_exit
        _
      %v2264 = vld [vmem:[#allocation3] sm:$0xff]
      %v2265 = vld [vmem:[#allocation3 + $0x8] sm:$0xff]
      %v2266 = vld [vmem:[#allocation3 + $0x10] sm:$0xff]
      %v2267 = vld [vmem:[#allocation3 + $0x18] sm:$0xff]
      %2270 = vrot.lane.b32.xlu0 %v2265, 17
      %v2271 = vpop.permute.xlu0 %2270
      %2272 = vrot.lane.b32.xlu0 %v2267, 17
      %v2273 = vpop.permute.xlu0 %2272
      %2276 = vrot.lane.b32.xlu0 %v2264, 17
      %v2277 = vpop.permute.xlu0 %2276
      %2278 = vrot.lane.b32.xlu0 %v2266, 17
      %v2279 = vpop.permute.xlu0 %2278
      %v2280 = vsel %vm335, %v2277, %v2271
      %v2281 = vsel %vm335, %v2279, %v2273
      %v2286 = vsel %vm340, %v2271, %v2277
      %v2290 = vsel %vm340, %v2273, %v2279
      %v2292 = vld [vmem:[%s1] sm:$0x11]
      %v2294 = vunpack.c.l.b16 %v2292
      %v2295 = vunpack.c.h.b16 %v2292
      %v2296 = vpack.c.b16 %v2294, %v2294
      %v2297 = vpack.c.b16 %v2295, %v2295
      %v2299 = vpack.i.b16 %v2296, %v2296
      %v2301 = vlaneseq
      %v2302 = vshrl.u32 %v2301, 7
      %v2303 = vsub.s32 0, %v2302
      %v2304 = vrot.slane %v2299, %v2303
      %v2306 = vpack.i.b16 %v2297, %v2297
      %v2308 = vlaneseq
      %v2309 = vshrl.u32 %v2308, 7
      %v2310 = vsub.s32 0, %v2309
      %v2311 = vrot.slane %v2306, %v2310
      %v2312 = vmul.bf16 %v2286, %v2304
      %v2313 = vmul.bf16 %v2280, %v2311
      %v2314 = vmul.bf16 %v2290, %v2304
      %v2315 = vmul.bf16 %v2281, %v2311
      %2316 = vst [vmem:[#allocation2] sm:$0xff] %v2312
      %2317 = vst [vmem:[#allocation2 + $0x8] sm:$0xff] %v2313
      %2318 = vst [vmem:[#allocation2 + $0x10] sm:$0xff] %v2314
      %2319 = vst [vmem:[#allocation2 + $0x18] sm:$0xff] %v2315
      %2320 = vrot.lane.b32.xlu0 %v2265, 16
      %v2321 = vpop.permute.xlu0 %2320
      %2322 = vrot.lane.b32.xlu0 %v2267, 16
      %v2323 = vpop.permute.xlu0 %2322
      %2324 = vrot.lane.b32.xlu0 %v2264, 16
      %v2325 = vpop.permute.xlu0 %2324
      %2326 = vrot.lane.b32.xlu0 %v2266, 16
      %v2327 = vpop.permute.xlu0 %2326
      %v2328 = vsel %vm385, %v2325, %v2321
      %v2329 = vsel %vm385, %v2327, %v2323
      %v2334 = vsel %vm390, %v2321, %v2325
      %v2338 = vsel %vm390, %v2323, %v2327
      %v2340 = vld [vmem:[%s1] sm:$0x11]
      %v2342 = vunpack.c.l.b16 %v2340
      %v2343 = vunpack.c.h.b16 %v2340
      %v2344 = vpack.c.b16 %v2342, %v2342
      %v2345 = vpack.c.b16 %v2343, %v2343
      %v2347 = vshrl.u32 %v2344, 16
      %v2348 = vpack.i.b16 %v2347, %v2347
      %v2350 = vlaneseq
      %v2351 = vshrl.u32 %v2350, 7
      %v2352 = vsub.s32 0, %v2351
      %v2353 = vrot.slane %v2348, %v2352
      %v2355 = vshrl.u32 %v2345, 16
      %v2356 = vpack.i.b16 %v2355, %v2355
      %v2358 = vlaneseq
      %v2359 = vshrl.u32 %v2358, 7
      %v2360 = vsub.s32 0, %v2359
      %v2361 = vrot.slane %v2356, %v2360
      %v2362 = vmul.bf16 %v2334, %v2353
      %v2363 = vmul.bf16 %v2328, %v2361
      %v2364 = vmul.bf16 %v2338, %v2353
      %v2365 = vmul.bf16 %v2329, %v2361
      %2366 = vst [vmem:[#allocation2 + $0x20] sm:$0xff] %v2362
      %2367 = vst [vmem:[#allocation2 + $0x28] sm:$0xff] %v2363
      %2368 = vst [vmem:[#allocation2 + $0x30] sm:$0xff] %v2364
      %2369 = vst [vmem:[#allocation2 + $0x38] sm:$0xff] %v2365
      %2370 = vrot.lane.b32.xlu0 %v2265, 15
      %v2371 = vpop.permute.xlu0 %2370
      %2372 = vrot.lane.b32.xlu0 %v2267, 15
      %v2373 = vpop.permute.xlu0 %2372
      %2374 = vrot.lane.b32.xlu0 %v2264, 15
      %v2375 = vpop.permute.xlu0 %2374
      %2376 = vrot.lane.b32.xlu0 %v2266, 15
      %v2377 = vpop.permute.xlu0 %2376
      %v2378 = vsel %vm437, %v2375, %v2371
      %v2379 = vsel %vm437, %v2377, %v2373
      %v2384 = vsel %vm442, %v2371, %v2375
      %v2388 = vsel %vm442, %v2373, %v2377
      %v2390 = vld [vmem:[%s1] sm:$0x22]
      %v2392 = vunpack.c.l.b16 %v2390
      %v2393 = vunpack.c.h.b16 %v2390
      %v2394 = vpack.c.b16 %v2392, %v2392
      %v2395 = vpack.c.b16 %v2393, %v2393
      %v2397 = vpack.i.b16 %v2394, %v2394
      %v2399 = vlaneseq
      %v2400 = vshrl.u32 %v2399, 7
      %v2401 = vsub.s32 1, %v2400
      %v2402 = vrot.slane %v2397, %v2401
      %v2404 = vpack.i.b16 %v2395, %v2395
      %v2406 = vlaneseq
      %v2407 = vshrl.u32 %v2406, 7
      %v2408 = vsub.s32 1, %v2407
      %v2409 = vrot.slane %v2404, %v2408
      %v2410 = vmul.bf16 %v2384, %v2402
      %v2411 = vmul.bf16 %v2378, %v2409
      %v2412 = vmul.bf16 %v2388, %v2402
      %v2413 = vmul.bf16 %v2379, %v2409
      %2414 = vst [vmem:[#allocation2 + $0x40] sm:$0xff] %v2410
      %2415 = vst [vmem:[#allocation2 + $0x48] sm:$0xff] %v2411
      %2416 = vst [vmem:[#allocation2 + $0x50] sm:$0xff] %v2412
      %2417 = vst [vmem:[#allocation2 + $0x58] sm:$0xff] %v2413
      %2418 = vrot.lane.b32.xlu0 %v2265, 1
      %v2419 = vpop.permute.xlu0 %2418
      %2420 = vrot.lane.b32.xlu0 %v2267, 1
      %v2421 = vpop.permute.xlu0 %2420
      %2422 = vrot.lane.b32.xlu0 %v2264, 1
      %v2423 = vpop.permute.xlu0 %2422
      %2424 = vrot.lane.b32.xlu0 %v2266, 1
      %v2425 = vpop.permute.xlu0 %2424
      %v2426 = vsel %vm487, %v2423, %v2419
      %v2427 = vsel %vm487, %v2425, %v2421
      %v2432 = vsel %vm492, %v2419, %v2423
      %v2436 = vsel %vm492, %v2421, %v2425
      %v2438 = vld [vmem:[%s1] sm:$0x22]
      %v2440 = vunpack.c.l.b16 %v2438
      %v2441 = vunpack.c.h.b16 %v2438
      %v2442 = vpack.c.b16 %v2440, %v2440
      %v2443 = vpack.c.b16 %v2441, %v2441
      %v2445 = vshrl.u32 %v2442, 16
      %v2446 = vpack.i.b16 %v2445, %v2445
      %v2448 = vlaneseq
      %v2449 = vshrl.u32 %v2448, 7
      %v2450 = vsub.s32 1, %v2449
      %v2451 = vrot.slane %v2446, %v2450
      %v2453 = vshrl.u32 %v2443, 16
      %v2454 = vpack.i.b16 %v2453, %v2453
      %v2456 = vlaneseq
      %v2457 = vshrl.u32 %v2456, 7
      %v2458 = vsub.s32 1, %v2457
      %v2459 = vrot.slane %v2454, %v2458
      %v2460 = vmul.bf16 %v2432, %v2451
      %v2461 = vmul.bf16 %v2426, %v2459
      %v2462 = vmul.bf16 %v2436, %v2451
      %v2463 = vmul.bf16 %v2427, %v2459
      %2464 = vst [vmem:[#allocation2 + $0x60] sm:$0xff] %v2460
      %2465 = vst [vmem:[#allocation2 + $0x68] sm:$0xff] %v2461
      %2466 = vst [vmem:[#allocation2 + $0x70] sm:$0xff] %v2462
      %2467 = vst [vmem:[#allocation2 + $0x78] sm:$0xff] %v2463
      %2468 = vst [vmem:[#allocation2 + $0x80] sm:$0xff] %v2264
      %2469 = vst [vmem:[#allocation2 + $0x88] sm:$0xff] %v2265
      %2470 = vst [vmem:[#allocation2 + $0x90] sm:$0xff] %v2266
      %2471 = vst [vmem:[#allocation2 + $0x98] sm:$0xff] %v2267
      %2472 = vrot.lane.b32.xlu0 %v2264, 127
      %v2473 = vpop.permute.xlu0 %2472
      %2474 = vrot.lane.b32.xlu0 %v2265, 127
      %v2475 = vpop.permute.xlu0 %2474
      %2476 = vrot.lane.b32.xlu0 %v2266, 127
      %v2477 = vpop.permute.xlu0 %2476
      %2478 = vrot.lane.b32.xlu0 %v2267, 127
      %v2479 = vpop.permute.xlu0 %2478
      %v2480 = vsel %vm547, %v2473, %v2475
      %v2481 = vsel %vm547, %v2477, %v2479
      %v2486 = vsel %vm552, %v2475, %v2473
      %v2490 = vsel %vm552, %v2479, %v2477
      %v2492 = vld [vmem:[%s1] sm:$0x44]
      %v2494 = vunpack.c.l.b16 %v2492
      %v2495 = vunpack.c.h.b16 %v2492
      %v2496 = vpack.c.b16 %v2494, %v2494
      %v2497 = vpack.c.b16 %v2495, %v2495
      %v2499 = vshrl.u32 %v2496, 16
      %v2500 = vpack.i.b16 %v2499, %v2499
      %v2502 = vlaneseq
      %v2503 = vshrl.u32 %v2502, 7
      %v2504 = vsub.s32 2, %v2503
      %v2505 = vrot.slane %v2500, %v2504
      %v2507 = vshrl.u32 %v2497, 16
      %v2508 = vpack.i.b16 %v2507, %v2507
      %v2510 = vlaneseq
      %v2511 = vshrl.u32 %v2510, 7
      %v2512 = vsub.s32 2, %v2511
      %v2513 = vrot.slane %v2508, %v2512
      %v2514 = vmul.bf16 %v2480, %v2505
      %v2515 = vmul.bf16 %v2486, %v2513
      %v2516 = vmul.bf16 %v2481, %v2505
      %v2517 = vmul.bf16 %v2490, %v2513
      %2518 = vst [vmem:[#allocation2 + $0xa0] sm:$0xff] %v2514
      %2519 = vst [vmem:[#allocation2 + $0xa8] sm:$0xff] %v2515
      %2520 = vst [vmem:[#allocation2 + $0xb0] sm:$0xff] %v2516
      %2521 = vst [vmem:[#allocation2 + $0xb8] sm:$0xff] %v2517
      %2522 = vrot.lane.b32.xlu0 %v2264, 113
      %v2523 = vpop.permute.xlu0 %2522
      %2524 = vrot.lane.b32.xlu0 %v2265, 113
      %v2525 = vpop.permute.xlu0 %2524
      %2526 = vrot.lane.b32.xlu0 %v2266, 113
      %v2527 = vpop.permute.xlu0 %2526
      %2528 = vrot.lane.b32.xlu0 %v2267, 113
      %v2529 = vpop.permute.xlu0 %2528
      %v2530 = vsel %vm599, %v2523, %v2525
      %v2531 = vsel %vm599, %v2527, %v2529
      %v2536 = vsel %vm604, %v2525, %v2523
      %v2540 = vsel %vm604, %v2529, %v2527
      %v2542 = vld [vmem:[%s1] sm:$0x88]
      %v2544 = vunpack.c.l.b16 %v2542
      %v2545 = vunpack.c.h.b16 %v2542
      %v2546 = vpack.c.b16 %v2544, %v2544
      %v2547 = vpack.c.b16 %v2545, %v2545
      %v2549 = vpack.i.b16 %v2546, %v2546
      %v2551 = vlaneseq
      %v2552 = vshrl.u32 %v2551, 7
      %v2553 = vsub.s32 3, %v2552
      %v2554 = vrot.slane %v2549, %v2553
      %v2556 = vpack.i.b16 %v2547, %v2547
      %v2558 = vlaneseq
      %v2559 = vshrl.u32 %v2558, 7
      %v2560 = vsub.s32 3, %v2559
      %v2561 = vrot.slane %v2556, %v2560
      %v2562 = vmul.bf16 %v2530, %v2554
      %v2563 = vmul.bf16 %v2536, %v2561
      %v2564 = vmul.bf16 %v2531, %v2554
      %v2565 = vmul.bf16 %v2540, %v2561
      %2566 = vst [vmem:[#allocation2 + $0xc0] sm:$0xff] %v2562
      %2567 = vst [vmem:[#allocation2 + $0xc8] sm:$0xff] %v2563
      %2568 = vst [vmem:[#allocation2 + $0xd0] sm:$0xff] %v2564
      %2569 = vst [vmem:[#allocation2 + $0xd8] sm:$0xff] %v2565
      %2570 = vrot.lane.b32.xlu0 %v2264, 112
      %v2571 = vpop.permute.xlu0 %2570
      %2572 = vrot.lane.b32.xlu0 %v2265, 112
      %v2573 = vpop.permute.xlu0 %2572
      %2574 = vrot.lane.b32.xlu0 %v2266, 112
      %v2575 = vpop.permute.xlu0 %2574
      %2576 = vrot.lane.b32.xlu0 %v2267, 112
      %v2577 = vpop.permute.xlu0 %2576
      %v2578 = vsel %vm649, %v2571, %v2573
      %v2579 = vsel %vm649, %v2575, %v2577
      %v2584 = vsel %vm654, %v2573, %v2571
      %v2588 = vsel %vm654, %v2577, %v2575
      %v2590 = vld [vmem:[%s1] sm:$0x88]
      %v2592 = vunpack.c.l.b16 %v2590
      %v2593 = vunpack.c.h.b16 %v2590
      %v2594 = vpack.c.b16 %v2592, %v2592
      %v2595 = vpack.c.b16 %v2593, %v2593
      %v2597 = vshrl.u32 %v2594, 16
      %v2598 = vpack.i.b16 %v2597, %v2597
      %v2600 = vlaneseq
      %v2601 = vshrl.u32 %v2600, 7
      %v2602 = vsub.s32 3, %v2601
      %v2603 = vrot.slane %v2598, %v2602
      %v2605 = vshrl.u32 %v2595, 16
      %v2606 = vpack.i.b16 %v2605, %v2605
      %v2608 = vlaneseq
      %v2609 = vshrl.u32 %v2608, 7
      %v2610 = vsub.s32 3, %v2609
      %v2611 = vrot.slane %v2606, %v2610
      %v2612 = vmul.bf16 %v2578, %v2603
      %v2613 = vmul.bf16 %v2584, %v2611
      %v2614 = vmul.bf16 %v2579, %v2603
      %v2615 = vmul.bf16 %v2588, %v2611
      %2616 = vst [vmem:[#allocation2 + $0xe0] sm:$0xff] %v2612
      %2617 = vst [vmem:[#allocation2 + $0xe8] sm:$0xff] %v2613
      %2618 = vst [vmem:[#allocation2 + $0xf0] sm:$0xff] %v2614
      %2619 = vst [vmem:[#allocation2 + $0xf8] sm:$0xff] %v2615
      %2620 = vrot.lane.b32.xlu0 %v2264, 111
      %v2621 = vpop.permute.xlu0 %2620
      %2622 = vrot.lane.b32.xlu0 %v2265, 111
      %v2623 = vpop.permute.xlu0 %2622
      %2624 = vrot.lane.b32.xlu0 %v2266, 111
      %v2625 = vpop.permute.xlu0 %2624
      %2626 = vrot.lane.b32.xlu0 %v2267, 111
      %v2627 = vpop.permute.xlu0 %2626
      %v2628 = vsel %vm701, %v2621, %v2623
      %v2629 = vsel %vm701, %v2625, %v2627
      %v2634 = vsel %vm706, %v2623, %v2621
      %v2638 = vsel %vm706, %v2627, %v2625
      %v2640 = vld [vmem:[%s1 + $0x8] sm:$0x11]
      %v2642 = vunpack.c.l.b16 %v2640
      %v2643 = vunpack.c.h.b16 %v2640
      %v2644 = vpack.c.b16 %v2642, %v2642
      %v2645 = vpack.c.b16 %v2643, %v2643
      %v2647 = vpack.i.b16 %v2644, %v2644
      %v2649 = vlaneseq
      %v2650 = vshrl.u32 %v2649, 7
      %v2651 = vsub.s32 0, %v2650
      %v2652 = vrot.slane %v2647, %v2651
      %v2654 = vpack.i.b16 %v2645, %v2645
      %v2656 = vlaneseq
      %v2657 = vshrl.u32 %v2656, 7
      %v2658 = vsub.s32 0, %v2657
      %v2659 = vrot.slane %v2654, %v2658
      %v2660 = vmul.bf16 %v2628, %v2652
      %v2661 = vmul.bf16 %v2634, %v2659
      %v2662 = vmul.bf16 %v2629, %v2652
      %v2663 = vmul.bf16 %v2638, %v2659
      %2664 = vst [vmem:[#allocation2 + $0x100] sm:$0xff] %v2660
      %2665 = vst [vmem:[#allocation2 + $0x108] sm:$0xff] %v2661
      %2666 = vst [vmem:[#allocation2 + $0x110] sm:$0xff] %v2662
      %2667 = vst [vmem:[#allocation2 + $0x118] sm:$0xff] %v2663
      %v2668 = vld [vmem:[%s6] sm:$0xff]
      %v2669 = vld [vmem:[%s6 + $0x8] sm:$0xf]
      %v2670 = vld [vmem:[%s6 + $0xc] sm:$0xff]
      %v2671 = vld [vmem:[%s6 + $0x14] sm:$0xf]
      %v2672 = vld [vmem:[%s6 + $0x18] sm:$0xff]
      %v2673 = vld [vmem:[%s6 + $0x20] sm:$0xf]
      %v2674 = vld [vmem:[%s6 + $0x24] sm:$0xff]
      %v2675 = vld [vmem:[%s6 + $0x2c] sm:$0xf]
      %v2676 = vld [vmem:[%s7] sm:$0xff]
      %v2677 = vld [vmem:[%s7 + $0x8] sm:$0xff]
      %v2678 = vld [vmem:[%s7 + $0x10] sm:$0xff]
      %v2679 = vld [vmem:[%s7 + $0x18] sm:$0xff]
      %v2680 = vld [vmem:[#allocation2] sm:$0xff]
      %v2681 = vld [vmem:[#allocation2 + $0x8] sm:$0xff]
      %v2682 = vld [vmem:[#allocation2 + $0x10] sm:$0xff]
      %v2683 = vld [vmem:[#allocation2 + $0x18] sm:$0xff]
      %v2684 = vld [vmem:[#allocation2 + $0x20] sm:$0xff]
      %v2685 = vld [vmem:[#allocation2 + $0x28] sm:$0xff]
      %v2686 = vld [vmem:[#allocation2 + $0x30] sm:$0xff]
      %v2687 = vld [vmem:[#allocation2 + $0x38] sm:$0xff]
      %v2688 = vld [vmem:[#allocation2 + $0x40] sm:$0xff]
      %v2689 = vld [vmem:[#allocation2 + $0x48] sm:$0xff]
      %v2690 = vld [vmem:[#allocation2 + $0x50] sm:$0xff]
      %v2691 = vld [vmem:[#allocation2 + $0x58] sm:$0xff]
      %v2692 = vld [vmem:[#allocation2 + $0x60] sm:$0xff]
      %v2693 = vld [vmem:[#allocation2 + $0x68] sm:$0xff]
      %v2694 = vld [vmem:[#allocation2 + $0x70] sm:$0xff]
      %v2695 = vld [vmem:[#allocation2 + $0x78] sm:$0xff]
      %v2696 = vld [vmem:[#allocation2 + $0x80] sm:$0xff]
      %v2697 = vld [vmem:[#allocation2 + $0x88] sm:$0xff]
      %v2698 = vld [vmem:[#allocation2 + $0x90] sm:$0xff]
      %v2699 = vld [vmem:[#allocation2 + $0x98] sm:$0xff]
      %v2700 = vld [vmem:[#allocation2 + $0xa0] sm:$0xff]
      %v2701 = vld [vmem:[#allocation2 + $0xa8] sm:$0xff]
      %v2702 = vld [vmem:[#allocation2 + $0xb0] sm:$0xff]
      %v2703 = vld [vmem:[#allocation2 + $0xb8] sm:$0xff]
      %v2704 = vld [vmem:[#allocation2 + $0xc0] sm:$0xff]
      %v2705 = vld [vmem:[#allocation2 + $0xc8] sm:$0xff]
      %v2706 = vld [vmem:[#allocation2 + $0xd0] sm:$0xff]
      %v2707 = vld [vmem:[#allocation2 + $0xd8] sm:$0xff]
      %v2708 = vld [vmem:[#allocation2 + $0xe0] sm:$0xff]
      %v2709 = vld [vmem:[#allocation2 + $0xe8] sm:$0xff]
      %v2710 = vld [vmem:[#allocation2 + $0xf0] sm:$0xff]
      %v2711 = vld [vmem:[#allocation2 + $0xf8] sm:$0xff]
      %v2712 = vld [vmem:[#allocation2 + $0x100] sm:$0xff]
      %v2713 = vld [vmem:[#allocation2 + $0x108] sm:$0xff]
      %v2714 = vld [vmem:[#allocation2 + $0x110] sm:$0xff]
      %v2715 = vld [vmem:[#allocation2 + $0x118] sm:$0xff]
      %2717 = vset.pattern.permute.xlu0 0
      %2718 = vperm.xlu0 %2717, %v2676
      %v2719 = vpop.permute.xlu0 %2718
      %2722 = vset.pattern.permute.xlu0 0
      %2723 = vperm.xlu0 %2722, %v2677
      %v2724 = vpop.permute.xlu0 %2723
      %2726 = vset.pattern.permute.xlu0 0
      %2727 = vperm.xlu0 %2726, %v2678
      %v2728 = vpop.permute.xlu0 %2727
      %2730 = vset.pattern.permute.xlu0 0
      %2731 = vperm.xlu0 %2730, %v2679
      %v2732 = vpop.permute.xlu0 %2731
      %v2741 = vunpack.c.l.b16 %v2668
      %v2742 = vunpack.c.h.b16 %v2668
      %v2743 = vunpack.c.l.b16 %v2669
      %v2744 = vunpack.c.l.b16 %v2670
      %v2745 = vunpack.c.h.b16 %v2670
      %v2746 = vunpack.c.l.b16 %v2671
      %v2747 = vunpack.c.l.b16 %v2672
      %v2748 = vunpack.c.h.b16 %v2672
      %v2749 = vunpack.c.l.b16 %v2673
      %v2750 = vunpack.c.l.b16 %v2674
      %v2751 = vunpack.c.h.b16 %v2674
      %v2752 = vunpack.c.l.b16 %v2675
      %v2753 = vpack.c.b16 %v2744, %v2741
      %v2754 = vpack.c.b16 %v2745, %v2742
      %v2755 = vpack.c.b16 %v2746, %v2743
      %v2756 = vpack.c.b16 %v2750, %v2747
      %v2757 = vpack.c.b16 %v2751, %v2748
      %v2758 = vpack.c.b16 %v2752, %v2749
      %v2764 = vsel %vm841, %v2755, 0
      %v2767 = vsel %vm841, %v2758, 0
      %2769 = vmatprep.subr.bf16.mxu0 %v2681
      %2770 = vmatpush1.bf16.msra.mxu0 %v2680
      %2771 = vmatprep.subr.bf16.mxu0 %v2683
      %2772 = vmatpush1.bf16.msra.mxu0 %v2682
      %2773 = vmatprep.subr.bf16.mxu0 %v2685
      %2774 = vmatpush1.bf16.msra.mxu0 %v2684
      %2775 = vmatprep.subr.bf16.mxu0 %v2687
      %2776 = vmatpush1.bf16.msra.mxu0 %v2686
      %2777 = vmatprep.subr.bf16.mxu0 %v2689
      %2778 = vmatpush1.bf16.msra.mxu0 %v2688
      %2779 = vmatprep.subr.bf16.mxu0 %v2691
      %2780 = vmatpush1.bf16.msra.mxu0 %v2690
      %2781 = vmatprep.subr.bf16.mxu0 %v2693
      %2782 = vmatpush1.bf16.msra.mxu0 %v2692
      %2783 = vmatprep.subr.bf16.mxu0 %v2695
      %2784 = vmatpush1.bf16.msra.mxu0 %v2694
      %2785 = vmatprep.subr.bf16.mxu0 %v2697
      %2786 = vmatpush1.bf16.msra.mxu0 %v2696
      %2787 = vmatprep.subr.bf16.mxu0 %v2699
      %2788 = vmatpush1.bf16.msra.mxu0 %v2698
      %2789 = vmatprep.subr.bf16.mxu0 %v2701
      %2790 = vmatpush1.bf16.msra.mxu0 %v2700
      %2791 = vmatprep.subr.bf16.mxu0 %v2703
      %2792 = vmatpush1.bf16.msra.mxu0 %v2702
      %2793 = vmatprep.subr.bf16.mxu0 %v2705
      %2794 = vmatpush1.bf16.msra.mxu0 %v2704
      %2795 = vmatprep.subr.bf16.mxu0 %v2707
      %2796 = vmatpush1.bf16.msra.mxu0 %v2706
      %2797 = vmatprep.subr.bf16.mxu0 %v2709
      %2798 = vmatpush1.bf16.msra.mxu0 %v2708
      %2799 = vmatprep.subr.bf16.mxu0 %v2711
      %2800 = vmatpush1.bf16.msra.mxu0 %v2710
      %2801 = vmatprep.mubr.bf16.mxu0 %v2754
      %2802 = vmatmul.mubr.bf16.gmra.mrb[0].mxu0 %v2753
      %v2803 = vpop.f32.mrb[0].mxu0
      %v2804 = vadd.f32 %v2719, %v2803
      %v2805 = vpop.f32.mrb[0].mxu0
      %v2806 = vadd.f32 %v2719, %v2805
      %v2807 = vpop.f32.mrb[0].mxu0
      %v2808 = vpop.f32.mrb[0].mxu0
      %2809 = vmatprep.mubr.bf16.mxu0 %v2757
      %2810 = vmatmul.mubr.bf16.gmra.mrb[0].mxu0 %v2756
      %v2811 = vpop.f32.mrb[0].mxu0
      %v2812 = vpop.f32.mrb[0].mxu0
      %v2813 = vpop.f32.mrb[0].mxu0
      %v2814 = vpop.f32.mrb[0].mxu0
      %2815 = vdwg.mxu0
      %2816 = vmatprep.subr.bf16.mxu0 %v2713
      %2817 = vmatpush1.bf16.msra.mxu0 %v2712
      %2818 = vmatprep.subr.bf16.mxu0 %v2715
      %2819 = vmatpush1.bf16.msra.mxu0 %v2714
      %2820 = vmatprep.subr.bf16.mxu0 0
      %2821 = vmatpush1.bf16.msra.mxu0 0
      %2822 = vmatprep.subr.bf16.mxu0 0
      %2823 = vmatpush1.bf16.msra.mxu0 0
      %2824 = vmatprep.subr.bf16.mxu0 0
      %2825 = vmatpush1.bf16.msra.mxu0 0
      %2826 = vmatprep.subr.bf16.mxu0 0
      %2827 = vmatpush1.bf16.msra.mxu0 0
      %2828 = vmatprep.subr.bf16.mxu0 0
      %2829 = vmatpush1.bf16.msra.mxu0 0
      %2830 = vmatprep.subr.bf16.mxu0 0
      %2831 = vmatpush1.bf16.msra.mxu0 0
      %2832 = vmatprep.subr.bf16.mxu0 0
      %2833 = vmatpush1.bf16.msra.mxu0 0
      %2834 = vmatprep.subr.bf16.mxu0 0
      %2835 = vmatpush1.bf16.msra.mxu0 0
      %2836 = vmatprep.subr.bf16.mxu0 0
      %2837 = vmatpush1.bf16.msra.mxu0 0
      %2838 = vmatprep.subr.bf16.mxu0 0
      %2839 = vmatpush1.bf16.msra.mxu0 0
      %2840 = vmatprep.subr.bf16.mxu0 0
      %2841 = vmatpush1.bf16.msra.mxu0 0
      %2842 = vmatprep.subr.bf16.mxu0 0
      %2843 = vmatpush1.bf16.msra.mxu0 0
      %2844 = vmatprep.subr.bf16.mxu0 0
      %2845 = vmatpush1.bf16.msra.mxu0 0
      %2846 = vmatprep.subr.bf16.mxu0 0
      %2847 = vmatpush1.bf16.msra.mxu0 0
      %2848 = vmatprep.mubr.bf16.mxu0 0
      %2849 = vmatmul.mubr.bf16.gmra.mrb[0].mxu0 %v2764
      %v2850 = vpop.f32.mrb[0].mxu0
      %v2851 = vadd.f32 %v2804, %v2850
      %v2852 = vpop.f32.mrb[0].mxu0
      %v2853 = vadd.f32 %v2806, %v2852
      %v2854 = vpop.f32.mrb[0].mxu0
      %v2855 = vpop.f32.mrb[0].mxu0
      %2856 = vmatprep.mubr.bf16.mxu0 0
      %2857 = vmatmul.mubr.bf16.gmra.mrb[0].mxu0 %v2767
      %v2858 = vpop.f32.mrb[0].mxu0
      %v2859 = vpop.f32.mrb[0].mxu0
      %v2860 = vpop.f32.mrb[0].mxu0
      %v2861 = vpop.f32.mrb[0].mxu0
      %2862 = vdwg.mxu0
      %v2865 = vcombine.low %v2851, %v2853
      %2867 = vst [vmem:[%s305] sm:$0xff] %v2865
      %p2868 = scmp.lt.s32.totalorder %s19, 1
      %s2869 = scalar_select %p2868, %s19, 1
      %s2870 = smul.addr %s2869, 2
      %s2871 = smul.addr %s2870, 4
      %s2872 = scalar_lea.vmem %s8, %s2871
      // Predicated region
      $region60: #{fusionnet_forward.1} parent=51 // pred_check
        %p2873 = pneg %p210
      $region61: #{fusionnet_forward.1} parent=51 // pred_check_branch
        %2875 = sbr.rel (%p2873) target = $region63
      $region62: #{fusionnet_forward.1} parent=51 // pred_region
        _
      $region63: #{fusionnet_forward.1} parent=51 // pred_fallthru
        _
    $region52: #{fusionnet_forward.1} parent=5 // pred_fallthru
      _
    %p2876 = scmp.le.s32.totalorder 2, %s14
    // Predicated region
    $region64: #{fusionnet_forward.1} parent=5 // pred_check
      %p2877 = pneg %p2876
    $region65: #{fusionnet_forward.1} parent=5 // pred_check_branch
      %2879 = sbr.rel (%p2877) target = $region67
    $region66: #{fusionnet_forward.1} parent=5 // pred_region
      %s2880 = ssub.s32 %s14, 2
      // Predicated region
      $region68: #{fusionnet_forward.1} parent=66 // pred_check
        %p2881 = pneg %p216
      $region69: #{fusionnet_forward.1} parent=66 // pred_check_branch
        %2883 = sbr.rel (%p2881) target = $region71
      $region70: #{fusionnet_forward.1} parent=66 // pred_region
        %p2884 = scmp.lt.s32.totalorder %s20, 1
        %s2885 = scalar_select %p2884, %s20, 1
        %s2886 = smul.addr %s2885, 2
        %s2887 = smul.addr %s2886, 4
        %s2888 = scalar_lea.vmem %s8, %s2887
      $region71: #{fusionnet_forward.1} parent=66 // pred_fallthru
        _
    $region67: #{fusionnet_forward.1} parent=5 // pred_fallthru
      _
  $region6: #{fusionnet_forward.1} parent=0 // loop_footer
    %s18 = sadd.s32 1, %s14
  $region7: #{fusionnet_forward.1} parent=0 // loop_footer_branch
    %13 = sbr.rel target = $region3
  $region8: #{fusionnet_forward.1} parent=0 // loop_exit
    _

</llo_original>
